<compile_context>
chip_gen: v7x
topology: tpu7x:2x2x1
jax: 0.10.0
libtpu: 0.0.40
codegen_flags: <defaults>
</compile_context>

<pallas_src>
import functools

import numpy as np
import jax
import jax.numpy as jnp
from jax import lax
from jax.experimental import pallas as pl
from jax.experimental.pallas import tpu as pltpu

H = W = 31  # see note above
K = 5       # conv kernel size (both convs), stride 2


# ----------------------------------------------------------------------------
# Fused kernel: whole batch, single program.
#   p1_ref : (N*OH1*OW1, K*K*Cin)  im2col patches of conv1
#   w1_ref : (K*K*Cin, 10)   b1_ref: (1, 10)
#   w2_ref : (K*K*10, 20)    b2_ref: (1, 20)      (rows ordered (kh, kw, cin))
#   wf1_ref: (20, 50)        bf1_ref: (1, 50)
#   wf2_ref: (1, 50)         bf2_ref: (1, 1)
#   o_ref  : (N, 1)
# ----------------------------------------------------------------------------
def _pg2_fused_kernel(p1_ref, w1_ref, b1_ref, w2_ref, b2_ref,
                      wf1_ref, bf1_ref, wf2_ref, bf2_ref, o_ref,
                      *, n, oh1, ow1, c1, k):
    # ---- conv1 as one MXU matmul over the whole batch + bias ----
    a1 = jnp.dot(p1_ref[...], w1_ref[...], preferred_element_type=jnp.float32)
    a1 = a1 + b1_ref[...]                                   # (n*oh1*ow1, c1)

    # ---- 2x2 max-pool (pool-then-ReLU == ReLU-then-pool, max is monotonic) ----
    ph, pw = oh1 // 2, ow1 // 2
    a1 = a1.reshape(n * ph, 2, pw, 2, c1)                   # split spatial into 2x2 windows
    a1 = jnp.max(a1, axis=3)
    a1 = jnp.max(a1, axis=1)                                # (n*ph, pw, c1)
    h1 = jnp.maximum(a1, 0.0).reshape(n, ph, pw, c1)        # (n, 7, 7, 10), stays in VMEM/vregs

    # ---- conv2 at each output position, fused with its 2x2 max-pool as a
    #      running maximum over positions (bias added after the max, which is
    #      equivalent since the bias is constant across positions). ----
    oh2 = (ph - k) // 2 + 1
    ow2 = (pw - k) // 2 + 1
    pooled = None
    for i in range(oh2):
        for j in range(ow2):
            pieces = [h1[:, 2 * i + kh, 2 * j + kw, :]       # (n, c1) each
                      for kh in range(k) for kw in range(k)]
            patch = jnp.concatenate(pieces, axis=-1)          # (n, k*k*c1), (kh,kw,cin) order
            pos = jnp.dot(patch, w2_ref[...],
                          preferred_element_type=jnp.float32)  # (n, 20)
            pooled = pos if pooled is None else jnp.maximum(pooled, pos)
    h2 = jnp.maximum(pooled + b2_ref[...], 0.0)               # (n, 20) == flatten (1x1 spatial)

    # ---- fc1 + ReLU ----
    h3 = jnp.dot(h2, wf1_ref[...], preferred_element_type=jnp.float32) + bf1_ref[...]
    h3 = jnp.maximum(h3, 0.0)                                 # (n, 50)

    # ---- fc2 (50 -> 1) on the VPU: multiply + row-sum (no 1-lane MXU matmul) ----
    logit = jnp.sum(h3 * wf2_ref[...], axis=-1, keepdims=True) + bf2_ref[...]
    o_ref[...] = (1.0 / (1.0 + jnp.exp(-logit))).astype(o_ref.dtype)   # sigmoid


# ----------------------------------------------------------------------------
# One-time parameter packing (hoisted out of the per-forward graph).
# ----------------------------------------------------------------------------
def _conv_patch_order(cin, k):
    """For each output channel of conv_general_dilated_patches, the flat
    (c*k*k + kh*k + kw) source index it carries.  Probed so the weight repack
    matches the library's ordering exactly."""
    code = np.arange(cin * k * k, dtype=np.float32).reshape(1, cin, k, k)
    pr = lax.conv_general_dilated_patches(
        jnp.asarray(code), (k, k), (2, 2), 'VALID',
        dimension_numbers=('NCHW', 'OIHW', 'NHWC'))
    return np.asarray(pr).reshape(cin * k * k).astype(np.int64)


def pack_params(params):
    w1, b1, w2, b2, wf1, bf1, wf2, bf2 = params
    c1, cin, k, _ = w1.shape            # (10, 4, 5, 5)
    c2 = w2.shape[0]                    # 20
    order = _conv_patch_order(cin, k)
    # conv1 im2col weight: rows ordered like the patches op's channels.
    w1_col = jnp.asarray(np.asarray(w1).reshape(c1, cin * k * k)[:, order].T)   # (100, 10)
    # conv2 im2col weight: rows ordered (kh, kw, cin) to match the in-kernel concat.
    w2_col = jnp.transpose(w2, (2, 3, 1, 0)).reshape(k * k * c1, c2)            # (250, 20)
    return (w1_col, b1.reshape(1, c1),
            w2_col, b2.reshape(1, c2),
            wf1.T, bf1.reshape(1, -1),          # (20, 50), (1, 50)
            wf2.reshape(1, -1), bf2.reshape(1, 1))   # (1, 50), (1, 1)


# ----------------------------------------------------------------------------
# Forward wrapper: one im2col HLO + one fused pallas_call.
# ----------------------------------------------------------------------------
def pg2_forward(x, packed):
    (w1_col, b1_2d, w2_col, b2_2d, wf1_t, bf1_2d, wf2_row, bf2_2d) = packed
    n, cin, h, w = x.shape
    k = K
    c1 = w1_col.shape[1]
    c2 = w2_col.shape[1]
    f1 = wf1_t.shape[1]
    oh1 = (h - k) // 2 + 1               # 14
    ow1 = (w - k) // 2 + 1               # 14

    # conv1 im2col as a single XLA op (layout matched in pack_params).
    p1 = lax.conv_general_dilated_patches(
        x, (k, k), (2, 2), 'VALID',
        dimension_numbers=('NCHW', 'OIHW', 'NHWC'))          # (n, 14, 14, 100)
    p1 = p1.reshape(n * oh1 * ow1, k * k * cin)               # (392, 100)

    npos = ((oh1 // 2 - k) // 2 + 1) * ((ow1 // 2 - k) // 2 + 1)   # 4
    flops = 2 * (p1.shape[0] * p1.shape[1] * c1
                 + n * npos * w2_col.shape[0] * c2
                 + n * c2 * f1 + n * f1)
    bytes_accessed = 4 * (p1.size + w1_col.size + w2_col.size + wf1_t.size
                          + wf2_row.size + c1 + c2 + f1 + 1 + n)

    kernel = functools.partial(_pg2_fused_kernel,
                               n=n, oh1=oh1, ow1=ow1, c1=c1, k=k)
    return pl.pallas_call(
        kernel,
        out_shape=jax.ShapeDtypeStruct((n, 1), jnp.float32),
        grid=(1,),
        in_specs=[
            pl.BlockSpec(p1.shape, lambda i: (0, 0)),
            pl.BlockSpec(w1_col.shape, lambda i: (0, 0)),
            pl.BlockSpec(b1_2d.shape, lambda i: (0, 0)),
            pl.BlockSpec(w2_col.shape, lambda i: (0, 0)),
            pl.BlockSpec(b2_2d.shape, lambda i: (0, 0)),
            pl.BlockSpec(wf1_t.shape, lambda i: (0, 0)),
            pl.BlockSpec(bf1_2d.shape, lambda i: (0, 0)),
            pl.BlockSpec(wf2_row.shape, lambda i: (0, 0)),
            pl.BlockSpec(bf2_2d.shape, lambda i: (0, 0)),
        ],
        out_specs=pl.BlockSpec((n, 1), lambda i: (0, 0)),
        compiler_params=pltpu.CompilerParams(
            dimension_semantics=("arbitrary",)),
        cost_estimate=pl.CostEstimate(flops=int(flops), transcendentals=int(n),
                                      bytes_accessed=int(bytes_accessed)),
    )(p1, w1_col, b1_2d, w2_col, b2_2d, wf1_t, bf1_2d, wf2_row, bf2_2d)


# ----------------------------------------------------------------------------
# Pure-JAX reference (mirrors PyTorch semantics) for correctness check.
# ----------------------------------------------------------------------------
def pg2_reference(x, params):
    w1, b1, w2, b2, wf1, bf1, wf2, bf2 = params
    dn = ('NCHW', 'OIHW', 'NCHW')
    y = lax.conv_general_dilated(x, w1, (2, 2), 'VALID', dimension_numbers=dn)
    y = y + b1.reshape(1, -1, 1, 1)
    y = lax.reduce_window(y, -jnp.inf, lax.max, (1, 1, 2, 2), (1, 1, 2, 2), 'VALID')
    y = jnp.maximum(y, 0.0)
    y = lax.conv_general_dilated(y, w2, (2, 2), 'VALID', dimension_numbers=dn)
    y = y + b2.reshape(1, -1, 1, 1)
    y = lax.reduce_window(y, -jnp.inf, lax.max, (1, 1, 2, 2), (1, 1, 2, 2), 'VALID')
    y = jnp.maximum(y, 0.0)
    flat = y.reshape(y.shape[0], -1)
    h = jnp.maximum(flat @ wf1.T + bf1, 0.0)
    return jax.nn.sigmoid(h @ wf2.T + bf2)


if __name__ == "__main__":
    # TODO(synk): get_loss / learn_once (MSE loss + Adam step) are training-time
    # methods and are not reproduced here; only the forward pass is implemented.
    key = jax.random.PRNGKey(0)
    ks = jax.random.split(key, 9)
    N = 2
    x = jax.random.normal(ks[0], (N, 4, H, W), jnp.float32)

    # Deterministic synthetic parameters with PyTorch-layout shapes.
    w1 = 0.1 * jax.random.normal(ks[1], (10, 4, 5, 5), jnp.float32)    # conv1.weight (O,I,KH,KW)
    b1 = 0.1 * jax.random.normal(ks[2], (10,), jnp.float32)            # conv1.bias
    w2 = 0.1 * jax.random.normal(ks[3], (20, 10, 5, 5), jnp.float32)   # conv2.weight
    b2 = 0.1 * jax.random.normal(ks[4], (20,), jnp.float32)            # conv2.bias
    wf1 = 0.1 * jax.random.normal(ks[5], (50, 20), jnp.float32)        # fc1.weight (out,in)
    bf1 = 0.1 * jax.random.normal(ks[6], (50,), jnp.float32)           # fc1.bias
    wf2 = 0.1 * jax.random.normal(ks[7], (1, 50), jnp.float32)         # fc2.weight
    bf2 = 0.1 * jax.random.normal(ks[8], (1,), jnp.float32)            # fc2.bias
    params = (w1, b1, w2, b2, wf1, bf1, wf2, bf2)

    packed = pack_params(params)                 # one-time layout packing (outside jit)
    fwd = jax.jit(pg2_forward)
    out = jax.block_until_ready(fwd(x, packed))
    ref = jax.block_until_ready(pg2_reference(x, params))
    np.testing.assert_allclose(np.asarray(out), np.asarray(ref), rtol=1e-4, atol=1e-5)
    print("KERNEL_OK")
</pallas_src>

<mosaic_0001>
module attributes {stable_mosaic.version = 11 : i64} {
  func.func @_pg2_fused_kernel(%arg0: i32, %arg1: memref<392x100xf32, #tpu.memory_space<vmem>>, %arg2: memref<100x10xf32, #tpu.memory_space<vmem>>, %arg3: memref<1x10xf32, #tpu.memory_space<vmem>>, %arg4: memref<250x20xf32, #tpu.memory_space<vmem>>, %arg5: memref<1x20xf32, #tpu.memory_space<vmem>>, %arg6: memref<20x50xf32, #tpu.memory_space<vmem>>, %arg7: memref<1x50xf32, #tpu.memory_space<vmem>>, %arg8: memref<1x50xf32, #tpu.memory_space<vmem>>, %arg9: memref<1x1xf32, #tpu.memory_space<vmem>>, %arg10: memref<2x1xf32, #tpu.memory_space<vmem>>) attributes {dimension_semantics = [#tpu.dimension_semantics<arbitrary>], iteration_bounds = array<i64: 1>, scalar_prefetch = 0 : i64, scratch_operands = 0 : i64, tpu.core_type = #tpu.core_type<tc>, window_params = [{pipeline_mode = #tpu.pipeline_mode<synchronous>, transform_indices = @transform_0, window_bounds = array<i64: 392, 100>}, {pipeline_mode = #tpu.pipeline_mode<synchronous>, transform_indices = @transform_1, window_bounds = array<i64: 100, 10>}, {pipeline_mode = #tpu.pipeline_mode<synchronous>, transform_indices = @transform_2, window_bounds = array<i64: 1, 10>}, {pipeline_mode = #tpu.pipeline_mode<synchronous>, transform_indices = @transform_3, window_bounds = array<i64: 250, 20>}, {pipeline_mode = #tpu.pipeline_mode<synchronous>, transform_indices = @transform_4, window_bounds = array<i64: 1, 20>}, {pipeline_mode = #tpu.pipeline_mode<synchronous>, transform_indices = @transform_5, window_bounds = array<i64: 20, 50>}, {pipeline_mode = #tpu.pipeline_mode<synchronous>, transform_indices = @transform_6, window_bounds = array<i64: 1, 50>}, {pipeline_mode = #tpu.pipeline_mode<synchronous>, transform_indices = @transform_7, window_bounds = array<i64: 1, 50>}, {pipeline_mode = #tpu.pipeline_mode<synchronous>, transform_indices = @transform_8, window_bounds = array<i64: 1, 1>}, {pipeline_mode = #tpu.pipeline_mode<synchronous>, transform_indices = @transform_9, window_bounds = array<i64: 2, 1>}]} {
    %c0 = arith.constant 0 : index
    %c0_0 = arith.constant 0 : index
    %0 = vector.load %arg1[%c0, %c0_0] : memref<392x100xf32, #tpu.memory_space<vmem>>, vector<392x100xf32>
    %c0_1 = arith.constant 0 : index
    %c0_2 = arith.constant 0 : index
    %1 = vector.load %arg2[%c0_1, %c0_2] : memref<100x10xf32, #tpu.memory_space<vmem>>, vector<100x10xf32>
    %cst = arith.constant dense<0.000000e+00> : vector<392x10xf32>
    %2 = tpu.matmul %0, %1, %cst {dimension_numbers = #tpu.dot_dimension_numbers<[1], [0], [0], [1], [0, 0, 1, 1], [], []>} : vector<392x100xf32>, vector<100x10xf32>, vector<392x10xf32> -> vector<392x10xf32>
    %c0_3 = arith.constant 0 : index
    %c0_4 = arith.constant 0 : index
    %3 = vector.load %arg3[%c0_3, %c0_4] : memref<1x10xf32, #tpu.memory_space<vmem>>, vector<1x10xf32>
    %4 = vector.broadcast %3 : vector<1x10xf32> to vector<392x10xf32>
    %5 = arith.addf %2, %4 : vector<392x10xf32>
    %6 = vector.shape_cast %5 : vector<392x10xf32> to vector<14x2x7x2x10xf32>
    %cst_5 = arith.constant dense<0xFF800000> : vector<14x2x7x10xf32>
    %7 = vector.multi_reduction <maximumf>, %6, %cst_5 [3] : vector<14x2x7x2x10xf32> to vector<14x2x7x10xf32>
    %cst_6 = arith.constant dense<0xFF800000> : vector<14x7x10xf32>
    %8 = vector.multi_reduction <maximumf>, %7, %cst_6 [1] : vector<14x2x7x10xf32> to vector<14x7x10xf32>
    %cst_7 = arith.constant 0.000000e+00 : f32
    %9 = vector.broadcast %cst_7 : f32 to vector<14x7x10xf32>
    %10 = arith.maximumf %8, %9 : vector<14x7x10xf32>
    %11 = vector.shape_cast %10 : vector<14x7x10xf32> to vector<2x7x7x10xf32>
    %12 = vector.extract_strided_slice %11 {offsets = [0, 0, 0, 0], sizes = [2, 1, 1, 10], strides = [1, 1, 1, 1]} : vector<2x7x7x10xf32> to vector<2x1x1x10xf32>
    %13 = vector.shape_cast %12 : vector<2x1x1x10xf32> to vector<2x10xf32>
    %14 = vector.extract_strided_slice %11 {offsets = [0, 0, 1, 0], sizes = [2, 1, 1, 10], strides = [1, 1, 1, 1]} : vector<2x7x7x10xf32> to vector<2x1x1x10xf32>
    %15 = vector.shape_cast %14 : vector<2x1x1x10xf32> to vector<2x10xf32>
    %16 = vector.extract_strided_slice %11 {offsets = [0, 0, 2, 0], sizes = [2, 1, 1, 10], strides = [1, 1, 1, 1]} : vector<2x7x7x10xf32> to vector<2x1x1x10xf32>
    %17 = vector.shape_cast %16 : vector<2x1x1x10xf32> to vector<2x10xf32>
    %18 = vector.extract_strided_slice %11 {offsets = [0, 0, 3, 0], sizes = [2, 1, 1, 10], strides = [1, 1, 1, 1]} : vector<2x7x7x10xf32> to vector<2x1x1x10xf32>
    %19 = vector.shape_cast %18 : vector<2x1x1x10xf32> to vector<2x10xf32>
    %20 = vector.extract_strided_slice %11 {offsets = [0, 0, 4, 0], sizes = [2, 1, 1, 10], strides = [1, 1, 1, 1]} : vector<2x7x7x10xf32> to vector<2x1x1x10xf32>
    %21 = vector.shape_cast %20 : vector<2x1x1x10xf32> to vector<2x10xf32>
    %22 = vector.extract_strided_slice %11 {offsets = [0, 1, 0, 0], sizes = [2, 1, 1, 10], strides = [1, 1, 1, 1]} : vector<2x7x7x10xf32> to vector<2x1x1x10xf32>
    %23 = vector.shape_cast %22 : vector<2x1x1x10xf32> to vector<2x10xf32>
    %24 = vector.extract_strided_slice %11 {offsets = [0, 1, 1, 0], sizes = [2, 1, 1, 10], strides = [1, 1, 1, 1]} : vector<2x7x7x10xf32> to vector<2x1x1x10xf32>
    %25 = vector.shape_cast %24 : vector<2x1x1x10xf32> to vector<2x10xf32>
    %26 = vector.extract_strided_slice %11 {offsets = [0, 1, 2, 0], sizes = [2, 1, 1, 10], strides = [1, 1, 1, 1]} : vector<2x7x7x10xf32> to vector<2x1x1x10xf32>
    %27 = vector.shape_cast %26 : vector<2x1x1x10xf32> to vector<2x10xf32>
    %28 = vector.extract_strided_slice %11 {offsets = [0, 1, 3, 0], sizes = [2, 1, 1, 10], strides = [1, 1, 1, 1]} : vector<2x7x7x10xf32> to vector<2x1x1x10xf32>
    %29 = vector.shape_cast %28 : vector<2x1x1x10xf32> to vector<2x10xf32>
    %30 = vector.extract_strided_slice %11 {offsets = [0, 1, 4, 0], sizes = [2, 1, 1, 10], strides = [1, 1, 1, 1]} : vector<2x7x7x10xf32> to vector<2x1x1x10xf32>
    %31 = vector.shape_cast %30 : vector<2x1x1x10xf32> to vector<2x10xf32>
    %32 = vector.extract_strided_slice %11 {offsets = [0, 2, 0, 0], sizes = [2, 1, 1, 10], strides = [1, 1, 1, 1]} : vector<2x7x7x10xf32> to vector<2x1x1x10xf32>
    %33 = vector.shape_cast %32 : vector<2x1x1x10xf32> to vector<2x10xf32>
    %34 = vector.extract_strided_slice %11 {offsets = [0, 2, 1, 0], sizes = [2, 1, 1, 10], strides = [1, 1, 1, 1]} : vector<2x7x7x10xf32> to vector<2x1x1x10xf32>
    %35 = vector.shape_cast %34 : vector<2x1x1x10xf32> to vector<2x10xf32>
    %36 = vector.extract_strided_slice %11 {offsets = [0, 2, 2, 0], sizes = [2, 1, 1, 10], strides = [1, 1, 1, 1]} : vector<2x7x7x10xf32> to vector<2x1x1x10xf32>
    %37 = vector.shape_cast %36 : vector<2x1x1x10xf32> to vector<2x10xf32>
    %38 = vector.extract_strided_slice %11 {offsets = [0, 2, 3, 0], sizes = [2, 1, 1, 10], strides = [1, 1, 1, 1]} : vector<2x7x7x10xf32> to vector<2x1x1x10xf32>
    %39 = vector.shape_cast %38 : vector<2x1x1x10xf32> to vector<2x10xf32>
    %40 = vector.extract_strided_slice %11 {offsets = [0, 2, 4, 0], sizes = [2, 1, 1, 10], strides = [1, 1, 1, 1]} : vector<2x7x7x10xf32> to vector<2x1x1x10xf32>
    %41 = vector.shape_cast %40 : vector<2x1x1x10xf32> to vector<2x10xf32>
    %42 = vector.extract_strided_slice %11 {offsets = [0, 3, 0, 0], sizes = [2, 1, 1, 10], strides = [1, 1, 1, 1]} : vector<2x7x7x10xf32> to vector<2x1x1x10xf32>
    %43 = vector.shape_cast %42 : vector<2x1x1x10xf32> to vector<2x10xf32>
    %44 = vector.extract_strided_slice %11 {offsets = [0, 3, 1, 0], sizes = [2, 1, 1, 10], strides = [1, 1, 1, 1]} : vector<2x7x7x10xf32> to vector<2x1x1x10xf32>
    %45 = vector.shape_cast %44 : vector<2x1x1x10xf32> to vector<2x10xf32>
    %46 = vector.extract_strided_slice %11 {offsets = [0, 3, 2, 0], sizes = [2, 1, 1, 10], strides = [1, 1, 1, 1]} : vector<2x7x7x10xf32> to vector<2x1x1x10xf32>
    %47 = vector.shape_cast %46 : vector<2x1x1x10xf32> to vector<2x10xf32>
    %48 = vector.extract_strided_slice %11 {offsets = [0, 3, 3, 0], sizes = [2, 1, 1, 10], strides = [1, 1, 1, 1]} : vector<2x7x7x10xf32> to vector<2x1x1x10xf32>
    %49 = vector.shape_cast %48 : vector<2x1x1x10xf32> to vector<2x10xf32>
    %50 = vector.extract_strided_slice %11 {offsets = [0, 3, 4, 0], sizes = [2, 1, 1, 10], strides = [1, 1, 1, 1]} : vector<2x7x7x10xf32> to vector<2x1x1x10xf32>
    %51 = vector.shape_cast %50 : vector<2x1x1x10xf32> to vector<2x10xf32>
    %52 = vector.extract_strided_slice %11 {offsets = [0, 4, 0, 0], sizes = [2, 1, 1, 10], strides = [1, 1, 1, 1]} : vector<2x7x7x10xf32> to vector<2x1x1x10xf32>
    %53 = vector.shape_cast %52 : vector<2x1x1x10xf32> to vector<2x10xf32>
    %54 = vector.extract_strided_slice %11 {offsets = [0, 4, 1, 0], sizes = [2, 1, 1, 10], strides = [1, 1, 1, 1]} : vector<2x7x7x10xf32> to vector<2x1x1x10xf32>
    %55 = vector.shape_cast %54 : vector<2x1x1x10xf32> to vector<2x10xf32>
    %56 = vector.extract_strided_slice %11 {offsets = [0, 4, 2, 0], sizes = [2, 1, 1, 10], strides = [1, 1, 1, 1]} : vector<2x7x7x10xf32> to vector<2x1x1x10xf32>
    %57 = vector.shape_cast %56 : vector<2x1x1x10xf32> to vector<2x10xf32>
    %58 = vector.extract_strided_slice %11 {offsets = [0, 4, 3, 0], sizes = [2, 1, 1, 10], strides = [1, 1, 1, 1]} : vector<2x7x7x10xf32> to vector<2x1x1x10xf32>
    %59 = vector.shape_cast %58 : vector<2x1x1x10xf32> to vector<2x10xf32>
    %60 = vector.extract_strided_slice %11 {offsets = [0, 4, 4, 0], sizes = [2, 1, 1, 10], strides = [1, 1, 1, 1]} : vector<2x7x7x10xf32> to vector<2x1x1x10xf32>
    %61 = vector.shape_cast %60 : vector<2x1x1x10xf32> to vector<2x10xf32>
    %62 = tpu.concatenate %13, %15, %17, %19, %21, %23, %25, %27, %29, %31, %33, %35, %37, %39, %41, %43 in 1 : vector<2x10xf32>, vector<2x10xf32>, vector<2x10xf32>, vector<2x10xf32>, vector<2x10xf32>, vector<2x10xf32>, vector<2x10xf32>, vector<2x10xf32>, vector<2x10xf32>, vector<2x10xf32>, vector<2x10xf32>, vector<2x10xf32>, vector<2x10xf32>, vector<2x10xf32>, vector<2x10xf32>, vector<2x10xf32> -> vector<2x160xf32>
    %63 = tpu.concatenate %45, %47, %49, %51, %53, %55, %57, %59, %61 in 1 : vector<2x10xf32>, vector<2x10xf32>, vector<2x10xf32>, vector<2x10xf32>, vector<2x10xf32>, vector<2x10xf32>, vector<2x10xf32>, vector<2x10xf32>, vector<2x10xf32> -> vector<2x90xf32>
    %64 = tpu.concatenate %62, %63 in 1 : vector<2x160xf32>, vector<2x90xf32> -> vector<2x250xf32>
    %c0_8 = arith.constant 0 : index
    %c0_9 = arith.constant 0 : index
    %65 = vector.load %arg4[%c0_8, %c0_9] : memref<250x20xf32, #tpu.memory_space<vmem>>, vector<250x20xf32>
    %cst_10 = arith.constant dense<0.000000e+00> : vector<2x20xf32>
    %66 = tpu.matmul %64, %65, %cst_10 {dimension_numbers = #tpu.dot_dimension_numbers<[1], [0], [0], [1], [0, 0, 1, 1], [], []>} : vector<2x250xf32>, vector<250x20xf32>, vector<2x20xf32> -> vector<2x20xf32>
    %67 = vector.extract_strided_slice %11 {offsets = [0, 0, 2, 0], sizes = [2, 1, 1, 10], strides = [1, 1, 1, 1]} : vector<2x7x7x10xf32> to vector<2x1x1x10xf32>
    %68 = vector.shape_cast %67 : vector<2x1x1x10xf32> to vector<2x10xf32>
    %69 = vector.extract_strided_slice %11 {offsets = [0, 0, 3, 0], sizes = [2, 1, 1, 10], strides = [1, 1, 1, 1]} : vector<2x7x7x10xf32> to vector<2x1x1x10xf32>
    %70 = vector.shape_cast %69 : vector<2x1x1x10xf32> to vector<2x10xf32>
    %71 = vector.extract_strided_slice %11 {offsets = [0, 0, 4, 0], sizes = [2, 1, 1, 10], strides = [1, 1, 1, 1]} : vector<2x7x7x10xf32> to vector<2x1x1x10xf32>
    %72 = vector.shape_cast %71 : vector<2x1x1x10xf32> to vector<2x10xf32>
    %73 = vector.extract_strided_slice %11 {offsets = [0, 0, 5, 0], sizes = [2, 1, 1, 10], strides = [1, 1, 1, 1]} : vector<2x7x7x10xf32> to vector<2x1x1x10xf32>
    %74 = vector.shape_cast %73 : vector<2x1x1x10xf32> to vector<2x10xf32>
    %75 = vector.extract_strided_slice %11 {offsets = [0, 0, 6, 0], sizes = [2, 1, 1, 10], strides = [1, 1, 1, 1]} : vector<2x7x7x10xf32> to vector<2x1x1x10xf32>
    %76 = vector.shape_cast %75 : vector<2x1x1x10xf32> to vector<2x10xf32>
    %77 = vector.extract_strided_slice %11 {offsets = [0, 1, 2, 0], sizes = [2, 1, 1, 10], strides = [1, 1, 1, 1]} : vector<2x7x7x10xf32> to vector<2x1x1x10xf32>
    %78 = vector.shape_cast %77 : vector<2x1x1x10xf32> to vector<2x10xf32>
    %79 = vector.extract_strided_slice %11 {offsets = [0, 1, 3, 0], sizes = [2, 1, 1, 10], strides = [1, 1, 1, 1]} : vector<2x7x7x10xf32> to vector<2x1x1x10xf32>
    %80 = vector.shape_cast %79 : vector<2x1x1x10xf32> to vector<2x10xf32>
    %81 = vector.extract_strided_slice %11 {offsets = [0, 1, 4, 0], sizes = [2, 1, 1, 10], strides = [1, 1, 1, 1]} : vector<2x7x7x10xf32> to vector<2x1x1x10xf32>
    %82 = vector.shape_cast %81 : vector<2x1x1x10xf32> to vector<2x10xf32>
    %83 = vector.extract_strided_slice %11 {offsets = [0, 1, 5, 0], sizes = [2, 1, 1, 10], strides = [1, 1, 1, 1]} : vector<2x7x7x10xf32> to vector<2x1x1x10xf32>
    %84 = vector.shape_cast %83 : vector<2x1x1x10xf32> to vector<2x10xf32>
    %85 = vector.extract_strided_slice %11 {offsets = [0, 1, 6, 0], sizes = [2, 1, 1, 10], strides = [1, 1, 1, 1]} : vector<2x7x7x10xf32> to vector<2x1x1x10xf32>
    %86 = vector.shape_cast %85 : vector<2x1x1x10xf32> to vector<2x10xf32>
    %87 = vector.extract_strided_slice %11 {offsets = [0, 2, 2, 0], sizes = [2, 1, 1, 10], strides = [1, 1, 1, 1]} : vector<2x7x7x10xf32> to vector<2x1x1x10xf32>
    %88 = vector.shape_cast %87 : vector<2x1x1x10xf32> to vector<2x10xf32>
    %89 = vector.extract_strided_slice %11 {offsets = [0, 2, 3, 0], sizes = [2, 1, 1, 10], strides = [1, 1, 1, 1]} : vector<2x7x7x10xf32> to vector<2x1x1x10xf32>
    %90 = vector.shape_cast %89 : vector<2x1x1x10xf32> to vector<2x10xf32>
    %91 = vector.extract_strided_slice %11 {offsets = [0, 2, 4, 0], sizes = [2, 1, 1, 10], strides = [1, 1, 1, 1]} : vector<2x7x7x10xf32> to vector<2x1x1x10xf32>
    %92 = vector.shape_cast %91 : vector<2x1x1x10xf32> to vector<2x10xf32>
    %93 = vector.extract_strided_slice %11 {offsets = [0, 2, 5, 0], sizes = [2, 1, 1, 10], strides = [1, 1, 1, 1]} : vector<2x7x7x10xf32> to vector<2x1x1x10xf32>
    %94 = vector.shape_cast %93 : vector<2x1x1x10xf32> to vector<2x10xf32>
    %95 = vector.extract_strided_slice %11 {offsets = [0, 2, 6, 0], sizes = [2, 1, 1, 10], strides = [1, 1, 1, 1]} : vector<2x7x7x10xf32> to vector<2x1x1x10xf32>
    %96 = vector.shape_cast %95 : vector<2x1x1x10xf32> to vector<2x10xf32>
    %97 = vector.extract_strided_slice %11 {offsets = [0, 3, 2, 0], sizes = [2, 1, 1, 10], strides = [1, 1, 1, 1]} : vector<2x7x7x10xf32> to vector<2x1x1x10xf32>
    %98 = vector.shape_cast %97 : vector<2x1x1x10xf32> to vector<2x10xf32>
    %99 = vector.extract_strided_slice %11 {offsets = [0, 3, 3, 0], sizes = [2, 1, 1, 10], strides = [1, 1, 1, 1]} : vector<2x7x7x10xf32> to vector<2x1x1x10xf32>
    %100 = vector.shape_cast %99 : vector<2x1x1x10xf32> to vector<2x10xf32>
    %101 = vector.extract_strided_slice %11 {offsets = [0, 3, 4, 0], sizes = [2, 1, 1, 10], strides = [1, 1, 1, 1]} : vector<2x7x7x10xf32> to vector<2x1x1x10xf32>
    %102 = vector.shape_cast %101 : vector<2x1x1x10xf32> to vector<2x10xf32>
    %103 = vector.extract_strided_slice %11 {offsets = [0, 3, 5, 0], sizes = [2, 1, 1, 10], strides = [1, 1, 1, 1]} : vector<2x7x7x10xf32> to vector<2x1x1x10xf32>
    %104 = vector.shape_cast %103 : vector<2x1x1x10xf32> to vector<2x10xf32>
    %105 = vector.extract_strided_slice %11 {offsets = [0, 3, 6, 0], sizes = [2, 1, 1, 10], strides = [1, 1, 1, 1]} : vector<2x7x7x10xf32> to vector<2x1x1x10xf32>
    %106 = vector.shape_cast %105 : vector<2x1x1x10xf32> to vector<2x10xf32>
    %107 = vector.extract_strided_slice %11 {offsets = [0, 4, 2, 0], sizes = [2, 1, 1, 10], strides = [1, 1, 1, 1]} : vector<2x7x7x10xf32> to vector<2x1x1x10xf32>
    %108 = vector.shape_cast %107 : vector<2x1x1x10xf32> to vector<2x10xf32>
    %109 = vector.extract_strided_slice %11 {offsets = [0, 4, 3, 0], sizes = [2, 1, 1, 10], strides = [1, 1, 1, 1]} : vector<2x7x7x10xf32> to vector<2x1x1x10xf32>
    %110 = vector.shape_cast %109 : vector<2x1x1x10xf32> to vector<2x10xf32>
    %111 = vector.extract_strided_slice %11 {offsets = [0, 4, 4, 0], sizes = [2, 1, 1, 10], strides = [1, 1, 1, 1]} : vector<2x7x7x10xf32> to vector<2x1x1x10xf32>
    %112 = vector.shape_cast %111 : vector<2x1x1x10xf32> to vector<2x10xf32>
    %113 = vector.extract_strided_slice %11 {offsets = [0, 4, 5, 0], sizes = [2, 1, 1, 10], strides = [1, 1, 1, 1]} : vector<2x7x7x10xf32> to vector<2x1x1x10xf32>
    %114 = vector.shape_cast %113 : vector<2x1x1x10xf32> to vector<2x10xf32>
    %115 = vector.extract_strided_slice %11 {offsets = [0, 4, 6, 0], sizes = [2, 1, 1, 10], strides = [1, 1, 1, 1]} : vector<2x7x7x10xf32> to vector<2x1x1x10xf32>
    %116 = vector.shape_cast %115 : vector<2x1x1x10xf32> to vector<2x10xf32>
    %117 = tpu.concatenate %68, %70, %72, %74, %76, %78, %80, %82, %84, %86, %88, %90, %92, %94, %96, %98 in 1 : vector<2x10xf32>, vector<2x10xf32>, vector<2x10xf32>, vector<2x10xf32>, vector<2x10xf32>, vector<2x10xf32>, vector<2x10xf32>, vector<2x10xf32>, vector<2x10xf32>, vector<2x10xf32>, vector<2x10xf32>, vector<2x10xf32>, vector<2x10xf32>, vector<2x10xf32>, vector<2x10xf32>, vector<2x10xf32> -> vector<2x160xf32>
    %118 = tpu.concatenate %100, %102, %104, %106, %108, %110, %112, %114, %116 in 1 : vector<2x10xf32>, vector<2x10xf32>, vector<2x10xf32>, vector<2x10xf32>, vector<2x10xf32>, vector<2x10xf32>, vector<2x10xf32>, vector<2x10xf32>, vector<2x10xf32> -> vector<2x90xf32>
    %119 = tpu.concatenate %117, %118 in 1 : vector<2x160xf32>, vector<2x90xf32> -> vector<2x250xf32>
    %c0_11 = arith.constant 0 : index
    %c0_12 = arith.constant 0 : index
    %120 = vector.load %arg4[%c0_11, %c0_12] : memref<250x20xf32, #tpu.memory_space<vmem>>, vector<250x20xf32>
    %cst_13 = arith.constant dense<0.000000e+00> : vector<2x20xf32>
    %121 = tpu.matmul %119, %120, %cst_13 {dimension_numbers = #tpu.dot_dimension_numbers<[1], [0], [0], [1], [0, 0, 1, 1], [], []>} : vector<2x250xf32>, vector<250x20xf32>, vector<2x20xf32> -> vector<2x20xf32>
    %122 = arith.maximumf %66, %121 : vector<2x20xf32>
    %123 = vector.extract_strided_slice %11 {offsets = [0, 2, 0, 0], sizes = [2, 1, 1, 10], strides = [1, 1, 1, 1]} : vector<2x7x7x10xf32> to vector<2x1x1x10xf32>
    %124 = vector.shape_cast %123 : vector<2x1x1x10xf32> to vector<2x10xf32>
    %125 = vector.extract_strided_slice %11 {offsets = [0, 2, 1, 0], sizes = [2, 1, 1, 10], strides = [1, 1, 1, 1]} : vector<2x7x7x10xf32> to vector<2x1x1x10xf32>
    %126 = vector.shape_cast %125 : vector<2x1x1x10xf32> to vector<2x10xf32>
    %127 = vector.extract_strided_slice %11 {offsets = [0, 2, 2, 0], sizes = [2, 1, 1, 10], strides = [1, 1, 1, 1]} : vector<2x7x7x10xf32> to vector<2x1x1x10xf32>
    %128 = vector.shape_cast %127 : vector<2x1x1x10xf32> to vector<2x10xf32>
    %129 = vector.extract_strided_slice %11 {offsets = [0, 2, 3, 0], sizes = [2, 1, 1, 10], strides = [1, 1, 1, 1]} : vector<2x7x7x10xf32> to vector<2x1x1x10xf32>
    %130 = vector.shape_cast %129 : vector<2x1x1x10xf32> to vector<2x10xf32>
    %131 = vector.extract_strided_slice %11 {offsets = [0, 2, 4, 0], sizes = [2, 1, 1, 10], strides = [1, 1, 1, 1]} : vector<2x7x7x10xf32> to vector<2x1x1x10xf32>
    %132 = vector.shape_cast %131 : vector<2x1x1x10xf32> to vector<2x10xf32>
    %133 = vector.extract_strided_slice %11 {offsets = [0, 3, 0, 0], sizes = [2, 1, 1, 10], strides = [1, 1, 1, 1]} : vector<2x7x7x10xf32> to vector<2x1x1x10xf32>
    %134 = vector.shape_cast %133 : vector<2x1x1x10xf32> to vector<2x10xf32>
    %135 = vector.extract_strided_slice %11 {offsets = [0, 3, 1, 0], sizes = [2, 1, 1, 10], strides = [1, 1, 1, 1]} : vector<2x7x7x10xf32> to vector<2x1x1x10xf32>
    %136 = vector.shape_cast %135 : vector<2x1x1x10xf32> to vector<2x10xf32>
    %137 = vector.extract_strided_slice %11 {offsets = [0, 3, 2, 0], sizes = [2, 1, 1, 10], strides = [1, 1, 1, 1]} : vector<2x7x7x10xf32> to vector<2x1x1x10xf32>
    %138 = vector.shape_cast %137 : vector<2x1x1x10xf32> to vector<2x10xf32>
    %139 = vector.extract_strided_slice %11 {offsets = [0, 3, 3, 0], sizes = [2, 1, 1, 10], strides = [1, 1, 1, 1]} : vector<2x7x7x10xf32> to vector<2x1x1x10xf32>
    %140 = vector.shape_cast %139 : vector<2x1x1x10xf32> to vector<2x10xf32>
    %141 = vector.extract_strided_slice %11 {offsets = [0, 3, 4, 0], sizes = [2, 1, 1, 10], strides = [1, 1, 1, 1]} : vector<2x7x7x10xf32> to vector<2x1x1x10xf32>
    %142 = vector.shape_cast %141 : vector<2x1x1x10xf32> to vector<2x10xf32>
    %143 = vector.extract_strided_slice %11 {offsets = [0, 4, 0, 0], sizes = [2, 1, 1, 10], strides = [1, 1, 1, 1]} : vector<2x7x7x10xf32> to vector<2x1x1x10xf32>
    %144 = vector.shape_cast %143 : vector<2x1x1x10xf32> to vector<2x10xf32>
    %145 = vector.extract_strided_slice %11 {offsets = [0, 4, 1, 0], sizes = [2, 1, 1, 10], strides = [1, 1, 1, 1]} : vector<2x7x7x10xf32> to vector<2x1x1x10xf32>
    %146 = vector.shape_cast %145 : vector<2x1x1x10xf32> to vector<2x10xf32>
    %147 = vector.extract_strided_slice %11 {offsets = [0, 4, 2, 0], sizes = [2, 1, 1, 10], strides = [1, 1, 1, 1]} : vector<2x7x7x10xf32> to vector<2x1x1x10xf32>
    %148 = vector.shape_cast %147 : vector<2x1x1x10xf32> to vector<2x10xf32>
    %149 = vector.extract_strided_slice %11 {offsets = [0, 4, 3, 0], sizes = [2, 1, 1, 10], strides = [1, 1, 1, 1]} : vector<2x7x7x10xf32> to vector<2x1x1x10xf32>
    %150 = vector.shape_cast %149 : vector<2x1x1x10xf32> to vector<2x10xf32>
    %151 = vector.extract_strided_slice %11 {offsets = [0, 4, 4, 0], sizes = [2, 1, 1, 10], strides = [1, 1, 1, 1]} : vector<2x7x7x10xf32> to vector<2x1x1x10xf32>
    %152 = vector.shape_cast %151 : vector<2x1x1x10xf32> to vector<2x10xf32>
    %153 = vector.extract_strided_slice %11 {offsets = [0, 5, 0, 0], sizes = [2, 1, 1, 10], strides = [1, 1, 1, 1]} : vector<2x7x7x10xf32> to vector<2x1x1x10xf32>
    %154 = vector.shape_cast %153 : vector<2x1x1x10xf32> to vector<2x10xf32>
    %155 = vector.extract_strided_slice %11 {offsets = [0, 5, 1, 0], sizes = [2, 1, 1, 10], strides = [1, 1, 1, 1]} : vector<2x7x7x10xf32> to vector<2x1x1x10xf32>
    %156 = vector.shape_cast %155 : vector<2x1x1x10xf32> to vector<2x10xf32>
    %157 = vector.extract_strided_slice %11 {offsets = [0, 5, 2, 0], sizes = [2, 1, 1, 10], strides = [1, 1, 1, 1]} : vector<2x7x7x10xf32> to vector<2x1x1x10xf32>
    %158 = vector.shape_cast %157 : vector<2x1x1x10xf32> to vector<2x10xf32>
    %159 = vector.extract_strided_slice %11 {offsets = [0, 5, 3, 0], sizes = [2, 1, 1, 10], strides = [1, 1, 1, 1]} : vector<2x7x7x10xf32> to vector<2x1x1x10xf32>
    %160 = vector.shape_cast %159 : vector<2x1x1x10xf32> to vector<2x10xf32>
    %161 = vector.extract_strided_slice %11 {offsets = [0, 5, 4, 0], sizes = [2, 1, 1, 10], strides = [1, 1, 1, 1]} : vector<2x7x7x10xf32> to vector<2x1x1x10xf32>
    %162 = vector.shape_cast %161 : vector<2x1x1x10xf32> to vector<2x10xf32>
    %163 = vector.extract_strided_slice %11 {offsets = [0, 6, 0, 0], sizes = [2, 1, 1, 10], strides = [1, 1, 1, 1]} : vector<2x7x7x10xf32> to vector<2x1x1x10xf32>
    %164 = vector.shape_cast %163 : vector<2x1x1x10xf32> to vector<2x10xf32>
    %165 = vector.extract_strided_slice %11 {offsets = [0, 6, 1, 0], sizes = [2, 1, 1, 10], strides = [1, 1, 1, 1]} : vector<2x7x7x10xf32> to vector<2x1x1x10xf32>
    %166 = vector.shape_cast %165 : vector<2x1x1x10xf32> to vector<2x10xf32>
    %167 = vector.extract_strided_slice %11 {offsets = [0, 6, 2, 0], sizes = [2, 1, 1, 10], strides = [1, 1, 1, 1]} : vector<2x7x7x10xf32> to vector<2x1x1x10xf32>
    %168 = vector.shape_cast %167 : vector<2x1x1x10xf32> to vector<2x10xf32>
    %169 = vector.extract_strided_slice %11 {offsets = [0, 6, 3, 0], sizes = [2, 1, 1, 10], strides = [1, 1, 1, 1]} : vector<2x7x7x10xf32> to vector<2x1x1x10xf32>
    %170 = vector.shape_cast %169 : vector<2x1x1x10xf32> to vector<2x10xf32>
    %171 = vector.extract_strided_slice %11 {offsets = [0, 6, 4, 0], sizes = [2, 1, 1, 10], strides = [1, 1, 1, 1]} : vector<2x7x7x10xf32> to vector<2x1x1x10xf32>
    %172 = vector.shape_cast %171 : vector<2x1x1x10xf32> to vector<2x10xf32>
    %173 = tpu.concatenate %124, %126, %128, %130, %132, %134, %136, %138, %140, %142, %144, %146, %148, %150, %152, %154 in 1 : vector<2x10xf32>, vector<2x10xf32>, vector<2x10xf32>, vector<2x10xf32>, vector<2x10xf32>, vector<2x10xf32>, vector<2x10xf32>, vector<2x10xf32>, vector<2x10xf32>, vector<2x10xf32>, vector<2x10xf32>, vector<2x10xf32>, vector<2x10xf32>, vector<2x10xf32>, vector<2x10xf32>, vector<2x10xf32> -> vector<2x160xf32>
    %174 = tpu.concatenate %156, %158, %160, %162, %164, %166, %168, %170, %172 in 1 : vector<2x10xf32>, vector<2x10xf32>, vector<2x10xf32>, vector<2x10xf32>, vector<2x10xf32>, vector<2x10xf32>, vector<2x10xf32>, vector<2x10xf32>, vector<2x10xf32> -> vector<2x90xf32>
    %175 = tpu.concatenate %173, %174 in 1 : vector<2x160xf32>, vector<2x90xf32> -> vector<2x250xf32>
    %c0_14 = arith.constant 0 : index
    %c0_15 = arith.constant 0 : index
    %176 = vector.load %arg4[%c0_14, %c0_15] : memref<250x20xf32, #tpu.memory_space<vmem>>, vector<250x20xf32>
    %cst_16 = arith.constant dense<0.000000e+00> : vector<2x20xf32>
    %177 = tpu.matmul %175, %176, %cst_16 {dimension_numbers = #tpu.dot_dimension_numbers<[1], [0], [0], [1], [0, 0, 1, 1], [], []>} : vector<2x250xf32>, vector<250x20xf32>, vector<2x20xf32> -> vector<2x20xf32>
    %178 = arith.maximumf %122, %177 : vector<2x20xf32>
    %179 = vector.extract_strided_slice %11 {offsets = [0, 2, 2, 0], sizes = [2, 1, 1, 10], strides = [1, 1, 1, 1]} : vector<2x7x7x10xf32> to vector<2x1x1x10xf32>
    %180 = vector.shape_cast %179 : vector<2x1x1x10xf32> to vector<2x10xf32>
    %181 = vector.extract_strided_slice %11 {offsets = [0, 2, 3, 0], sizes = [2, 1, 1, 10], strides = [1, 1, 1, 1]} : vector<2x7x7x10xf32> to vector<2x1x1x10xf32>
    %182 = vector.shape_cast %181 : vector<2x1x1x10xf32> to vector<2x10xf32>
    %183 = vector.extract_strided_slice %11 {offsets = [0, 2, 4, 0], sizes = [2, 1, 1, 10], strides = [1, 1, 1, 1]} : vector<2x7x7x10xf32> to vector<2x1x1x10xf32>
    %184 = vector.shape_cast %183 : vector<2x1x1x10xf32> to vector<2x10xf32>
    %185 = vector.extract_strided_slice %11 {offsets = [0, 2, 5, 0], sizes = [2, 1, 1, 10], strides = [1, 1, 1, 1]} : vector<2x7x7x10xf32> to vector<2x1x1x10xf32>
    %186 = vector.shape_cast %185 : vector<2x1x1x10xf32> to vector<2x10xf32>
    %187 = vector.extract_strided_slice %11 {offsets = [0, 2, 6, 0], sizes = [2, 1, 1, 10], strides = [1, 1, 1, 1]} : vector<2x7x7x10xf32> to vector<2x1x1x10xf32>
    %188 = vector.shape_cast %187 : vector<2x1x1x10xf32> to vector<2x10xf32>
    %189 = vector.extract_strided_slice %11 {offsets = [0, 3, 2, 0], sizes = [2, 1, 1, 10], strides = [1, 1, 1, 1]} : vector<2x7x7x10xf32> to vector<2x1x1x10xf32>
    %190 = vector.shape_cast %189 : vector<2x1x1x10xf32> to vector<2x10xf32>
    %191 = vector.extract_strided_slice %11 {offsets = [0, 3, 3, 0], sizes = [2, 1, 1, 10], strides = [1, 1, 1, 1]} : vector<2x7x7x10xf32> to vector<2x1x1x10xf32>
    %192 = vector.shape_cast %191 : vector<2x1x1x10xf32> to vector<2x10xf32>
    %193 = vector.extract_strided_slice %11 {offsets = [0, 3, 4, 0], sizes = [2, 1, 1, 10], strides = [1, 1, 1, 1]} : vector<2x7x7x10xf32> to vector<2x1x1x10xf32>
    %194 = vector.shape_cast %193 : vector<2x1x1x10xf32> to vector<2x10xf32>
    %195 = vector.extract_strided_slice %11 {offsets = [0, 3, 5, 0], sizes = [2, 1, 1, 10], strides = [1, 1, 1, 1]} : vector<2x7x7x10xf32> to vector<2x1x1x10xf32>
    %196 = vector.shape_cast %195 : vector<2x1x1x10xf32> to vector<2x10xf32>
    %197 = vector.extract_strided_slice %11 {offsets = [0, 3, 6, 0], sizes = [2, 1, 1, 10], strides = [1, 1, 1, 1]} : vector<2x7x7x10xf32> to vector<2x1x1x10xf32>
    %198 = vector.shape_cast %197 : vector<2x1x1x10xf32> to vector<2x10xf32>
    %199 = vector.extract_strided_slice %11 {offsets = [0, 4, 2, 0], sizes = [2, 1, 1, 10], strides = [1, 1, 1, 1]} : vector<2x7x7x10xf32> to vector<2x1x1x10xf32>
    %200 = vector.shape_cast %199 : vector<2x1x1x10xf32> to vector<2x10xf32>
    %201 = vector.extract_strided_slice %11 {offsets = [0, 4, 3, 0], sizes = [2, 1, 1, 10], strides = [1, 1, 1, 1]} : vector<2x7x7x10xf32> to vector<2x1x1x10xf32>
    %202 = vector.shape_cast %201 : vector<2x1x1x10xf32> to vector<2x10xf32>
    %203 = vector.extract_strided_slice %11 {offsets = [0, 4, 4, 0], sizes = [2, 1, 1, 10], strides = [1, 1, 1, 1]} : vector<2x7x7x10xf32> to vector<2x1x1x10xf32>
    %204 = vector.shape_cast %203 : vector<2x1x1x10xf32> to vector<2x10xf32>
    %205 = vector.extract_strided_slice %11 {offsets = [0, 4, 5, 0], sizes = [2, 1, 1, 10], strides = [1, 1, 1, 1]} : vector<2x7x7x10xf32> to vector<2x1x1x10xf32>
    %206 = vector.shape_cast %205 : vector<2x1x1x10xf32> to vector<2x10xf32>
    %207 = vector.extract_strided_slice %11 {offsets = [0, 4, 6, 0], sizes = [2, 1, 1, 10], strides = [1, 1, 1, 1]} : vector<2x7x7x10xf32> to vector<2x1x1x10xf32>
    %208 = vector.shape_cast %207 : vector<2x1x1x10xf32> to vector<2x10xf32>
    %209 = vector.extract_strided_slice %11 {offsets = [0, 5, 2, 0], sizes = [2, 1, 1, 10], strides = [1, 1, 1, 1]} : vector<2x7x7x10xf32> to vector<2x1x1x10xf32>
    %210 = vector.shape_cast %209 : vector<2x1x1x10xf32> to vector<2x10xf32>
    %211 = vector.extract_strided_slice %11 {offsets = [0, 5, 3, 0], sizes = [2, 1, 1, 10], strides = [1, 1, 1, 1]} : vector<2x7x7x10xf32> to vector<2x1x1x10xf32>
    %212 = vector.shape_cast %211 : vector<2x1x1x10xf32> to vector<2x10xf32>
    %213 = vector.extract_strided_slice %11 {offsets = [0, 5, 4, 0], sizes = [2, 1, 1, 10], strides = [1, 1, 1, 1]} : vector<2x7x7x10xf32> to vector<2x1x1x10xf32>
    %214 = vector.shape_cast %213 : vector<2x1x1x10xf32> to vector<2x10xf32>
    %215 = vector.extract_strided_slice %11 {offsets = [0, 5, 5, 0], sizes = [2, 1, 1, 10], strides = [1, 1, 1, 1]} : vector<2x7x7x10xf32> to vector<2x1x1x10xf32>
    %216 = vector.shape_cast %215 : vector<2x1x1x10xf32> to vector<2x10xf32>
    %217 = vector.extract_strided_slice %11 {offsets = [0, 5, 6, 0], sizes = [2, 1, 1, 10], strides = [1, 1, 1, 1]} : vector<2x7x7x10xf32> to vector<2x1x1x10xf32>
    %218 = vector.shape_cast %217 : vector<2x1x1x10xf32> to vector<2x10xf32>
    %219 = vector.extract_strided_slice %11 {offsets = [0, 6, 2, 0], sizes = [2, 1, 1, 10], strides = [1, 1, 1, 1]} : vector<2x7x7x10xf32> to vector<2x1x1x10xf32>
    %220 = vector.shape_cast %219 : vector<2x1x1x10xf32> to vector<2x10xf32>
    %221 = vector.extract_strided_slice %11 {offsets = [0, 6, 3, 0], sizes = [2, 1, 1, 10], strides = [1, 1, 1, 1]} : vector<2x7x7x10xf32> to vector<2x1x1x10xf32>
    %222 = vector.shape_cast %221 : vector<2x1x1x10xf32> to vector<2x10xf32>
    %223 = vector.extract_strided_slice %11 {offsets = [0, 6, 4, 0], sizes = [2, 1, 1, 10], strides = [1, 1, 1, 1]} : vector<2x7x7x10xf32> to vector<2x1x1x10xf32>
    %224 = vector.shape_cast %223 : vector<2x1x1x10xf32> to vector<2x10xf32>
    %225 = vector.extract_strided_slice %11 {offsets = [0, 6, 5, 0], sizes = [2, 1, 1, 10], strides = [1, 1, 1, 1]} : vector<2x7x7x10xf32> to vector<2x1x1x10xf32>
    %226 = vector.shape_cast %225 : vector<2x1x1x10xf32> to vector<2x10xf32>
    %227 = vector.extract_strided_slice %11 {offsets = [0, 6, 6, 0], sizes = [2, 1, 1, 10], strides = [1, 1, 1, 1]} : vector<2x7x7x10xf32> to vector<2x1x1x10xf32>
    %228 = vector.shape_cast %227 : vector<2x1x1x10xf32> to vector<2x10xf32>
    %229 = tpu.concatenate %180, %182, %184, %186, %188, %190, %192, %194, %196, %198, %200, %202, %204, %206, %208, %210 in 1 : vector<2x10xf32>, vector<2x10xf32>, vector<2x10xf32>, vector<2x10xf32>, vector<2x10xf32>, vector<2x10xf32>, vector<2x10xf32>, vector<2x10xf32>, vector<2x10xf32>, vector<2x10xf32>, vector<2x10xf32>, vector<2x10xf32>, vector<2x10xf32>, vector<2x10xf32>, vector<2x10xf32>, vector<2x10xf32> -> vector<2x160xf32>
    %230 = tpu.concatenate %212, %214, %216, %218, %220, %222, %224, %226, %228 in 1 : vector<2x10xf32>, vector<2x10xf32>, vector<2x10xf32>, vector<2x10xf32>, vector<2x10xf32>, vector<2x10xf32>, vector<2x10xf32>, vector<2x10xf32>, vector<2x10xf32> -> vector<2x90xf32>
    %231 = tpu.concatenate %229, %230 in 1 : vector<2x160xf32>, vector<2x90xf32> -> vector<2x250xf32>
    %c0_17 = arith.constant 0 : index
    %c0_18 = arith.constant 0 : index
    %232 = vector.load %arg4[%c0_17, %c0_18] : memref<250x20xf32, #tpu.memory_space<vmem>>, vector<250x20xf32>
    %cst_19 = arith.constant dense<0.000000e+00> : vector<2x20xf32>
    %233 = tpu.matmul %231, %232, %cst_19 {dimension_numbers = #tpu.dot_dimension_numbers<[1], [0], [0], [1], [0, 0, 1, 1], [], []>} : vector<2x250xf32>, vector<250x20xf32>, vector<2x20xf32> -> vector<2x20xf32>
    %234 = arith.maximumf %178, %233 : vector<2x20xf32>
    %c0_20 = arith.constant 0 : index
    %c0_21 = arith.constant 0 : index
    %235 = vector.load %arg5[%c0_20, %c0_21] : memref<1x20xf32, #tpu.memory_space<vmem>>, vector<1x20xf32>
    %236 = vector.broadcast %235 : vector<1x20xf32> to vector<2x20xf32>
    %237 = arith.addf %234, %236 : vector<2x20xf32>
    %cst_22 = arith.constant 0.000000e+00 : f32
    %238 = vector.broadcast %cst_22 : f32 to vector<2x20xf32>
    %239 = arith.maximumf %237, %238 : vector<2x20xf32>
    %c0_23 = arith.constant 0 : index
    %c0_24 = arith.constant 0 : index
    %240 = vector.load %arg6[%c0_23, %c0_24] : memref<20x50xf32, #tpu.memory_space<vmem>>, vector<20x50xf32>
    %cst_25 = arith.constant dense<0.000000e+00> : vector<2x50xf32>
    %241 = tpu.matmul %239, %240, %cst_25 {dimension_numbers = #tpu.dot_dimension_numbers<[1], [0], [0], [1], [0, 0, 1, 1], [], []>} : vector<2x20xf32>, vector<20x50xf32>, vector<2x50xf32> -> vector<2x50xf32>
    %c0_26 = arith.constant 0 : index
    %c0_27 = arith.constant 0 : index
    %242 = vector.load %arg7[%c0_26, %c0_27] : memref<1x50xf32, #tpu.memory_space<vmem>>, vector<1x50xf32>
    %243 = vector.broadcast %242 : vector<1x50xf32> to vector<2x50xf32>
    %244 = arith.addf %241, %243 : vector<2x50xf32>
    %cst_28 = arith.constant 0.000000e+00 : f32
    %245 = vector.broadcast %cst_28 : f32 to vector<2x50xf32>
    %246 = arith.maximumf %244, %245 : vector<2x50xf32>
    %c0_29 = arith.constant 0 : index
    %c0_30 = arith.constant 0 : index
    %247 = vector.load %arg8[%c0_29, %c0_30] : memref<1x50xf32, #tpu.memory_space<vmem>>, vector<1x50xf32>
    %248 = vector.broadcast %247 : vector<1x50xf32> to vector<2x50xf32>
    %249 = arith.mulf %246, %248 : vector<2x50xf32>
    %cst_31 = arith.constant dense<0.000000e+00> : vector<2xf32>
    %250 = vector.multi_reduction <add>, %249, %cst_31 [1] : vector<2x50xf32> to vector<2xf32>
    %251 = vector.shape_cast %250 : vector<2xf32> to vector<2x1xf32>
    %c0_32 = arith.constant 0 : index
    %c0_33 = arith.constant 0 : index
    %252 = vector.load %arg9[%c0_32, %c0_33] : memref<1x1xf32, #tpu.memory_space<vmem>>, vector<1x1xf32>
    %253 = vector.broadcast %252 : vector<1x1xf32> to vector<2x1xf32>
    %254 = arith.addf %251, %253 : vector<2x1xf32>
    %cst_34 = arith.constant 0.000000e+00 : f32
    %255 = vector.broadcast %cst_34 : f32 to vector<2x1xf32>
    %256 = arith.subf %255, %254 : vector<2x1xf32>
    %257 = math.exp %256 : vector<2x1xf32>
    %cst_35 = arith.constant 1.000000e+00 : f32
    %258 = vector.broadcast %cst_35 : f32 to vector<2x1xf32>
    %259 = arith.addf %258, %257 : vector<2x1xf32>
    %cst_36 = arith.constant 1.000000e+00 : f32
    %260 = vector.broadcast %cst_36 : f32 to vector<2x1xf32>
    %261 = arith.divf %260, %259 : vector<2x1xf32>
    %c0_37 = arith.constant 0 : index
    %c0_38 = arith.constant 0 : index
    %262 = vector.load %arg10[%c0_37, %c0_38] : memref<2x1xf32, #tpu.memory_space<vmem>>, vector<2x1xf32>
    tpu.vector_store %arg10[%c0_37, %c0_38], %261 {strides = array<i32>} : memref<2x1xf32, #tpu.memory_space<vmem>>, vector<2x1xf32>,
    return
  }
  func.func @transform_0(%arg0: i32) -> (i32, i32) {
    %c0_i32 = arith.constant 0 : i32
    %c0_i32_0 = arith.constant 0 : i32
    %c0_i32_1 = arith.constant 0 : i32
    return %c0_i32, %c0_i32_0 : i32, i32
  }
  func.func @transform_1(%arg0: i32) -> (i32, i32) {
    %c0_i32 = arith.constant 0 : i32
    %c0_i32_0 = arith.constant 0 : i32
    %c0_i32_1 = arith.constant 0 : i32
    return %c0_i32, %c0_i32_0 : i32, i32
  }
  func.func @transform_2(%arg0: i32) -> (i32, i32) {
    %c0_i32 = arith.constant 0 : i32
    %c0_i32_0 = arith.constant 0 : i32
    %c0_i32_1 = arith.constant 0 : i32
    return %c0_i32, %c0_i32_0 : i32, i32
  }
  func.func @transform_3(%arg0: i32) -> (i32, i32) {
    %c0_i32 = arith.constant 0 : i32
    %c0_i32_0 = arith.constant 0 : i32
    %c0_i32_1 = arith.constant 0 : i32
    return %c0_i32, %c0_i32_0 : i32, i32
  }
  func.func @transform_4(%arg0: i32) -> (i32, i32) {
    %c0_i32 = arith.constant 0 : i32
    %c0_i32_0 = arith.constant 0 : i32
    %c0_i32_1 = arith.constant 0 : i32
    return %c0_i32, %c0_i32_0 : i32, i32
  }
  func.func @transform_5(%arg0: i32) -> (i32, i32) {
    %c0_i32 = arith.constant 0 : i32
    %c0_i32_0 = arith.constant 0 : i32
    %c0_i32_1 = arith.constant 0 : i32
    return %c0_i32, %c0_i32_0 : i32, i32
  }
  func.func @transform_6(%arg0: i32) -> (i32, i32) {
    %c0_i32 = arith.constant 0 : i32
    %c0_i32_0 = arith.constant 0 : i32
    %c0_i32_1 = arith.constant 0 : i32
    return %c0_i32, %c0_i32_0 : i32, i32
  }
  func.func @transform_7(%arg0: i32) -> (i32, i32) {
    %c0_i32 = arith.constant 0 : i32
    %c0_i32_0 = arith.constant 0 : i32
    %c0_i32_1 = arith.constant 0 : i32
    return %c0_i32, %c0_i32_0 : i32, i32
  }
  func.func @transform_8(%arg0: i32) -> (i32, i32) {
    %c0_i32 = arith.constant 0 : i32
    %c0_i32_0 = arith.constant 0 : i32
    %c0_i32_1 = arith.constant 0 : i32
    return %c0_i32, %c0_i32_0 : i32, i32
  }
  func.func @transform_9(%arg0: i32) -> (i32, i32) {
    %c0_i32 = arith.constant 0 : i32
    %c0_i32_0 = arith.constant 0 : i32
    %c0_i32_1 = arith.constant 0 : i32
    return %c0_i32, %c0_i32_0 : i32, i32
  }
}

</mosaic_0001>

<llo_original>
// kernel: pg2_forward.1
$region0: #{pg2_forward.1}
  #allocation0 [shape = 'u32[]', space=smem, size = 0x4, offset = 0x4, fixed_abs, tag = 'smem constant byte address 0x4 - core index']
  #allocation1 [shape = 'u32[144,128]{1,0:T(1,128)}', space=vmem, size = 0x12000, scoped, tag = 'internal scratch']
  #allocation2 [shape = 'f32[1,1]{1,0:T(1,128)S(1)}', space=vmem, size = 0x200, scoped, tag = 'scoped memory for pg2_forward.1']
  %s0 = inlined_call_operand.vmem [shape: f32[392,100], index: 0, kind: input, shape index: {}]
  %s1 = inlined_call_operand.vmem [shape: f32[100,10], index: 1, kind: input, shape index: {}]
  %s2 = inlined_call_operand.vmem [shape: f32[1,10], index: 2, kind: input, shape index: {}]
  %s3 = inlined_call_operand.vmem [shape: f32[250,20], index: 3, kind: input, shape index: {}]
  %s4 = inlined_call_operand.vmem [shape: f32[1,20], index: 4, kind: input, shape index: {}]
  %s5 = inlined_call_operand.vmem [shape: f32[20,50], index: 5, kind: input, shape index: {}]
  %s6 = inlined_call_operand.vmem [shape: f32[1,50], index: 6, kind: input, shape index: {}]
  %s7 = inlined_call_operand.vmem [shape: f32[1,50], index: 7, kind: input, shape index: {}]
  %s8 = inlined_call_operand.<no memory space> [shape: f32[1,1], index: 8, kind: input, shape index: {}]
  %s9 = inlined_call_operand.vmem [shape: f32[2,1], index: 9, kind: output, shape index: {}]
  %s10 = sld [smem:[#allocation0]]
  $region46: #{pg2_forward.1} parent=0
    _
  %s12 = ssub.s32 1, %s10
  %s13 = scalar_select 0, %s12, %s10
  %v14 = vstv %s8
  %15 = vst [vmem:[#allocation2] sm:$0x1] %v14
  // Predicated region
  $region2: #{pg2_forward.1} parent=0 // pred_check
    _
  $region3: #{pg2_forward.1} parent=0 // pred_check_branch
    %17 = sbr.rel (0) target = $region5
  $region4: #{pg2_forward.1} parent=0 // pred_region
    _
  $region5: #{pg2_forward.1} parent=0 // pred_fallthru
    _
  // Predicated region
  $region6: #{pg2_forward.1} parent=0 // pred_check
    _
  $region7: #{pg2_forward.1} parent=0 // pred_check_branch
    %19 = sbr.rel (0) target = $region9
  $region8: #{pg2_forward.1} parent=0 // pred_region
    _
  $region9: #{pg2_forward.1} parent=0 // pred_fallthru
    _
  // Predicated region
  $region10: #{pg2_forward.1} parent=0 // pred_check
    _
  $region11: #{pg2_forward.1} parent=0 // pred_check_branch
    %21 = sbr.rel (0) target = $region13
  $region12: #{pg2_forward.1} parent=0 // pred_region
    _
  $region13: #{pg2_forward.1} parent=0 // pred_fallthru
    _
  // Predicated region
  $region14: #{pg2_forward.1} parent=0 // pred_check
    _
  $region15: #{pg2_forward.1} parent=0 // pred_check_branch
    %23 = sbr.rel (0) target = $region17
  $region16: #{pg2_forward.1} parent=0 // pred_region
    _
  $region17: #{pg2_forward.1} parent=0 // pred_fallthru
    _
  // Predicated region
  $region18: #{pg2_forward.1} parent=0 // pred_check
    _
  $region19: #{pg2_forward.1} parent=0 // pred_check_branch
    %25 = sbr.rel (0) target = $region21
  $region20: #{pg2_forward.1} parent=0 // pred_region
    _
  $region21: #{pg2_forward.1} parent=0 // pred_fallthru
    _
  // Predicated region
  $region22: #{pg2_forward.1} parent=0 // pred_check
    _
  $region23: #{pg2_forward.1} parent=0 // pred_check_branch
    %27 = sbr.rel (0) target = $region25
  $region24: #{pg2_forward.1} parent=0 // pred_region
    _
  $region25: #{pg2_forward.1} parent=0 // pred_fallthru
    _
  // Predicated region
  $region26: #{pg2_forward.1} parent=0 // pred_check
    _
  $region27: #{pg2_forward.1} parent=0 // pred_check_branch
    %29 = sbr.rel (0) target = $region29
  $region28: #{pg2_forward.1} parent=0 // pred_region
    _
  $region29: #{pg2_forward.1} parent=0 // pred_fallthru
    _
  // Predicated region
  $region30: #{pg2_forward.1} parent=0 // pred_check
    _
  $region31: #{pg2_forward.1} parent=0 // pred_check_branch
    %31 = sbr.rel (0) target = $region33
  $region32: #{pg2_forward.1} parent=0 // pred_region
    _
  $region33: #{pg2_forward.1} parent=0 // pred_fallthru
    _
  // Predicated region
  $region34: #{pg2_forward.1} parent=0 // pred_check
    _
  $region35: #{pg2_forward.1} parent=0 // pred_check_branch
    %33 = sbr.rel (0) target = $region37
  $region36: #{pg2_forward.1} parent=0 // pred_region
    _
  $region37: #{pg2_forward.1} parent=0 // pred_fallthru
    _
  %v34 = vld [vmem:[%s0] sm:$0xff]
  %v35 = vld [vmem:[%s0 + $0x8] sm:$0xff]
  %v36 = vld [vmem:[%s0 + $0x10] sm:$0xff]
  %v37 = vld [vmem:[%s0 + $0x18] sm:$0xff]
  %v38 = vld [vmem:[%s0 + $0x20] sm:$0xff]
  %v39 = vld [vmem:[%s0 + $0x28] sm:$0xff]
  %v40 = vld [vmem:[%s0 + $0x30] sm:$0xff]
  %v41 = vld [vmem:[%s0 + $0x38] sm:$0xff]
  %v42 = vld [vmem:[%s0 + $0x40] sm:$0xff]
  %v43 = vld [vmem:[%s0 + $0x48] sm:$0xff]
  %v44 = vld [vmem:[%s0 + $0x50] sm:$0xff]
  %v45 = vld [vmem:[%s0 + $0x58] sm:$0xff]
  %v46 = vld [vmem:[%s0 + $0x60] sm:$0xff]
  %v47 = vld [vmem:[%s0 + $0x68] sm:$0xff]
  %v48 = vld [vmem:[%s0 + $0x70] sm:$0xff]
  %v49 = vld [vmem:[%s0 + $0x78] sm:$0xff]
  %v50 = vld [vmem:[%s0 + $0x80] sm:$0xff]
  %v51 = vld [vmem:[%s0 + $0x88] sm:$0xff]
  %v52 = vld [vmem:[%s0 + $0x90] sm:$0xff]
  %v53 = vld [vmem:[%s0 + $0x98] sm:$0xff]
  %v54 = vld [vmem:[%s0 + $0xa0] sm:$0xff]
  %v55 = vld [vmem:[%s0 + $0xa8] sm:$0xff]
  %v56 = vld [vmem:[%s0 + $0xb0] sm:$0xff]
  %v57 = vld [vmem:[%s0 + $0xb8] sm:$0xff]
  %v58 = vld [vmem:[%s0 + $0xc0] sm:$0xff]
  %v59 = vld [vmem:[%s0 + $0xc8] sm:$0xff]
  %v60 = vld [vmem:[%s0 + $0xd0] sm:$0xff]
  %v61 = vld [vmem:[%s0 + $0xd8] sm:$0xff]
  %v62 = vld [vmem:[%s0 + $0xe0] sm:$0xff]
  %v63 = vld [vmem:[%s0 + $0xe8] sm:$0xff]
  %v64 = vld [vmem:[%s0 + $0xf0] sm:$0xff]
  %v65 = vld [vmem:[%s0 + $0xf8] sm:$0xff]
  %v66 = vld [vmem:[%s0 + $0x100] sm:$0xff]
  %v67 = vld [vmem:[%s0 + $0x108] sm:$0xff]
  %v68 = vld [vmem:[%s0 + $0x110] sm:$0xff]
  %v69 = vld [vmem:[%s0 + $0x118] sm:$0xff]
  %v70 = vld [vmem:[%s0 + $0x120] sm:$0xff]
  %v71 = vld [vmem:[%s0 + $0x128] sm:$0xff]
  %v72 = vld [vmem:[%s0 + $0x130] sm:$0xff]
  %v73 = vld [vmem:[%s0 + $0x138] sm:$0xff]
  %v74 = vld [vmem:[%s0 + $0x140] sm:$0xff]
  %v75 = vld [vmem:[%s0 + $0x148] sm:$0xff]
  %v76 = vld [vmem:[%s0 + $0x150] sm:$0xff]
  %v77 = vld [vmem:[%s0 + $0x158] sm:$0xff]
  %v78 = vld [vmem:[%s0 + $0x160] sm:$0xff]
  %v79 = vld [vmem:[%s0 + $0x168] sm:$0xff]
  %v80 = vld [vmem:[%s0 + $0x170] sm:$0xff]
  %v81 = vld [vmem:[%s0 + $0x178] sm:$0xff]
  %v82 = vld [vmem:[%s0 + $0x180] sm:$0xff]
  %v83 = vld [vmem:[%s1] sm:$0xff]
  %v84 = vld [vmem:[%s1 + $0x8] sm:$0xff]
  %v85 = vld [vmem:[%s1 + $0x10] sm:$0xff]
  %v86 = vld [vmem:[%s1 + $0x18] sm:$0xff]
  %v87 = vld [vmem:[%s1 + $0x20] sm:$0xff]
  %v88 = vld [vmem:[%s1 + $0x28] sm:$0xff]
  %v89 = vld [vmem:[%s1 + $0x30] sm:$0xff]
  %v90 = vld [vmem:[%s1 + $0x38] sm:$0xff]
  %v91 = vld [vmem:[%s1 + $0x40] sm:$0xff]
  %v92 = vld [vmem:[%s1 + $0x48] sm:$0xff]
  %v93 = vld [vmem:[%s1 + $0x50] sm:$0xff]
  %v94 = vld [vmem:[%s1 + $0x58] sm:$0xff]
  %v95 = vld [vmem:[%s1 + $0x60] sm:$0xf]
  %v96 = vld [vmem:[%s2] sm:$0x1]
  %v98 = vlaneseq
  %v99 = vshrl.u32 %v98, 7
  %v100 = vsub.s32 0, %v99
  %v101 = vrot.slane %v96, %v100
  %vm103 = vcmask 818176
  %v105 = vsel %vm103, %v34, 0
  %v108 = vsel %vm103, %v35, 0
  %v111 = vsel %vm103, %v36, 0
  %v114 = vsel %vm103, %v37, 0
  %v117 = vsel %vm103, %v38, 0
  %v120 = vsel %vm103, %v39, 0
  %v123 = vsel %vm103, %v40, 0
  %v126 = vsel %vm103, %v41, 0
  %v129 = vsel %vm103, %v42, 0
  %v132 = vsel %vm103, %v43, 0
  %v135 = vsel %vm103, %v44, 0
  %v138 = vsel %vm103, %v45, 0
  %v141 = vsel %vm103, %v46, 0
  %v144 = vsel %vm103, %v47, 0
  %v147 = vsel %vm103, %v48, 0
  %v150 = vsel %vm103, %v49, 0
  %v153 = vsel %vm103, %v50, 0
  %v156 = vsel %vm103, %v51, 0
  %v159 = vsel %vm103, %v52, 0
  %v162 = vsel %vm103, %v53, 0
  %v165 = vsel %vm103, %v54, 0
  %v168 = vsel %vm103, %v55, 0
  %v171 = vsel %vm103, %v56, 0
  %v174 = vsel %vm103, %v57, 0
  %v177 = vsel %vm103, %v58, 0
  %v180 = vsel %vm103, %v59, 0
  %v183 = vsel %vm103, %v60, 0
  %v186 = vsel %vm103, %v61, 0
  %v189 = vsel %vm103, %v62, 0
  %v192 = vsel %vm103, %v63, 0
  %v195 = vsel %vm103, %v64, 0
  %v198 = vsel %vm103, %v65, 0
  %v201 = vsel %vm103, %v66, 0
  %v204 = vsel %vm103, %v67, 0
  %v207 = vsel %vm103, %v68, 0
  %v210 = vsel %vm103, %v69, 0
  %v213 = vsel %vm103, %v70, 0
  %v216 = vsel %vm103, %v71, 0
  %v219 = vsel %vm103, %v72, 0
  %v222 = vsel %vm103, %v73, 0
  %v225 = vsel %vm103, %v74, 0
  %v228 = vsel %vm103, %v75, 0
  %v231 = vsel %vm103, %v76, 0
  %v234 = vsel %vm103, %v77, 0
  %v237 = vsel %vm103, %v78, 0
  %v240 = vsel %vm103, %v79, 0
  %v243 = vsel %vm103, %v80, 0
  %v246 = vsel %vm103, %v81, 0
  %v249 = vsel %vm103, %v82, 0
  %vm251 = vcmask 1043456
  %v253 = vsel %vm251, %v95, 0
  %255 = vmatprep.subr.mxu0 0.0
  %256 = vmatpush1.msra.mxu0 %v83
  %257 = vmatprep.subr.mxu0 0.0
  %258 = vmatpush1.msra.mxu0 %v84
  %259 = vmatprep.subr.mxu0 0.0
  %260 = vmatpush1.msra.mxu0 %v85
  %261 = vmatprep.subr.mxu0 0.0
  %262 = vmatpush1.msra.mxu0 %v86
  %263 = vmatprep.subr.mxu0 0.0
  %264 = vmatpush1.msra.mxu0 %v87
  %265 = vmatprep.subr.mxu0 0.0
  %266 = vmatpush1.msra.mxu0 %v88
  %267 = vmatprep.subr.mxu0 0.0
  %268 = vmatpush1.msra.mxu0 %v89
  %269 = vmatprep.subr.mxu0 0.0
  %270 = vmatpush1.msra.mxu0 %v90
  %271 = vmatprep.subr.mxu0 0.0
  %272 = vmatpush1.msra.mxu0 %v91
  %273 = vmatprep.subr.mxu0 0.0
  %274 = vmatpush1.msra.mxu0 %v92
  %275 = vmatprep.subr.mxu0 0.0
  %276 = vmatpush1.msra.mxu0 %v93
  %277 = vmatprep.subr.mxu0 0.0
  %278 = vmatpush1.msra.mxu0 %v94
  %279 = vmatprep.subr.mxu0 0.0
  %280 = vmatpush1.msra.mxu0 %v253
  %281 = vmatprep.subr.mxu0 0.0
  %282 = vmatpush1.msra.mxu0 0.0
  %283 = vmatprep.subr.mxu0 0.0
  %284 = vmatpush1.msra.mxu0 0.0
  %285 = vmatprep.subr.mxu0 0.0
  %286 = vmatpush1.msra.mxu0 0.0
  %287 = vmatprep.subr.mxu0 0.0
  %288 = vmatpush1.msra.mxu0 0.0
  %289 = vmatprep.subr.mxu0 0.0
  %290 = vmatpush1.msra.mxu0 0.0
  %291 = vmatprep.subr.mxu0 0.0
  %292 = vmatpush1.msra.mxu0 0.0
  %293 = vmatprep.subr.mxu0 0.0
  %294 = vmatpush1.msra.mxu0 0.0
  %295 = vmatprep.subr.mxu0 0.0
  %296 = vmatpush1.msra.mxu0 0.0
  %297 = vmatprep.subr.mxu0 0.0
  %298 = vmatpush1.msra.mxu0 0.0
  %299 = vmatprep.subr.mxu0 0.0
  %300 = vmatpush1.msra.mxu0 0.0
  %301 = vmatprep.subr.mxu0 0.0
  %302 = vmatpush1.msra.mxu0 0.0
  %303 = vmatprep.subr.mxu0 0.0
  %304 = vmatpush1.msra.mxu0 0.0
  %305 = vmatprep.subr.mxu0 0.0
  %306 = vmatpush1.msra.mxu0 0.0
  %307 = vmatprep.subr.mxu0 0.0
  %308 = vmatpush1.msra.mxu0 0.0
  %309 = vmatprep.subr.mxu0 0.0
  %310 = vmatpush1.msra.mxu0 0.0
  %311 = vmatprep.subr.mxu0 0.0
  %312 = vmatpush1.msra.mxu0 0.0
  %313 = vmatprep.subr.mxu0 0.0
  %314 = vmatpush1.msra.mxu0 0.0
  %315 = vmatprep.subr.mxu0 0.0
  %316 = vmatpush1.msra.mxu0 0.0
  %317 = vmatprep.subr.mxu0 0.0
  %318 = vmatpush1.msra.mxu0 0.0
  %319 = vmatprep.mubr.f32.mxu0 0.0
  %320 = vmatmul.mubr.f32.gmra.mrb[0].mxu0 %v105
  %v321 = vpop.f32.mrb[0].mxu0
  %v322 = vadd.f32 %v101, %v321
  %v323 = vpop.f32.mrb[0].mxu0
  %324 = vmatprep.mubr.f32.mxu0 0.0
  %325 = vmatmul.mubr.f32.gmra.mrb[0].mxu0 %v108
  %v326 = vpop.f32.mrb[0].mxu0
  %v327 = vadd.f32 %v101, %v326
  %v328 = vpop.f32.mrb[0].mxu0
  %329 = vmatprep.mubr.f32.mxu0 0.0
  %330 = vmatmul.mubr.f32.gmra.mrb[0].mxu0 %v111
  %v331 = vpop.f32.mrb[0].mxu0
  %v332 = vadd.f32 %v101, %v331
  %v333 = vpop.f32.mrb[0].mxu0
  %334 = vmatprep.mubr.f32.mxu0 0.0
  %335 = vmatmul.mubr.f32.gmra.mrb[0].mxu0 %v114
  %v336 = vpop.f32.mrb[0].mxu0
  %v337 = vadd.f32 %v101, %v336
  %v338 = vpop.f32.mrb[0].mxu0
  %339 = vmatprep.mubr.f32.mxu0 0.0
  %340 = vmatmul.mubr.f32.gmra.mrb[0].mxu0 %v117
  %v341 = vpop.f32.mrb[0].mxu0
  %v342 = vadd.f32 %v101, %v341
  %v343 = vpop.f32.mrb[0].mxu0
  %344 = vmatprep.mubr.f32.mxu0 0.0
  %345 = vmatmul.mubr.f32.gmra.mrb[0].mxu0 %v120
  %v346 = vpop.f32.mrb[0].mxu0
  %v347 = vadd.f32 %v101, %v346
  %v348 = vpop.f32.mrb[0].mxu0
  %349 = vmatprep.mubr.f32.mxu0 0.0
  %350 = vmatmul.mubr.f32.gmra.mrb[0].mxu0 %v123
  %v351 = vpop.f32.mrb[0].mxu0
  %v352 = vadd.f32 %v101, %v351
  %v353 = vpop.f32.mrb[0].mxu0
  %354 = vmatprep.mubr.f32.mxu0 0.0
  %355 = vmatmul.mubr.f32.gmra.mrb[0].mxu0 %v126
  %v356 = vpop.f32.mrb[0].mxu0
  %v357 = vadd.f32 %v101, %v356
  %v358 = vpop.f32.mrb[0].mxu0
  %359 = vmatprep.mubr.f32.mxu0 0.0
  %360 = vmatmul.mubr.f32.gmra.mrb[0].mxu0 %v129
  %v361 = vpop.f32.mrb[0].mxu0
  %v362 = vadd.f32 %v101, %v361
  %v363 = vpop.f32.mrb[0].mxu0
  %364 = vmatprep.mubr.f32.mxu0 0.0
  %365 = vmatmul.mubr.f32.gmra.mrb[0].mxu0 %v132
  %v366 = vpop.f32.mrb[0].mxu0
  %v367 = vadd.f32 %v101, %v366
  %v368 = vpop.f32.mrb[0].mxu0
  %369 = vmatprep.mubr.f32.mxu0 0.0
  %370 = vmatmul.mubr.f32.gmra.mrb[0].mxu0 %v135
  %v371 = vpop.f32.mrb[0].mxu0
  %v372 = vadd.f32 %v101, %v371
  %v373 = vpop.f32.mrb[0].mxu0
  %374 = vmatprep.mubr.f32.mxu0 0.0
  %375 = vmatmul.mubr.f32.gmra.mrb[0].mxu0 %v138
  %v376 = vpop.f32.mrb[0].mxu0
  %v377 = vadd.f32 %v101, %v376
  %v378 = vpop.f32.mrb[0].mxu0
  %379 = vmatprep.mubr.f32.mxu0 0.0
  %380 = vmatmul.mubr.f32.gmra.mrb[0].mxu0 %v141
  %v381 = vpop.f32.mrb[0].mxu0
  %v382 = vadd.f32 %v101, %v381
  %v383 = vpop.f32.mrb[0].mxu0
  %384 = vmatprep.mubr.f32.mxu0 0.0
  %385 = vmatmul.mubr.f32.gmra.mrb[0].mxu0 %v144
  %v386 = vpop.f32.mrb[0].mxu0
  %v387 = vadd.f32 %v101, %v386
  %v388 = vpop.f32.mrb[0].mxu0
  %389 = vmatprep.mubr.f32.mxu0 0.0
  %390 = vmatmul.mubr.f32.gmra.mrb[0].mxu0 %v147
  %v391 = vpop.f32.mrb[0].mxu0
  %v392 = vadd.f32 %v101, %v391
  %v393 = vpop.f32.mrb[0].mxu0
  %394 = vmatprep.mubr.f32.mxu0 0.0
  %395 = vmatmul.mubr.f32.gmra.mrb[0].mxu0 %v150
  %v396 = vpop.f32.mrb[0].mxu0
  %v397 = vadd.f32 %v101, %v396
  %v398 = vpop.f32.mrb[0].mxu0
  %399 = vmatprep.mubr.f32.mxu0 0.0
  %400 = vmatmul.mubr.f32.gmra.mrb[0].mxu0 %v153
  %v401 = vpop.f32.mrb[0].mxu0
  %v402 = vadd.f32 %v101, %v401
  %v403 = vpop.f32.mrb[0].mxu0
  %404 = vmatprep.mubr.f32.mxu0 0.0
  %405 = vmatmul.mubr.f32.gmra.mrb[0].mxu0 %v156
  %v406 = vpop.f32.mrb[0].mxu0
  %v407 = vadd.f32 %v101, %v406
  %v408 = vpop.f32.mrb[0].mxu0
  %409 = vmatprep.mubr.f32.mxu0 0.0
  %410 = vmatmul.mubr.f32.gmra.mrb[0].mxu0 %v159
  %v411 = vpop.f32.mrb[0].mxu0
  %v412 = vadd.f32 %v101, %v411
  %v413 = vpop.f32.mrb[0].mxu0
  %414 = vmatprep.mubr.f32.mxu0 0.0
  %415 = vmatmul.mubr.f32.gmra.mrb[0].mxu0 %v162
  %v416 = vpop.f32.mrb[0].mxu0
  %v417 = vadd.f32 %v101, %v416
  %v418 = vpop.f32.mrb[0].mxu0
  %419 = vmatprep.mubr.f32.mxu0 0.0
  %420 = vmatmul.mubr.f32.gmra.mrb[0].mxu0 %v165
  %v421 = vpop.f32.mrb[0].mxu0
  %v422 = vadd.f32 %v101, %v421
  %v423 = vpop.f32.mrb[0].mxu0
  %424 = vmatprep.mubr.f32.mxu0 0.0
  %425 = vmatmul.mubr.f32.gmra.mrb[0].mxu0 %v168
  %v426 = vpop.f32.mrb[0].mxu0
  %v427 = vadd.f32 %v101, %v426
  %v428 = vpop.f32.mrb[0].mxu0
  %429 = vmatprep.mubr.f32.mxu0 0.0
  %430 = vmatmul.mubr.f32.gmra.mrb[0].mxu0 %v171
  %v431 = vpop.f32.mrb[0].mxu0
  %v432 = vadd.f32 %v101, %v431
  %v433 = vpop.f32.mrb[0].mxu0
  %434 = vmatprep.mubr.f32.mxu0 0.0
  %435 = vmatmul.mubr.f32.gmra.mrb[0].mxu0 %v174
  %v436 = vpop.f32.mrb[0].mxu0
  %v437 = vadd.f32 %v101, %v436
  %v438 = vpop.f32.mrb[0].mxu0
  %439 = vmatprep.mubr.f32.mxu0 0.0
  %440 = vmatmul.mubr.f32.gmra.mrb[0].mxu0 %v177
  %v441 = vpop.f32.mrb[0].mxu0
  %v442 = vadd.f32 %v101, %v441
  %v443 = vpop.f32.mrb[0].mxu0
  %444 = vmatprep.mubr.f32.mxu0 0.0
  %445 = vmatmul.mubr.f32.gmra.mrb[0].mxu0 %v180
  %v446 = vpop.f32.mrb[0].mxu0
  %v447 = vadd.f32 %v101, %v446
  %v448 = vpop.f32.mrb[0].mxu0
  %449 = vmatprep.mubr.f32.mxu0 0.0
  %450 = vmatmul.mubr.f32.gmra.mrb[0].mxu0 %v183
  %v451 = vpop.f32.mrb[0].mxu0
  %v452 = vadd.f32 %v101, %v451
  %v453 = vpop.f32.mrb[0].mxu0
  %454 = vmatprep.mubr.f32.mxu0 0.0
  %455 = vmatmul.mubr.f32.gmra.mrb[0].mxu0 %v186
  %v456 = vpop.f32.mrb[0].mxu0
  %v457 = vadd.f32 %v101, %v456
  %v458 = vpop.f32.mrb[0].mxu0
  %459 = vmatprep.mubr.f32.mxu0 0.0
  %460 = vmatmul.mubr.f32.gmra.mrb[0].mxu0 %v189
  %v461 = vpop.f32.mrb[0].mxu0
  %v462 = vadd.f32 %v101, %v461
  %v463 = vpop.f32.mrb[0].mxu0
  %464 = vmatprep.mubr.f32.mxu0 0.0
  %465 = vmatmul.mubr.f32.gmra.mrb[0].mxu0 %v192
  %v466 = vpop.f32.mrb[0].mxu0
  %v467 = vadd.f32 %v101, %v466
  %v468 = vpop.f32.mrb[0].mxu0
  %469 = vmatprep.mubr.f32.mxu0 0.0
  %470 = vmatmul.mubr.f32.gmra.mrb[0].mxu0 %v195
  %v471 = vpop.f32.mrb[0].mxu0
  %v472 = vadd.f32 %v101, %v471
  %v473 = vpop.f32.mrb[0].mxu0
  %474 = vmatprep.mubr.f32.mxu0 0.0
  %475 = vmatmul.mubr.f32.gmra.mrb[0].mxu0 %v198
  %v476 = vpop.f32.mrb[0].mxu0
  %v477 = vadd.f32 %v101, %v476
  %v478 = vpop.f32.mrb[0].mxu0
  %479 = vmatprep.mubr.f32.mxu0 0.0
  %480 = vmatmul.mubr.f32.gmra.mrb[0].mxu0 %v201
  %v481 = vpop.f32.mrb[0].mxu0
  %v482 = vadd.f32 %v101, %v481
  %v483 = vpop.f32.mrb[0].mxu0
  %484 = vmatprep.mubr.f32.mxu0 0.0
  %485 = vmatmul.mubr.f32.gmra.mrb[0].mxu0 %v204
  %v486 = vpop.f32.mrb[0].mxu0
  %v487 = vadd.f32 %v101, %v486
  %v488 = vpop.f32.mrb[0].mxu0
  %489 = vmatprep.mubr.f32.mxu0 0.0
  %490 = vmatmul.mubr.f32.gmra.mrb[0].mxu0 %v207
  %v491 = vpop.f32.mrb[0].mxu0
  %v492 = vadd.f32 %v101, %v491
  %v493 = vpop.f32.mrb[0].mxu0
  %494 = vmatprep.mubr.f32.mxu0 0.0
  %495 = vmatmul.mubr.f32.gmra.mrb[0].mxu0 %v210
  %v496 = vpop.f32.mrb[0].mxu0
  %v497 = vadd.f32 %v101, %v496
  %v498 = vpop.f32.mrb[0].mxu0
  %499 = vmatprep.mubr.f32.mxu0 0.0
  %500 = vmatmul.mubr.f32.gmra.mrb[0].mxu0 %v213
  %v501 = vpop.f32.mrb[0].mxu0
  %v502 = vadd.f32 %v101, %v501
  %v503 = vpop.f32.mrb[0].mxu0
  %504 = vmatprep.mubr.f32.mxu0 0.0
  %505 = vmatmul.mubr.f32.gmra.mrb[0].mxu0 %v216
  %v506 = vpop.f32.mrb[0].mxu0
  %v507 = vadd.f32 %v101, %v506
  %v508 = vpop.f32.mrb[0].mxu0
  %509 = vmatprep.mubr.f32.mxu0 0.0
  %510 = vmatmul.mubr.f32.gmra.mrb[0].mxu0 %v219
  %v511 = vpop.f32.mrb[0].mxu0
  %v512 = vadd.f32 %v101, %v511
  %v513 = vpop.f32.mrb[0].mxu0
  %514 = vmatprep.mubr.f32.mxu0 0.0
  %515 = vmatmul.mubr.f32.gmra.mrb[0].mxu0 %v222
  %v516 = vpop.f32.mrb[0].mxu0
  %v517 = vadd.f32 %v101, %v516
  %v518 = vpop.f32.mrb[0].mxu0
  %519 = vmatprep.mubr.f32.mxu0 0.0
  %520 = vmatmul.mubr.f32.gmra.mrb[0].mxu0 %v225
  %v521 = vpop.f32.mrb[0].mxu0
  %v522 = vadd.f32 %v101, %v521
  %v523 = vpop.f32.mrb[0].mxu0
  %524 = vmatprep.mubr.f32.mxu0 0.0
  %525 = vmatmul.mubr.f32.gmra.mrb[0].mxu0 %v228
  %v526 = vpop.f32.mrb[0].mxu0
  %v527 = vadd.f32 %v101, %v526
  %v528 = vpop.f32.mrb[0].mxu0
  %529 = vmatprep.mubr.f32.mxu0 0.0
  %530 = vmatmul.mubr.f32.gmra.mrb[0].mxu0 %v231
  %v531 = vpop.f32.mrb[0].mxu0
  %v532 = vadd.f32 %v101, %v531
  %v533 = vpop.f32.mrb[0].mxu0
  %534 = vmatprep.mubr.f32.mxu0 0.0
  %535 = vmatmul.mubr.f32.gmra.mrb[0].mxu0 %v234
  %v536 = vpop.f32.mrb[0].mxu0
  %v537 = vadd.f32 %v101, %v536
  %v538 = vpop.f32.mrb[0].mxu0
  %539 = vmatprep.mubr.f32.mxu0 0.0
  %540 = vmatmul.mubr.f32.gmra.mrb[0].mxu0 %v237
  %v541 = vpop.f32.mrb[0].mxu0
  %v542 = vadd.f32 %v101, %v541
  %v543 = vpop.f32.mrb[0].mxu0
  %544 = vmatprep.mubr.f32.mxu0 0.0
  %545 = vmatmul.mubr.f32.gmra.mrb[0].mxu0 %v240
  %v546 = vpop.f32.mrb[0].mxu0
  %v547 = vadd.f32 %v101, %v546
  %v548 = vpop.f32.mrb[0].mxu0
  %549 = vmatprep.mubr.f32.mxu0 0.0
  %550 = vmatmul.mubr.f32.gmra.mrb[0].mxu0 %v243
  %v551 = vpop.f32.mrb[0].mxu0
  %v552 = vadd.f32 %v101, %v551
  %v553 = vpop.f32.mrb[0].mxu0
  %554 = vmatprep.mubr.f32.mxu0 0.0
  %555 = vmatmul.mubr.f32.gmra.mrb[0].mxu0 %v246
  %v556 = vpop.f32.mrb[0].mxu0
  %v557 = vadd.f32 %v101, %v556
  %v558 = vpop.f32.mrb[0].mxu0
  %559 = vmatprep.mubr.f32.mxu0 0.0
  %560 = vmatmul.mubr.f32.gmra.mrb[0].mxu0 %v249
  %v561 = vpop.f32.mrb[0].mxu0
  %v562 = vadd.f32 %v101, %v561
  %v563 = vpop.f32.mrb[0].mxu0
  %564 = vdwg.mxu0
  %v614 = vcombine.high %v322, %v322
  %v616 = vunpack.c.l.s4 1983009808
  %v617 = vunpack.c.0.s8 %v616
  %v618 = vlaneseq
  %v619 = vshrl.u32 %v618, 7
  %v620 = vsub.s32 %v617, %v619
  %v621 = vrot.slane %v322, %v620
  %v623 = vunpack.c.l.s4 1983009808
  %v624 = vunpack.c.0.s8 %v623
  %v625 = vlaneseq
  %v626 = vshrl.u32 %v625, 7
  %v627 = vsub.s32 %v624, %v626
  %v628 = vrot.slane %v614, %v627
  %v629 = vcombine.high %v621, %v621
  %v630 = vcombine.high %v628, %v628
  %v631 = vcombine.high %v327, %v327
  %v633 = vunpack.c.l.s4 1983009808
  %v634 = vunpack.c.0.s8 %v633
  %v635 = vlaneseq
  %v636 = vshrl.u32 %v635, 7
  %v637 = vsub.s32 %v634, %v636
  %v638 = vrot.slane %v327, %v637
  %v640 = vunpack.c.l.s4 1983009808
  %v641 = vunpack.c.0.s8 %v640
  %v642 = vlaneseq
  %v643 = vshrl.u32 %v642, 7
  %v644 = vsub.s32 %v641, %v643
  %v645 = vrot.slane %v631, %v644
  %v646 = vcombine.high %v638, %v638
  %v647 = vcombine.high %v645, %v645
  %v648 = vcombine.high %v332, %v332
  %v650 = vunpack.c.l.s4 1983009808
  %v651 = vunpack.c.0.s8 %v650
  %v652 = vlaneseq
  %v653 = vshrl.u32 %v652, 7
  %v654 = vsub.s32 %v651, %v653
  %v655 = vrot.slane %v332, %v654
  %v657 = vunpack.c.l.s4 1983009808
  %v658 = vunpack.c.0.s8 %v657
  %v659 = vlaneseq
  %v660 = vshrl.u32 %v659, 7
  %v661 = vsub.s32 %v658, %v660
  %v662 = vrot.slane %v648, %v661
  %v663 = vcombine.high %v655, %v655
  %v664 = vcombine.high %v662, %v662
  %v665 = vcombine.high %v337, %v337
  %v667 = vunpack.c.l.s4 1983009808
  %v668 = vunpack.c.0.s8 %v667
  %v669 = vlaneseq
  %v670 = vshrl.u32 %v669, 7
  %v671 = vsub.s32 %v668, %v670
  %v672 = vrot.slane %v337, %v671
  %v674 = vunpack.c.l.s4 1983009808
  %v675 = vunpack.c.0.s8 %v674
  %v676 = vlaneseq
  %v677 = vshrl.u32 %v676, 7
  %v678 = vsub.s32 %v675, %v677
  %v679 = vrot.slane %v665, %v678
  %v680 = vcombine.high %v672, %v672
  %v681 = vcombine.high %v679, %v679
  %v682 = vcombine.high %v342, %v342
  %v684 = vunpack.c.l.s4 1983009808
  %v685 = vunpack.c.0.s8 %v684
  %v686 = vlaneseq
  %v687 = vshrl.u32 %v686, 7
  %v688 = vsub.s32 %v685, %v687
  %v689 = vrot.slane %v342, %v688
  %v691 = vunpack.c.l.s4 1983009808
  %v692 = vunpack.c.0.s8 %v691
  %v693 = vlaneseq
  %v694 = vshrl.u32 %v693, 7
  %v695 = vsub.s32 %v692, %v694
  %v696 = vrot.slane %v682, %v695
  %v697 = vcombine.high %v689, %v689
  %v698 = vcombine.high %v696, %v696
  %v699 = vcombine.high %v347, %v347
  %v701 = vunpack.c.l.s4 1983009808
  %v702 = vunpack.c.0.s8 %v701
  %v703 = vlaneseq
  %v704 = vshrl.u32 %v703, 7
  %v705 = vsub.s32 %v702, %v704
  %v706 = vrot.slane %v347, %v705
  %v708 = vunpack.c.l.s4 1983009808
  %v709 = vunpack.c.0.s8 %v708
  %v710 = vlaneseq
  %v711 = vshrl.u32 %v710, 7
  %v712 = vsub.s32 %v709, %v711
  %v713 = vrot.slane %v699, %v712
  %v714 = vcombine.high %v706, %v706
  %v715 = vcombine.high %v713, %v713
  %v716 = vcombine.high %v352, %v352
  %v718 = vunpack.c.l.s4 1983009808
  %v719 = vunpack.c.0.s8 %v718
  %v720 = vlaneseq
  %v721 = vshrl.u32 %v720, 7
  %v722 = vsub.s32 %v719, %v721
  %v723 = vrot.slane %v352, %v722
  %v725 = vunpack.c.l.s4 1983009808
  %v726 = vunpack.c.0.s8 %v725
  %v727 = vlaneseq
  %v728 = vshrl.u32 %v727, 7
  %v729 = vsub.s32 %v726, %v728
  %v730 = vrot.slane %v716, %v729
  %v731 = vcombine.high %v723, %v723
  %v732 = vcombine.high %v730, %v730
  %v733 = vcombine.high %v357, %v357
  %v735 = vunpack.c.l.s4 1983009808
  %v736 = vunpack.c.0.s8 %v735
  %v737 = vlaneseq
  %v738 = vshrl.u32 %v737, 7
  %v739 = vsub.s32 %v736, %v738
  %v740 = vrot.slane %v357, %v739
  %v742 = vunpack.c.l.s4 1983009808
  %v743 = vunpack.c.0.s8 %v742
  %v744 = vlaneseq
  %v745 = vshrl.u32 %v744, 7
  %v746 = vsub.s32 %v743, %v745
  %v747 = vrot.slane %v733, %v746
  %v748 = vcombine.high %v740, %v740
  %v749 = vcombine.high %v747, %v747
  %v750 = vcombine.high %v362, %v362
  %v752 = vunpack.c.l.s4 1983009808
  %v753 = vunpack.c.0.s8 %v752
  %v754 = vlaneseq
  %v755 = vshrl.u32 %v754, 7
  %v756 = vsub.s32 %v753, %v755
  %v757 = vrot.slane %v362, %v756
  %v759 = vunpack.c.l.s4 1983009808
  %v760 = vunpack.c.0.s8 %v759
  %v761 = vlaneseq
  %v762 = vshrl.u32 %v761, 7
  %v763 = vsub.s32 %v760, %v762
  %v764 = vrot.slane %v750, %v763
  %v765 = vcombine.high %v757, %v757
  %v766 = vcombine.high %v764, %v764
  %v767 = vcombine.high %v367, %v367
  %v769 = vunpack.c.l.s4 1983009808
  %v770 = vunpack.c.0.s8 %v769
  %v771 = vlaneseq
  %v772 = vshrl.u32 %v771, 7
  %v773 = vsub.s32 %v770, %v772
  %v774 = vrot.slane %v367, %v773
  %v776 = vunpack.c.l.s4 1983009808
  %v777 = vunpack.c.0.s8 %v776
  %v778 = vlaneseq
  %v779 = vshrl.u32 %v778, 7
  %v780 = vsub.s32 %v777, %v779
  %v781 = vrot.slane %v767, %v780
  %v782 = vcombine.high %v774, %v774
  %v783 = vcombine.high %v781, %v781
  %v784 = vcombine.high %v372, %v372
  %v786 = vunpack.c.l.s4 1983009808
  %v787 = vunpack.c.0.s8 %v786
  %v788 = vlaneseq
  %v789 = vshrl.u32 %v788, 7
  %v790 = vsub.s32 %v787, %v789
  %v791 = vrot.slane %v372, %v790
  %v793 = vunpack.c.l.s4 1983009808
  %v794 = vunpack.c.0.s8 %v793
  %v795 = vlaneseq
  %v796 = vshrl.u32 %v795, 7
  %v797 = vsub.s32 %v794, %v796
  %v798 = vrot.slane %v784, %v797
  %v799 = vcombine.high %v791, %v791
  %v800 = vcombine.high %v798, %v798
  %v801 = vcombine.high %v377, %v377
  %v803 = vunpack.c.l.s4 1983009808
  %v804 = vunpack.c.0.s8 %v803
  %v805 = vlaneseq
  %v806 = vshrl.u32 %v805, 7
  %v807 = vsub.s32 %v804, %v806
  %v808 = vrot.slane %v377, %v807
  %v810 = vunpack.c.l.s4 1983009808
  %v811 = vunpack.c.0.s8 %v810
  %v812 = vlaneseq
  %v813 = vshrl.u32 %v812, 7
  %v814 = vsub.s32 %v811, %v813
  %v815 = vrot.slane %v801, %v814
  %v816 = vcombine.high %v808, %v808
  %v817 = vcombine.high %v815, %v815
  %v818 = vcombine.high %v382, %v382
  %v820 = vunpack.c.l.s4 1983009808
  %v821 = vunpack.c.0.s8 %v820
  %v822 = vlaneseq
  %v823 = vshrl.u32 %v822, 7
  %v824 = vsub.s32 %v821, %v823
  %v825 = vrot.slane %v382, %v824
  %v827 = vunpack.c.l.s4 1983009808
  %v828 = vunpack.c.0.s8 %v827
  %v829 = vlaneseq
  %v830 = vshrl.u32 %v829, 7
  %v831 = vsub.s32 %v828, %v830
  %v832 = vrot.slane %v818, %v831
  %v833 = vcombine.high %v825, %v825
  %v834 = vcombine.high %v832, %v832
  %v835 = vcombine.high %v387, %v387
  %v837 = vunpack.c.l.s4 1983009808
  %v838 = vunpack.c.0.s8 %v837
  %v839 = vlaneseq
  %v840 = vshrl.u32 %v839, 7
  %v841 = vsub.s32 %v838, %v840
  %v842 = vrot.slane %v387, %v841
  %v844 = vunpack.c.l.s4 1983009808
  %v845 = vunpack.c.0.s8 %v844
  %v846 = vlaneseq
  %v847 = vshrl.u32 %v846, 7
  %v848 = vsub.s32 %v845, %v847
  %v849 = vrot.slane %v835, %v848
  %v850 = vcombine.high %v842, %v842
  %v851 = vcombine.high %v849, %v849
  %v852 = vcombine.high %v392, %v392
  %v854 = vunpack.c.l.s4 1983009808
  %v855 = vunpack.c.0.s8 %v854
  %v856 = vlaneseq
  %v857 = vshrl.u32 %v856, 7
  %v858 = vsub.s32 %v855, %v857
  %v859 = vrot.slane %v392, %v858
  %v861 = vunpack.c.l.s4 1983009808
  %v862 = vunpack.c.0.s8 %v861
  %v863 = vlaneseq
  %v864 = vshrl.u32 %v863, 7
  %v865 = vsub.s32 %v862, %v864
  %v866 = vrot.slane %v852, %v865
  %v867 = vcombine.high %v859, %v859
  %v868 = vcombine.high %v866, %v866
  %v869 = vcombine.high %v397, %v397
  %v871 = vunpack.c.l.s4 1983009808
  %v872 = vunpack.c.0.s8 %v871
  %v873 = vlaneseq
  %v874 = vshrl.u32 %v873, 7
  %v875 = vsub.s32 %v872, %v874
  %v876 = vrot.slane %v397, %v875
  %v878 = vunpack.c.l.s4 1983009808
  %v879 = vunpack.c.0.s8 %v878
  %v880 = vlaneseq
  %v881 = vshrl.u32 %v880, 7
  %v882 = vsub.s32 %v879, %v881
  %v883 = vrot.slane %v869, %v882
  %v884 = vcombine.high %v876, %v876
  %v885 = vcombine.high %v883, %v883
  %v886 = vcombine.high %v402, %v402
  %v888 = vunpack.c.l.s4 1983009808
  %v889 = vunpack.c.0.s8 %v888
  %v890 = vlaneseq
  %v891 = vshrl.u32 %v890, 7
  %v892 = vsub.s32 %v889, %v891
  %v893 = vrot.slane %v402, %v892
  %v895 = vunpack.c.l.s4 1983009808
  %v896 = vunpack.c.0.s8 %v895
  %v897 = vlaneseq
  %v898 = vshrl.u32 %v897, 7
  %v899 = vsub.s32 %v896, %v898
  %v900 = vrot.slane %v886, %v899
  %v901 = vcombine.high %v893, %v893
  %v902 = vcombine.high %v900, %v900
  %v903 = vcombine.high %v407, %v407
  %v905 = vunpack.c.l.s4 1983009808
  %v906 = vunpack.c.0.s8 %v905
  %v907 = vlaneseq
  %v908 = vshrl.u32 %v907, 7
  %v909 = vsub.s32 %v906, %v908
  %v910 = vrot.slane %v407, %v909
  %v912 = vunpack.c.l.s4 1983009808
  %v913 = vunpack.c.0.s8 %v912
  %v914 = vlaneseq
  %v915 = vshrl.u32 %v914, 7
  %v916 = vsub.s32 %v913, %v915
  %v917 = vrot.slane %v903, %v916
  %v918 = vcombine.high %v910, %v910
  %v919 = vcombine.high %v917, %v917
  %v920 = vcombine.high %v412, %v412
  %v922 = vunpack.c.l.s4 1983009808
  %v923 = vunpack.c.0.s8 %v922
  %v924 = vlaneseq
  %v925 = vshrl.u32 %v924, 7
  %v926 = vsub.s32 %v923, %v925
  %v927 = vrot.slane %v412, %v926
  %v929 = vunpack.c.l.s4 1983009808
  %v930 = vunpack.c.0.s8 %v929
  %v931 = vlaneseq
  %v932 = vshrl.u32 %v931, 7
  %v933 = vsub.s32 %v930, %v932
  %v934 = vrot.slane %v920, %v933
  %v935 = vcombine.high %v927, %v927
  %v936 = vcombine.high %v934, %v934
  %v937 = vcombine.high %v417, %v417
  %v939 = vunpack.c.l.s4 1983009808
  %v940 = vunpack.c.0.s8 %v939
  %v941 = vlaneseq
  %v942 = vshrl.u32 %v941, 7
  %v943 = vsub.s32 %v940, %v942
  %v944 = vrot.slane %v417, %v943
  %v946 = vunpack.c.l.s4 1983009808
  %v947 = vunpack.c.0.s8 %v946
  %v948 = vlaneseq
  %v949 = vshrl.u32 %v948, 7
  %v950 = vsub.s32 %v947, %v949
  %v951 = vrot.slane %v937, %v950
  %v952 = vcombine.high %v944, %v944
  %v953 = vcombine.high %v951, %v951
  %v954 = vcombine.high %v422, %v422
  %v956 = vunpack.c.l.s4 1983009808
  %v957 = vunpack.c.0.s8 %v956
  %v958 = vlaneseq
  %v959 = vshrl.u32 %v958, 7
  %v960 = vsub.s32 %v957, %v959
  %v961 = vrot.slane %v422, %v960
  %v963 = vunpack.c.l.s4 1983009808
  %v964 = vunpack.c.0.s8 %v963
  %v965 = vlaneseq
  %v966 = vshrl.u32 %v965, 7
  %v967 = vsub.s32 %v964, %v966
  %v968 = vrot.slane %v954, %v967
  %v969 = vcombine.high %v961, %v961
  %v970 = vcombine.high %v968, %v968
  %v971 = vcombine.high %v427, %v427
  %v973 = vunpack.c.l.s4 1983009808
  %v974 = vunpack.c.0.s8 %v973
  %v975 = vlaneseq
  %v976 = vshrl.u32 %v975, 7
  %v977 = vsub.s32 %v974, %v976
  %v978 = vrot.slane %v427, %v977
  %v980 = vunpack.c.l.s4 1983009808
  %v981 = vunpack.c.0.s8 %v980
  %v982 = vlaneseq
  %v983 = vshrl.u32 %v982, 7
  %v984 = vsub.s32 %v981, %v983
  %v985 = vrot.slane %v971, %v984
  %v986 = vcombine.high %v978, %v978
  %v987 = vcombine.high %v985, %v985
  %v988 = vcombine.high %v432, %v432
  %v990 = vunpack.c.l.s4 1983009808
  %v991 = vunpack.c.0.s8 %v990
  %v992 = vlaneseq
  %v993 = vshrl.u32 %v992, 7
  %v994 = vsub.s32 %v991, %v993
  %v995 = vrot.slane %v432, %v994
  %v997 = vunpack.c.l.s4 1983009808
  %v998 = vunpack.c.0.s8 %v997
  %v999 = vlaneseq
  %v1000 = vshrl.u32 %v999, 7
  %v1001 = vsub.s32 %v998, %v1000
  %v1002 = vrot.slane %v988, %v1001
  %v1003 = vcombine.high %v995, %v995
  %v1004 = vcombine.high %v1002, %v1002
  %v1005 = vcombine.high %v437, %v437
  %v1007 = vunpack.c.l.s4 1983009808
  %v1008 = vunpack.c.0.s8 %v1007
  %v1009 = vlaneseq
  %v1010 = vshrl.u32 %v1009, 7
  %v1011 = vsub.s32 %v1008, %v1010
  %v1012 = vrot.slane %v437, %v1011
  %v1014 = vunpack.c.l.s4 1983009808
  %v1015 = vunpack.c.0.s8 %v1014
  %v1016 = vlaneseq
  %v1017 = vshrl.u32 %v1016, 7
  %v1018 = vsub.s32 %v1015, %v1017
  %v1019 = vrot.slane %v1005, %v1018
  %v1020 = vcombine.high %v1012, %v1012
  %v1021 = vcombine.high %v1019, %v1019
  %v1022 = vcombine.high %v442, %v442
  %v1024 = vunpack.c.l.s4 1983009808
  %v1025 = vunpack.c.0.s8 %v1024
  %v1026 = vlaneseq
  %v1027 = vshrl.u32 %v1026, 7
  %v1028 = vsub.s32 %v1025, %v1027
  %v1029 = vrot.slane %v442, %v1028
  %v1031 = vunpack.c.l.s4 1983009808
  %v1032 = vunpack.c.0.s8 %v1031
  %v1033 = vlaneseq
  %v1034 = vshrl.u32 %v1033, 7
  %v1035 = vsub.s32 %v1032, %v1034
  %v1036 = vrot.slane %v1022, %v1035
  %v1037 = vcombine.high %v1029, %v1029
  %v1038 = vcombine.high %v1036, %v1036
  %v1039 = vcombine.high %v447, %v447
  %v1041 = vunpack.c.l.s4 1983009808
  %v1042 = vunpack.c.0.s8 %v1041
  %v1043 = vlaneseq
  %v1044 = vshrl.u32 %v1043, 7
  %v1045 = vsub.s32 %v1042, %v1044
  %v1046 = vrot.slane %v447, %v1045
  %v1048 = vunpack.c.l.s4 1983009808
  %v1049 = vunpack.c.0.s8 %v1048
  %v1050 = vlaneseq
  %v1051 = vshrl.u32 %v1050, 7
  %v1052 = vsub.s32 %v1049, %v1051
  %v1053 = vrot.slane %v1039, %v1052
  %v1054 = vcombine.high %v1046, %v1046
  %v1055 = vcombine.high %v1053, %v1053
  %v1056 = vcombine.high %v452, %v452
  %v1058 = vunpack.c.l.s4 1983009808
  %v1059 = vunpack.c.0.s8 %v1058
  %v1060 = vlaneseq
  %v1061 = vshrl.u32 %v1060, 7
  %v1062 = vsub.s32 %v1059, %v1061
  %v1063 = vrot.slane %v452, %v1062
  %v1065 = vunpack.c.l.s4 1983009808
  %v1066 = vunpack.c.0.s8 %v1065
  %v1067 = vlaneseq
  %v1068 = vshrl.u32 %v1067, 7
  %v1069 = vsub.s32 %v1066, %v1068
  %v1070 = vrot.slane %v1056, %v1069
  %v1071 = vcombine.high %v1063, %v1063
  %v1072 = vcombine.high %v1070, %v1070
  %v1073 = vcombine.high %v457, %v457
  %v1075 = vunpack.c.l.s4 1983009808
  %v1076 = vunpack.c.0.s8 %v1075
  %v1077 = vlaneseq
  %v1078 = vshrl.u32 %v1077, 7
  %v1079 = vsub.s32 %v1076, %v1078
  %v1080 = vrot.slane %v457, %v1079
  %v1082 = vunpack.c.l.s4 1983009808
  %v1083 = vunpack.c.0.s8 %v1082
  %v1084 = vlaneseq
  %v1085 = vshrl.u32 %v1084, 7
  %v1086 = vsub.s32 %v1083, %v1085
  %v1087 = vrot.slane %v1073, %v1086
  %v1088 = vcombine.high %v1080, %v1080
  %v1089 = vcombine.high %v1087, %v1087
  %v1090 = vcombine.high %v462, %v462
  %v1092 = vunpack.c.l.s4 1983009808
  %v1093 = vunpack.c.0.s8 %v1092
  %v1094 = vlaneseq
  %v1095 = vshrl.u32 %v1094, 7
  %v1096 = vsub.s32 %v1093, %v1095
  %v1097 = vrot.slane %v462, %v1096
  %v1099 = vunpack.c.l.s4 1983009808
  %v1100 = vunpack.c.0.s8 %v1099
  %v1101 = vlaneseq
  %v1102 = vshrl.u32 %v1101, 7
  %v1103 = vsub.s32 %v1100, %v1102
  %v1104 = vrot.slane %v1090, %v1103
  %v1105 = vcombine.high %v1097, %v1097
  %v1106 = vcombine.high %v1104, %v1104
  %v1107 = vcombine.high %v467, %v467
  %v1109 = vunpack.c.l.s4 1983009808
  %v1110 = vunpack.c.0.s8 %v1109
  %v1111 = vlaneseq
  %v1112 = vshrl.u32 %v1111, 7
  %v1113 = vsub.s32 %v1110, %v1112
  %v1114 = vrot.slane %v467, %v1113
  %v1116 = vunpack.c.l.s4 1983009808
  %v1117 = vunpack.c.0.s8 %v1116
  %v1118 = vlaneseq
  %v1119 = vshrl.u32 %v1118, 7
  %v1120 = vsub.s32 %v1117, %v1119
  %v1121 = vrot.slane %v1107, %v1120
  %v1122 = vcombine.high %v1114, %v1114
  %v1123 = vcombine.high %v1121, %v1121
  %v1124 = vcombine.high %v472, %v472
  %v1126 = vunpack.c.l.s4 1983009808
  %v1127 = vunpack.c.0.s8 %v1126
  %v1128 = vlaneseq
  %v1129 = vshrl.u32 %v1128, 7
  %v1130 = vsub.s32 %v1127, %v1129
  %v1131 = vrot.slane %v472, %v1130
  %v1133 = vunpack.c.l.s4 1983009808
  %v1134 = vunpack.c.0.s8 %v1133
  %v1135 = vlaneseq
  %v1136 = vshrl.u32 %v1135, 7
  %v1137 = vsub.s32 %v1134, %v1136
  %v1138 = vrot.slane %v1124, %v1137
  %v1139 = vcombine.high %v1131, %v1131
  %v1140 = vcombine.high %v1138, %v1138
  %v1141 = vcombine.high %v477, %v477
  %v1143 = vunpack.c.l.s4 1983009808
  %v1144 = vunpack.c.0.s8 %v1143
  %v1145 = vlaneseq
  %v1146 = vshrl.u32 %v1145, 7
  %v1147 = vsub.s32 %v1144, %v1146
  %v1148 = vrot.slane %v477, %v1147
  %v1150 = vunpack.c.l.s4 1983009808
  %v1151 = vunpack.c.0.s8 %v1150
  %v1152 = vlaneseq
  %v1153 = vshrl.u32 %v1152, 7
  %v1154 = vsub.s32 %v1151, %v1153
  %v1155 = vrot.slane %v1141, %v1154
  %v1156 = vcombine.high %v1148, %v1148
  %v1157 = vcombine.high %v1155, %v1155
  %v1158 = vcombine.high %v482, %v482
  %v1160 = vunpack.c.l.s4 1983009808
  %v1161 = vunpack.c.0.s8 %v1160
  %v1162 = vlaneseq
  %v1163 = vshrl.u32 %v1162, 7
  %v1164 = vsub.s32 %v1161, %v1163
  %v1165 = vrot.slane %v482, %v1164
  %v1167 = vunpack.c.l.s4 1983009808
  %v1168 = vunpack.c.0.s8 %v1167
  %v1169 = vlaneseq
  %v1170 = vshrl.u32 %v1169, 7
  %v1171 = vsub.s32 %v1168, %v1170
  %v1172 = vrot.slane %v1158, %v1171
  %v1173 = vcombine.high %v1165, %v1165
  %v1174 = vcombine.high %v1172, %v1172
  %v1175 = vcombine.high %v487, %v487
  %v1177 = vunpack.c.l.s4 1983009808
  %v1178 = vunpack.c.0.s8 %v1177
  %v1179 = vlaneseq
  %v1180 = vshrl.u32 %v1179, 7
  %v1181 = vsub.s32 %v1178, %v1180
  %v1182 = vrot.slane %v487, %v1181
  %v1184 = vunpack.c.l.s4 1983009808
  %v1185 = vunpack.c.0.s8 %v1184
  %v1186 = vlaneseq
  %v1187 = vshrl.u32 %v1186, 7
  %v1188 = vsub.s32 %v1185, %v1187
  %v1189 = vrot.slane %v1175, %v1188
  %v1190 = vcombine.high %v1182, %v1182
  %v1191 = vcombine.high %v1189, %v1189
  %v1192 = vcombine.high %v492, %v492
  %v1194 = vunpack.c.l.s4 1983009808
  %v1195 = vunpack.c.0.s8 %v1194
  %v1196 = vlaneseq
  %v1197 = vshrl.u32 %v1196, 7
  %v1198 = vsub.s32 %v1195, %v1197
  %v1199 = vrot.slane %v492, %v1198
  %v1201 = vunpack.c.l.s4 1983009808
  %v1202 = vunpack.c.0.s8 %v1201
  %v1203 = vlaneseq
  %v1204 = vshrl.u32 %v1203, 7
  %v1205 = vsub.s32 %v1202, %v1204
  %v1206 = vrot.slane %v1192, %v1205
  %v1207 = vcombine.high %v1199, %v1199
  %v1208 = vcombine.high %v1206, %v1206
  %v1209 = vcombine.high %v497, %v497
  %v1211 = vunpack.c.l.s4 1983009808
  %v1212 = vunpack.c.0.s8 %v1211
  %v1213 = vlaneseq
  %v1214 = vshrl.u32 %v1213, 7
  %v1215 = vsub.s32 %v1212, %v1214
  %v1216 = vrot.slane %v497, %v1215
  %v1218 = vunpack.c.l.s4 1983009808
  %v1219 = vunpack.c.0.s8 %v1218
  %v1220 = vlaneseq
  %v1221 = vshrl.u32 %v1220, 7
  %v1222 = vsub.s32 %v1219, %v1221
  %v1223 = vrot.slane %v1209, %v1222
  %v1224 = vcombine.high %v1216, %v1216
  %v1225 = vcombine.high %v1223, %v1223
  %v1226 = vcombine.high %v502, %v502
  %v1228 = vunpack.c.l.s4 1983009808
  %v1229 = vunpack.c.0.s8 %v1228
  %v1230 = vlaneseq
  %v1231 = vshrl.u32 %v1230, 7
  %v1232 = vsub.s32 %v1229, %v1231
  %v1233 = vrot.slane %v502, %v1232
  %v1235 = vunpack.c.l.s4 1983009808
  %v1236 = vunpack.c.0.s8 %v1235
  %v1237 = vlaneseq
  %v1238 = vshrl.u32 %v1237, 7
  %v1239 = vsub.s32 %v1236, %v1238
  %v1240 = vrot.slane %v1226, %v1239
  %v1241 = vcombine.high %v1233, %v1233
  %v1242 = vcombine.high %v1240, %v1240
  %v1243 = vcombine.high %v507, %v507
  %v1245 = vunpack.c.l.s4 1983009808
  %v1246 = vunpack.c.0.s8 %v1245
  %v1247 = vlaneseq
  %v1248 = vshrl.u32 %v1247, 7
  %v1249 = vsub.s32 %v1246, %v1248
  %v1250 = vrot.slane %v507, %v1249
  %v1252 = vunpack.c.l.s4 1983009808
  %v1253 = vunpack.c.0.s8 %v1252
  %v1254 = vlaneseq
  %v1255 = vshrl.u32 %v1254, 7
  %v1256 = vsub.s32 %v1253, %v1255
  %v1257 = vrot.slane %v1243, %v1256
  %v1258 = vcombine.high %v1250, %v1250
  %v1259 = vcombine.high %v1257, %v1257
  %v1260 = vcombine.high %v512, %v512
  %v1262 = vunpack.c.l.s4 1983009808
  %v1263 = vunpack.c.0.s8 %v1262
  %v1264 = vlaneseq
  %v1265 = vshrl.u32 %v1264, 7
  %v1266 = vsub.s32 %v1263, %v1265
  %v1267 = vrot.slane %v512, %v1266
  %v1269 = vunpack.c.l.s4 1983009808
  %v1270 = vunpack.c.0.s8 %v1269
  %v1271 = vlaneseq
  %v1272 = vshrl.u32 %v1271, 7
  %v1273 = vsub.s32 %v1270, %v1272
  %v1274 = vrot.slane %v1260, %v1273
  %v1275 = vcombine.high %v1267, %v1267
  %v1276 = vcombine.high %v1274, %v1274
  %v1277 = vcombine.high %v517, %v517
  %v1279 = vunpack.c.l.s4 1983009808
  %v1280 = vunpack.c.0.s8 %v1279
  %v1281 = vlaneseq
  %v1282 = vshrl.u32 %v1281, 7
  %v1283 = vsub.s32 %v1280, %v1282
  %v1284 = vrot.slane %v517, %v1283
  %v1286 = vunpack.c.l.s4 1983009808
  %v1287 = vunpack.c.0.s8 %v1286
  %v1288 = vlaneseq
  %v1289 = vshrl.u32 %v1288, 7
  %v1290 = vsub.s32 %v1287, %v1289
  %v1291 = vrot.slane %v1277, %v1290
  %v1292 = vcombine.high %v1284, %v1284
  %v1293 = vcombine.high %v1291, %v1291
  %v1294 = vcombine.high %v522, %v522
  %v1296 = vunpack.c.l.s4 1983009808
  %v1297 = vunpack.c.0.s8 %v1296
  %v1298 = vlaneseq
  %v1299 = vshrl.u32 %v1298, 7
  %v1300 = vsub.s32 %v1297, %v1299
  %v1301 = vrot.slane %v522, %v1300
  %v1303 = vunpack.c.l.s4 1983009808
  %v1304 = vunpack.c.0.s8 %v1303
  %v1305 = vlaneseq
  %v1306 = vshrl.u32 %v1305, 7
  %v1307 = vsub.s32 %v1304, %v1306
  %v1308 = vrot.slane %v1294, %v1307
  %v1309 = vcombine.high %v1301, %v1301
  %v1310 = vcombine.high %v1308, %v1308
  %v1311 = vcombine.high %v527, %v527
  %v1313 = vunpack.c.l.s4 1983009808
  %v1314 = vunpack.c.0.s8 %v1313
  %v1315 = vlaneseq
  %v1316 = vshrl.u32 %v1315, 7
  %v1317 = vsub.s32 %v1314, %v1316
  %v1318 = vrot.slane %v527, %v1317
  %v1320 = vunpack.c.l.s4 1983009808
  %v1321 = vunpack.c.0.s8 %v1320
  %v1322 = vlaneseq
  %v1323 = vshrl.u32 %v1322, 7
  %v1324 = vsub.s32 %v1321, %v1323
  %v1325 = vrot.slane %v1311, %v1324
  %v1326 = vcombine.high %v1318, %v1318
  %v1327 = vcombine.high %v1325, %v1325
  %v1328 = vcombine.high %v532, %v532
  %v1330 = vunpack.c.l.s4 1983009808
  %v1331 = vunpack.c.0.s8 %v1330
  %v1332 = vlaneseq
  %v1333 = vshrl.u32 %v1332, 7
  %v1334 = vsub.s32 %v1331, %v1333
  %v1335 = vrot.slane %v532, %v1334
  %v1337 = vunpack.c.l.s4 1983009808
  %v1338 = vunpack.c.0.s8 %v1337
  %v1339 = vlaneseq
  %v1340 = vshrl.u32 %v1339, 7
  %v1341 = vsub.s32 %v1338, %v1340
  %v1342 = vrot.slane %v1328, %v1341
  %v1343 = vcombine.high %v1335, %v1335
  %v1344 = vcombine.high %v1342, %v1342
  %v1345 = vcombine.high %v537, %v537
  %v1347 = vunpack.c.l.s4 1983009808
  %v1348 = vunpack.c.0.s8 %v1347
  %v1349 = vlaneseq
  %v1350 = vshrl.u32 %v1349, 7
  %v1351 = vsub.s32 %v1348, %v1350
  %v1352 = vrot.slane %v537, %v1351
  %v1354 = vunpack.c.l.s4 1983009808
  %v1355 = vunpack.c.0.s8 %v1354
  %v1356 = vlaneseq
  %v1357 = vshrl.u32 %v1356, 7
  %v1358 = vsub.s32 %v1355, %v1357
  %v1359 = vrot.slane %v1345, %v1358
  %v1360 = vcombine.high %v1352, %v1352
  %v1361 = vcombine.high %v1359, %v1359
  %v1362 = vcombine.high %v542, %v542
  %v1364 = vunpack.c.l.s4 1983009808
  %v1365 = vunpack.c.0.s8 %v1364
  %v1366 = vlaneseq
  %v1367 = vshrl.u32 %v1366, 7
  %v1368 = vsub.s32 %v1365, %v1367
  %v1369 = vrot.slane %v542, %v1368
  %v1371 = vunpack.c.l.s4 1983009808
  %v1372 = vunpack.c.0.s8 %v1371
  %v1373 = vlaneseq
  %v1374 = vshrl.u32 %v1373, 7
  %v1375 = vsub.s32 %v1372, %v1374
  %v1376 = vrot.slane %v1362, %v1375
  %v1377 = vcombine.high %v1369, %v1369
  %v1378 = vcombine.high %v1376, %v1376
  %v1379 = vcombine.high %v547, %v547
  %v1381 = vunpack.c.l.s4 1983009808
  %v1382 = vunpack.c.0.s8 %v1381
  %v1383 = vlaneseq
  %v1384 = vshrl.u32 %v1383, 7
  %v1385 = vsub.s32 %v1382, %v1384
  %v1386 = vrot.slane %v547, %v1385
  %v1388 = vunpack.c.l.s4 1983009808
  %v1389 = vunpack.c.0.s8 %v1388
  %v1390 = vlaneseq
  %v1391 = vshrl.u32 %v1390, 7
  %v1392 = vsub.s32 %v1389, %v1391
  %v1393 = vrot.slane %v1379, %v1392
  %v1394 = vcombine.high %v1386, %v1386
  %v1395 = vcombine.high %v1393, %v1393
  %v1396 = vcombine.high %v552, %v552
  %v1398 = vunpack.c.l.s4 1983009808
  %v1399 = vunpack.c.0.s8 %v1398
  %v1400 = vlaneseq
  %v1401 = vshrl.u32 %v1400, 7
  %v1402 = vsub.s32 %v1399, %v1401
  %v1403 = vrot.slane %v552, %v1402
  %v1405 = vunpack.c.l.s4 1983009808
  %v1406 = vunpack.c.0.s8 %v1405
  %v1407 = vlaneseq
  %v1408 = vshrl.u32 %v1407, 7
  %v1409 = vsub.s32 %v1406, %v1408
  %v1410 = vrot.slane %v1396, %v1409
  %v1411 = vcombine.high %v1403, %v1403
  %v1412 = vcombine.high %v1410, %v1410
  %v1413 = vcombine.high %v557, %v557
  %v1415 = vunpack.c.l.s4 1983009808
  %v1416 = vunpack.c.0.s8 %v1415
  %v1417 = vlaneseq
  %v1418 = vshrl.u32 %v1417, 7
  %v1419 = vsub.s32 %v1416, %v1418
  %v1420 = vrot.slane %v557, %v1419
  %v1422 = vunpack.c.l.s4 1983009808
  %v1423 = vunpack.c.0.s8 %v1422
  %v1424 = vlaneseq
  %v1425 = vshrl.u32 %v1424, 7
  %v1426 = vsub.s32 %v1423, %v1425
  %v1427 = vrot.slane %v1413, %v1426
  %v1428 = vcombine.high %v1420, %v1420
  %v1429 = vcombine.high %v1427, %v1427
  %v1430 = vcombine.high %v562, %v562
  %v1432 = vunpack.c.l.s4 1983009808
  %v1433 = vunpack.c.0.s8 %v1432
  %v1434 = vlaneseq
  %v1435 = vshrl.u32 %v1434, 7
  %v1436 = vsub.s32 %v1433, %v1435
  %v1437 = vrot.slane %v562, %v1436
  %v1439 = vunpack.c.l.s4 1983009808
  %v1440 = vunpack.c.0.s8 %v1439
  %v1441 = vlaneseq
  %v1442 = vshrl.u32 %v1441, 7
  %v1443 = vsub.s32 %v1440, %v1442
  %v1444 = vrot.slane %v1430, %v1443
  %v1445 = vcombine.high %v1437, %v1437
  %v1446 = vcombine.high %v1444, %v1444
  %vm1643 = vcmask 74752
  %v1644 = vsel %vm1643, %v621, -inf
  %v1645 = vrot.slane %v1644, 4
  %v1646 = vmax.f32 %v1644, %v1645
  %v1647 = vrot.slane %v1646, 2
  %v1648 = vmax.f32 %v1646, %v1647
  %v1649 = vrot.slane %v1648, 1
  %v1650 = vmax.f32 %v1648, %v1649
  %v1651 = vsel %vm1643, %v629, -inf
  %v1652 = vrot.slane %v1651, 4
  %v1653 = vmax.f32 %v1651, %v1652
  %v1654 = vrot.slane %v1653, 2
  %v1655 = vmax.f32 %v1653, %v1654
  %v1656 = vrot.slane %v1655, 1
  %v1657 = vmax.f32 %v1655, %v1656
  %v1658 = vsel %vm1643, %v628, -inf
  %v1659 = vrot.slane %v1658, 4
  %v1660 = vmax.f32 %v1658, %v1659
  %v1661 = vrot.slane %v1660, 2
  %v1662 = vmax.f32 %v1660, %v1661
  %v1663 = vrot.slane %v1662, 1
  %v1664 = vmax.f32 %v1662, %v1663
  %v1665 = vsel %vm1643, %v630, -inf
  %v1666 = vrot.slane %v1665, 4
  %v1667 = vmax.f32 %v1665, %v1666
  %v1668 = vrot.slane %v1667, 2
  %v1669 = vmax.f32 %v1667, %v1668
  %v1670 = vrot.slane %v1669, 1
  %v1671 = vmax.f32 %v1669, %v1670
  %v1672 = vsel %vm1643, %v638, -inf
  %v1673 = vrot.slane %v1672, 4
  %v1674 = vmax.f32 %v1672, %v1673
  %v1675 = vrot.slane %v1674, 2
  %v1676 = vmax.f32 %v1674, %v1675
  %v1677 = vrot.slane %v1676, 1
  %v1678 = vmax.f32 %v1676, %v1677
  %v1679 = vsel %vm1643, %v646, -inf
  %v1680 = vrot.slane %v1679, 4
  %v1681 = vmax.f32 %v1679, %v1680
  %v1682 = vrot.slane %v1681, 2
  %v1683 = vmax.f32 %v1681, %v1682
  %v1684 = vrot.slane %v1683, 1
  %v1685 = vmax.f32 %v1683, %v1684
  %v1686 = vsel %vm1643, %v645, -inf
  %v1687 = vrot.slane %v1686, 4
  %v1688 = vmax.f32 %v1686, %v1687
  %v1689 = vrot.slane %v1688, 2
  %v1690 = vmax.f32 %v1688, %v1689
  %v1691 = vrot.slane %v1690, 1
  %v1692 = vmax.f32 %v1690, %v1691
  %v1693 = vsel %vm1643, %v647, -inf
  %v1694 = vrot.slane %v1693, 4
  %v1695 = vmax.f32 %v1693, %v1694
  %v1696 = vrot.slane %v1695, 2
  %v1697 = vmax.f32 %v1695, %v1696
  %v1698 = vrot.slane %v1697, 1
  %v1699 = vmax.f32 %v1697, %v1698
  %v1700 = vsel %vm1643, %v655, -inf
  %v1701 = vrot.slane %v1700, 4
  %v1702 = vmax.f32 %v1700, %v1701
  %v1703 = vrot.slane %v1702, 2
  %v1704 = vmax.f32 %v1702, %v1703
  %v1705 = vrot.slane %v1704, 1
  %v1706 = vmax.f32 %v1704, %v1705
  %v1707 = vsel %vm1643, %v663, -inf
  %v1708 = vrot.slane %v1707, 4
  %v1709 = vmax.f32 %v1707, %v1708
  %v1710 = vrot.slane %v1709, 2
  %v1711 = vmax.f32 %v1709, %v1710
  %v1712 = vrot.slane %v1711, 1
  %v1713 = vmax.f32 %v1711, %v1712
  %v1714 = vsel %vm1643, %v662, -inf
  %v1715 = vrot.slane %v1714, 4
  %v1716 = vmax.f32 %v1714, %v1715
  %v1717 = vrot.slane %v1716, 2
  %v1718 = vmax.f32 %v1716, %v1717
  %v1719 = vrot.slane %v1718, 1
  %v1720 = vmax.f32 %v1718, %v1719
  %v1721 = vsel %vm1643, %v664, -inf
  %v1722 = vrot.slane %v1721, 4
  %v1723 = vmax.f32 %v1721, %v1722
  %v1724 = vrot.slane %v1723, 2
  %v1725 = vmax.f32 %v1723, %v1724
  %v1726 = vrot.slane %v1725, 1
  %v1727 = vmax.f32 %v1725, %v1726
  %v1728 = vsel %vm1643, %v672, -inf
  %v1729 = vrot.slane %v1728, 4
  %v1730 = vmax.f32 %v1728, %v1729
  %v1731 = vrot.slane %v1730, 2
  %v1732 = vmax.f32 %v1730, %v1731
  %v1733 = vrot.slane %v1732, 1
  %v1734 = vmax.f32 %v1732, %v1733
  %v1735 = vsel %vm1643, %v680, -inf
  %v1736 = vrot.slane %v1735, 4
  %v1737 = vmax.f32 %v1735, %v1736
  %v1738 = vrot.slane %v1737, 2
  %v1739 = vmax.f32 %v1737, %v1738
  %v1740 = vrot.slane %v1739, 1
  %v1741 = vmax.f32 %v1739, %v1740
  %v1742 = vsel %vm1643, %v679, -inf
  %v1743 = vrot.slane %v1742, 4
  %v1744 = vmax.f32 %v1742, %v1743
  %v1745 = vrot.slane %v1744, 2
  %v1746 = vmax.f32 %v1744, %v1745
  %v1747 = vrot.slane %v1746, 1
  %v1748 = vmax.f32 %v1746, %v1747
  %v1749 = vsel %vm1643, %v681, -inf
  %v1750 = vrot.slane %v1749, 4
  %v1751 = vmax.f32 %v1749, %v1750
  %v1752 = vrot.slane %v1751, 2
  %v1753 = vmax.f32 %v1751, %v1752
  %v1754 = vrot.slane %v1753, 1
  %v1755 = vmax.f32 %v1753, %v1754
  %v1756 = vsel %vm1643, %v689, -inf
  %v1757 = vrot.slane %v1756, 4
  %v1758 = vmax.f32 %v1756, %v1757
  %v1759 = vrot.slane %v1758, 2
  %v1760 = vmax.f32 %v1758, %v1759
  %v1761 = vrot.slane %v1760, 1
  %v1762 = vmax.f32 %v1760, %v1761
  %v1763 = vsel %vm1643, %v697, -inf
  %v1764 = vrot.slane %v1763, 4
  %v1765 = vmax.f32 %v1763, %v1764
  %v1766 = vrot.slane %v1765, 2
  %v1767 = vmax.f32 %v1765, %v1766
  %v1768 = vrot.slane %v1767, 1
  %v1769 = vmax.f32 %v1767, %v1768
  %v1770 = vsel %vm1643, %v696, -inf
  %v1771 = vrot.slane %v1770, 4
  %v1772 = vmax.f32 %v1770, %v1771
  %v1773 = vrot.slane %v1772, 2
  %v1774 = vmax.f32 %v1772, %v1773
  %v1775 = vrot.slane %v1774, 1
  %v1776 = vmax.f32 %v1774, %v1775
  %v1777 = vsel %vm1643, %v698, -inf
  %v1778 = vrot.slane %v1777, 4
  %v1779 = vmax.f32 %v1777, %v1778
  %v1780 = vrot.slane %v1779, 2
  %v1781 = vmax.f32 %v1779, %v1780
  %v1782 = vrot.slane %v1781, 1
  %v1783 = vmax.f32 %v1781, %v1782
  %v1784 = vsel %vm1643, %v706, -inf
  %v1785 = vrot.slane %v1784, 4
  %v1786 = vmax.f32 %v1784, %v1785
  %v1787 = vrot.slane %v1786, 2
  %v1788 = vmax.f32 %v1786, %v1787
  %v1789 = vrot.slane %v1788, 1
  %v1790 = vmax.f32 %v1788, %v1789
  %v1791 = vsel %vm1643, %v714, -inf
  %v1792 = vrot.slane %v1791, 4
  %v1793 = vmax.f32 %v1791, %v1792
  %v1794 = vrot.slane %v1793, 2
  %v1795 = vmax.f32 %v1793, %v1794
  %v1796 = vrot.slane %v1795, 1
  %v1797 = vmax.f32 %v1795, %v1796
  %v1798 = vsel %vm1643, %v713, -inf
  %v1799 = vrot.slane %v1798, 4
  %v1800 = vmax.f32 %v1798, %v1799
  %v1801 = vrot.slane %v1800, 2
  %v1802 = vmax.f32 %v1800, %v1801
  %v1803 = vrot.slane %v1802, 1
  %v1804 = vmax.f32 %v1802, %v1803
  %v1805 = vsel %vm1643, %v715, -inf
  %v1806 = vrot.slane %v1805, 4
  %v1807 = vmax.f32 %v1805, %v1806
  %v1808 = vrot.slane %v1807, 2
  %v1809 = vmax.f32 %v1807, %v1808
  %v1810 = vrot.slane %v1809, 1
  %v1811 = vmax.f32 %v1809, %v1810
  %v1812 = vsel %vm1643, %v723, -inf
  %v1813 = vrot.slane %v1812, 4
  %v1814 = vmax.f32 %v1812, %v1813
  %v1815 = vrot.slane %v1814, 2
  %v1816 = vmax.f32 %v1814, %v1815
  %v1817 = vrot.slane %v1816, 1
  %v1818 = vmax.f32 %v1816, %v1817
  %v1819 = vsel %vm1643, %v731, -inf
  %v1820 = vrot.slane %v1819, 4
  %v1821 = vmax.f32 %v1819, %v1820
  %v1822 = vrot.slane %v1821, 2
  %v1823 = vmax.f32 %v1821, %v1822
  %v1824 = vrot.slane %v1823, 1
  %v1825 = vmax.f32 %v1823, %v1824
  %v1826 = vsel %vm1643, %v730, -inf
  %v1827 = vrot.slane %v1826, 4
  %v1828 = vmax.f32 %v1826, %v1827
  %v1829 = vrot.slane %v1828, 2
  %v1830 = vmax.f32 %v1828, %v1829
  %v1831 = vrot.slane %v1830, 1
  %v1832 = vmax.f32 %v1830, %v1831
  %v1833 = vsel %vm1643, %v732, -inf
  %v1834 = vrot.slane %v1833, 4
  %v1835 = vmax.f32 %v1833, %v1834
  %v1836 = vrot.slane %v1835, 2
  %v1837 = vmax.f32 %v1835, %v1836
  %v1838 = vrot.slane %v1837, 1
  %v1839 = vmax.f32 %v1837, %v1838
  %v1840 = vsel %vm1643, %v740, -inf
  %v1841 = vrot.slane %v1840, 4
  %v1842 = vmax.f32 %v1840, %v1841
  %v1843 = vrot.slane %v1842, 2
  %v1844 = vmax.f32 %v1842, %v1843
  %v1845 = vrot.slane %v1844, 1
  %v1846 = vmax.f32 %v1844, %v1845
  %v1847 = vsel %vm1643, %v748, -inf
  %v1848 = vrot.slane %v1847, 4
  %v1849 = vmax.f32 %v1847, %v1848
  %v1850 = vrot.slane %v1849, 2
  %v1851 = vmax.f32 %v1849, %v1850
  %v1852 = vrot.slane %v1851, 1
  %v1853 = vmax.f32 %v1851, %v1852
  %v1854 = vsel %vm1643, %v747, -inf
  %v1855 = vrot.slane %v1854, 4
  %v1856 = vmax.f32 %v1854, %v1855
  %v1857 = vrot.slane %v1856, 2
  %v1858 = vmax.f32 %v1856, %v1857
  %v1859 = vrot.slane %v1858, 1
  %v1860 = vmax.f32 %v1858, %v1859
  %v1861 = vsel %vm1643, %v749, -inf
  %v1862 = vrot.slane %v1861, 4
  %v1863 = vmax.f32 %v1861, %v1862
  %v1864 = vrot.slane %v1863, 2
  %v1865 = vmax.f32 %v1863, %v1864
  %v1866 = vrot.slane %v1865, 1
  %v1867 = vmax.f32 %v1865, %v1866
  %v1868 = vsel %vm1643, %v757, -inf
  %v1869 = vrot.slane %v1868, 4
  %v1870 = vmax.f32 %v1868, %v1869
  %v1871 = vrot.slane %v1870, 2
  %v1872 = vmax.f32 %v1870, %v1871
  %v1873 = vrot.slane %v1872, 1
  %v1874 = vmax.f32 %v1872, %v1873
  %v1875 = vsel %vm1643, %v765, -inf
  %v1876 = vrot.slane %v1875, 4
  %v1877 = vmax.f32 %v1875, %v1876
  %v1878 = vrot.slane %v1877, 2
  %v1879 = vmax.f32 %v1877, %v1878
  %v1880 = vrot.slane %v1879, 1
  %v1881 = vmax.f32 %v1879, %v1880
  %v1882 = vsel %vm1643, %v764, -inf
  %v1883 = vrot.slane %v1882, 4
  %v1884 = vmax.f32 %v1882, %v1883
  %v1885 = vrot.slane %v1884, 2
  %v1886 = vmax.f32 %v1884, %v1885
  %v1887 = vrot.slane %v1886, 1
  %v1888 = vmax.f32 %v1886, %v1887
  %v1889 = vsel %vm1643, %v766, -inf
  %v1890 = vrot.slane %v1889, 4
  %v1891 = vmax.f32 %v1889, %v1890
  %v1892 = vrot.slane %v1891, 2
  %v1893 = vmax.f32 %v1891, %v1892
  %v1894 = vrot.slane %v1893, 1
  %v1895 = vmax.f32 %v1893, %v1894
  %v1896 = vsel %vm1643, %v774, -inf
  %v1897 = vrot.slane %v1896, 4
  %v1898 = vmax.f32 %v1896, %v1897
  %v1899 = vrot.slane %v1898, 2
  %v1900 = vmax.f32 %v1898, %v1899
  %v1901 = vrot.slane %v1900, 1
  %v1902 = vmax.f32 %v1900, %v1901
  %v1903 = vsel %vm1643, %v782, -inf
  %v1904 = vrot.slane %v1903, 4
  %v1905 = vmax.f32 %v1903, %v1904
  %v1906 = vrot.slane %v1905, 2
  %v1907 = vmax.f32 %v1905, %v1906
  %v1908 = vrot.slane %v1907, 1
  %v1909 = vmax.f32 %v1907, %v1908
  %v1910 = vsel %vm1643, %v781, -inf
  %v1911 = vrot.slane %v1910, 4
  %v1912 = vmax.f32 %v1910, %v1911
  %v1913 = vrot.slane %v1912, 2
  %v1914 = vmax.f32 %v1912, %v1913
  %v1915 = vrot.slane %v1914, 1
  %v1916 = vmax.f32 %v1914, %v1915
  %v1917 = vsel %vm1643, %v783, -inf
  %v1918 = vrot.slane %v1917, 4
  %v1919 = vmax.f32 %v1917, %v1918
  %v1920 = vrot.slane %v1919, 2
  %v1921 = vmax.f32 %v1919, %v1920
  %v1922 = vrot.slane %v1921, 1
  %v1923 = vmax.f32 %v1921, %v1922
  %v1924 = vsel %vm1643, %v791, -inf
  %v1925 = vrot.slane %v1924, 4
  %v1926 = vmax.f32 %v1924, %v1925
  %v1927 = vrot.slane %v1926, 2
  %v1928 = vmax.f32 %v1926, %v1927
  %v1929 = vrot.slane %v1928, 1
  %v1930 = vmax.f32 %v1928, %v1929
  %v1931 = vsel %vm1643, %v799, -inf
  %v1932 = vrot.slane %v1931, 4
  %v1933 = vmax.f32 %v1931, %v1932
  %v1934 = vrot.slane %v1933, 2
  %v1935 = vmax.f32 %v1933, %v1934
  %v1936 = vrot.slane %v1935, 1
  %v1937 = vmax.f32 %v1935, %v1936
  %v1938 = vsel %vm1643, %v798, -inf
  %v1939 = vrot.slane %v1938, 4
  %v1940 = vmax.f32 %v1938, %v1939
  %v1941 = vrot.slane %v1940, 2
  %v1942 = vmax.f32 %v1940, %v1941
  %v1943 = vrot.slane %v1942, 1
  %v1944 = vmax.f32 %v1942, %v1943
  %v1945 = vsel %vm1643, %v800, -inf
  %v1946 = vrot.slane %v1945, 4
  %v1947 = vmax.f32 %v1945, %v1946
  %v1948 = vrot.slane %v1947, 2
  %v1949 = vmax.f32 %v1947, %v1948
  %v1950 = vrot.slane %v1949, 1
  %v1951 = vmax.f32 %v1949, %v1950
  %v1952 = vsel %vm1643, %v808, -inf
  %v1953 = vrot.slane %v1952, 4
  %v1954 = vmax.f32 %v1952, %v1953
  %v1955 = vrot.slane %v1954, 2
  %v1956 = vmax.f32 %v1954, %v1955
  %v1957 = vrot.slane %v1956, 1
  %v1958 = vmax.f32 %v1956, %v1957
  %v1959 = vsel %vm1643, %v816, -inf
  %v1960 = vrot.slane %v1959, 4
  %v1961 = vmax.f32 %v1959, %v1960
  %v1962 = vrot.slane %v1961, 2
  %v1963 = vmax.f32 %v1961, %v1962
  %v1964 = vrot.slane %v1963, 1
  %v1965 = vmax.f32 %v1963, %v1964
  %v1966 = vsel %vm1643, %v815, -inf
  %v1967 = vrot.slane %v1966, 4
  %v1968 = vmax.f32 %v1966, %v1967
  %v1969 = vrot.slane %v1968, 2
  %v1970 = vmax.f32 %v1968, %v1969
  %v1971 = vrot.slane %v1970, 1
  %v1972 = vmax.f32 %v1970, %v1971
  %v1973 = vsel %vm1643, %v817, -inf
  %v1974 = vrot.slane %v1973, 4
  %v1975 = vmax.f32 %v1973, %v1974
  %v1976 = vrot.slane %v1975, 2
  %v1977 = vmax.f32 %v1975, %v1976
  %v1978 = vrot.slane %v1977, 1
  %v1979 = vmax.f32 %v1977, %v1978
  %v1980 = vsel %vm1643, %v825, -inf
  %v1981 = vrot.slane %v1980, 4
  %v1982 = vmax.f32 %v1980, %v1981
  %v1983 = vrot.slane %v1982, 2
  %v1984 = vmax.f32 %v1982, %v1983
  %v1985 = vrot.slane %v1984, 1
  %v1986 = vmax.f32 %v1984, %v1985
  %v1987 = vsel %vm1643, %v833, -inf
  %v1988 = vrot.slane %v1987, 4
  %v1989 = vmax.f32 %v1987, %v1988
  %v1990 = vrot.slane %v1989, 2
  %v1991 = vmax.f32 %v1989, %v1990
  %v1992 = vrot.slane %v1991, 1
  %v1993 = vmax.f32 %v1991, %v1992
  %v1994 = vsel %vm1643, %v832, -inf
  %v1995 = vrot.slane %v1994, 4
  %v1996 = vmax.f32 %v1994, %v1995
  %v1997 = vrot.slane %v1996, 2
  %v1998 = vmax.f32 %v1996, %v1997
  %v1999 = vrot.slane %v1998, 1
  %v2000 = vmax.f32 %v1998, %v1999
  %v2001 = vsel %vm1643, %v834, -inf
  %v2002 = vrot.slane %v2001, 4
  %v2003 = vmax.f32 %v2001, %v2002
  %v2004 = vrot.slane %v2003, 2
  %v2005 = vmax.f32 %v2003, %v2004
  %v2006 = vrot.slane %v2005, 1
  %v2007 = vmax.f32 %v2005, %v2006
  %v2008 = vsel %vm1643, %v842, -inf
  %v2009 = vrot.slane %v2008, 4
  %v2010 = vmax.f32 %v2008, %v2009
  %v2011 = vrot.slane %v2010, 2
  %v2012 = vmax.f32 %v2010, %v2011
  %v2013 = vrot.slane %v2012, 1
  %v2014 = vmax.f32 %v2012, %v2013
  %v2015 = vsel %vm1643, %v850, -inf
  %v2016 = vrot.slane %v2015, 4
  %v2017 = vmax.f32 %v2015, %v2016
  %v2018 = vrot.slane %v2017, 2
  %v2019 = vmax.f32 %v2017, %v2018
  %v2020 = vrot.slane %v2019, 1
  %v2021 = vmax.f32 %v2019, %v2020
  %v2022 = vsel %vm1643, %v849, -inf
  %v2023 = vrot.slane %v2022, 4
  %v2024 = vmax.f32 %v2022, %v2023
  %v2025 = vrot.slane %v2024, 2
  %v2026 = vmax.f32 %v2024, %v2025
  %v2027 = vrot.slane %v2026, 1
  %v2028 = vmax.f32 %v2026, %v2027
  %v2029 = vsel %vm1643, %v851, -inf
  %v2030 = vrot.slane %v2029, 4
  %v2031 = vmax.f32 %v2029, %v2030
  %v2032 = vrot.slane %v2031, 2
  %v2033 = vmax.f32 %v2031, %v2032
  %v2034 = vrot.slane %v2033, 1
  %v2035 = vmax.f32 %v2033, %v2034
  %v2036 = vsel %vm1643, %v859, -inf
  %v2037 = vrot.slane %v2036, 4
  %v2038 = vmax.f32 %v2036, %v2037
  %v2039 = vrot.slane %v2038, 2
  %v2040 = vmax.f32 %v2038, %v2039
  %v2041 = vrot.slane %v2040, 1
  %v2042 = vmax.f32 %v2040, %v2041
  %v2043 = vsel %vm1643, %v867, -inf
  %v2044 = vrot.slane %v2043, 4
  %v2045 = vmax.f32 %v2043, %v2044
  %v2046 = vrot.slane %v2045, 2
  %v2047 = vmax.f32 %v2045, %v2046
  %v2048 = vrot.slane %v2047, 1
  %v2049 = vmax.f32 %v2047, %v2048
  %v2050 = vsel %vm1643, %v866, -inf
  %v2051 = vrot.slane %v2050, 4
  %v2052 = vmax.f32 %v2050, %v2051
  %v2053 = vrot.slane %v2052, 2
  %v2054 = vmax.f32 %v2052, %v2053
  %v2055 = vrot.slane %v2054, 1
  %v2056 = vmax.f32 %v2054, %v2055
  %v2057 = vsel %vm1643, %v868, -inf
  %v2058 = vrot.slane %v2057, 4
  %v2059 = vmax.f32 %v2057, %v2058
  %v2060 = vrot.slane %v2059, 2
  %v2061 = vmax.f32 %v2059, %v2060
  %v2062 = vrot.slane %v2061, 1
  %v2063 = vmax.f32 %v2061, %v2062
  %v2064 = vsel %vm1643, %v876, -inf
  %v2065 = vrot.slane %v2064, 4
  %v2066 = vmax.f32 %v2064, %v2065
  %v2067 = vrot.slane %v2066, 2
  %v2068 = vmax.f32 %v2066, %v2067
  %v2069 = vrot.slane %v2068, 1
  %v2070 = vmax.f32 %v2068, %v2069
  %v2071 = vsel %vm1643, %v884, -inf
  %v2072 = vrot.slane %v2071, 4
  %v2073 = vmax.f32 %v2071, %v2072
  %v2074 = vrot.slane %v2073, 2
  %v2075 = vmax.f32 %v2073, %v2074
  %v2076 = vrot.slane %v2075, 1
  %v2077 = vmax.f32 %v2075, %v2076
  %v2078 = vsel %vm1643, %v883, -inf
  %v2079 = vrot.slane %v2078, 4
  %v2080 = vmax.f32 %v2078, %v2079
  %v2081 = vrot.slane %v2080, 2
  %v2082 = vmax.f32 %v2080, %v2081
  %v2083 = vrot.slane %v2082, 1
  %v2084 = vmax.f32 %v2082, %v2083
  %v2085 = vsel %vm1643, %v885, -inf
  %v2086 = vrot.slane %v2085, 4
  %v2087 = vmax.f32 %v2085, %v2086
  %v2088 = vrot.slane %v2087, 2
  %v2089 = vmax.f32 %v2087, %v2088
  %v2090 = vrot.slane %v2089, 1
  %v2091 = vmax.f32 %v2089, %v2090
  %v2092 = vsel %vm1643, %v893, -inf
  %v2093 = vrot.slane %v2092, 4
  %v2094 = vmax.f32 %v2092, %v2093
  %v2095 = vrot.slane %v2094, 2
  %v2096 = vmax.f32 %v2094, %v2095
  %v2097 = vrot.slane %v2096, 1
  %v2098 = vmax.f32 %v2096, %v2097
  %v2099 = vsel %vm1643, %v901, -inf
  %v2100 = vrot.slane %v2099, 4
  %v2101 = vmax.f32 %v2099, %v2100
  %v2102 = vrot.slane %v2101, 2
  %v2103 = vmax.f32 %v2101, %v2102
  %v2104 = vrot.slane %v2103, 1
  %v2105 = vmax.f32 %v2103, %v2104
  %v2106 = vsel %vm1643, %v900, -inf
  %v2107 = vrot.slane %v2106, 4
  %v2108 = vmax.f32 %v2106, %v2107
  %v2109 = vrot.slane %v2108, 2
  %v2110 = vmax.f32 %v2108, %v2109
  %v2111 = vrot.slane %v2110, 1
  %v2112 = vmax.f32 %v2110, %v2111
  %v2113 = vsel %vm1643, %v902, -inf
  %v2114 = vrot.slane %v2113, 4
  %v2115 = vmax.f32 %v2113, %v2114
  %v2116 = vrot.slane %v2115, 2
  %v2117 = vmax.f32 %v2115, %v2116
  %v2118 = vrot.slane %v2117, 1
  %v2119 = vmax.f32 %v2117, %v2118
  %v2120 = vsel %vm1643, %v910, -inf
  %v2121 = vrot.slane %v2120, 4
  %v2122 = vmax.f32 %v2120, %v2121
  %v2123 = vrot.slane %v2122, 2
  %v2124 = vmax.f32 %v2122, %v2123
  %v2125 = vrot.slane %v2124, 1
  %v2126 = vmax.f32 %v2124, %v2125
  %v2127 = vsel %vm1643, %v918, -inf
  %v2128 = vrot.slane %v2127, 4
  %v2129 = vmax.f32 %v2127, %v2128
  %v2130 = vrot.slane %v2129, 2
  %v2131 = vmax.f32 %v2129, %v2130
  %v2132 = vrot.slane %v2131, 1
  %v2133 = vmax.f32 %v2131, %v2132
  %v2134 = vsel %vm1643, %v917, -inf
  %v2135 = vrot.slane %v2134, 4
  %v2136 = vmax.f32 %v2134, %v2135
  %v2137 = vrot.slane %v2136, 2
  %v2138 = vmax.f32 %v2136, %v2137
  %v2139 = vrot.slane %v2138, 1
  %v2140 = vmax.f32 %v2138, %v2139
  %v2141 = vsel %vm1643, %v919, -inf
  %v2142 = vrot.slane %v2141, 4
  %v2143 = vmax.f32 %v2141, %v2142
  %v2144 = vrot.slane %v2143, 2
  %v2145 = vmax.f32 %v2143, %v2144
  %v2146 = vrot.slane %v2145, 1
  %v2147 = vmax.f32 %v2145, %v2146
  %v2148 = vsel %vm1643, %v927, -inf
  %v2149 = vrot.slane %v2148, 4
  %v2150 = vmax.f32 %v2148, %v2149
  %v2151 = vrot.slane %v2150, 2
  %v2152 = vmax.f32 %v2150, %v2151
  %v2153 = vrot.slane %v2152, 1
  %v2154 = vmax.f32 %v2152, %v2153
  %v2155 = vsel %vm1643, %v935, -inf
  %v2156 = vrot.slane %v2155, 4
  %v2157 = vmax.f32 %v2155, %v2156
  %v2158 = vrot.slane %v2157, 2
  %v2159 = vmax.f32 %v2157, %v2158
  %v2160 = vrot.slane %v2159, 1
  %v2161 = vmax.f32 %v2159, %v2160
  %v2162 = vsel %vm1643, %v934, -inf
  %v2163 = vrot.slane %v2162, 4
  %v2164 = vmax.f32 %v2162, %v2163
  %v2165 = vrot.slane %v2164, 2
  %v2166 = vmax.f32 %v2164, %v2165
  %v2167 = vrot.slane %v2166, 1
  %v2168 = vmax.f32 %v2166, %v2167
  %v2169 = vsel %vm1643, %v936, -inf
  %v2170 = vrot.slane %v2169, 4
  %v2171 = vmax.f32 %v2169, %v2170
  %v2172 = vrot.slane %v2171, 2
  %v2173 = vmax.f32 %v2171, %v2172
  %v2174 = vrot.slane %v2173, 1
  %v2175 = vmax.f32 %v2173, %v2174
  %v2176 = vsel %vm1643, %v944, -inf
  %v2177 = vrot.slane %v2176, 4
  %v2178 = vmax.f32 %v2176, %v2177
  %v2179 = vrot.slane %v2178, 2
  %v2180 = vmax.f32 %v2178, %v2179
  %v2181 = vrot.slane %v2180, 1
  %v2182 = vmax.f32 %v2180, %v2181
  %v2183 = vsel %vm1643, %v952, -inf
  %v2184 = vrot.slane %v2183, 4
  %v2185 = vmax.f32 %v2183, %v2184
  %v2186 = vrot.slane %v2185, 2
  %v2187 = vmax.f32 %v2185, %v2186
  %v2188 = vrot.slane %v2187, 1
  %v2189 = vmax.f32 %v2187, %v2188
  %v2190 = vsel %vm1643, %v951, -inf
  %v2191 = vrot.slane %v2190, 4
  %v2192 = vmax.f32 %v2190, %v2191
  %v2193 = vrot.slane %v2192, 2
  %v2194 = vmax.f32 %v2192, %v2193
  %v2195 = vrot.slane %v2194, 1
  %v2196 = vmax.f32 %v2194, %v2195
  %v2197 = vsel %vm1643, %v953, -inf
  %v2198 = vrot.slane %v2197, 4
  %v2199 = vmax.f32 %v2197, %v2198
  %v2200 = vrot.slane %v2199, 2
  %v2201 = vmax.f32 %v2199, %v2200
  %v2202 = vrot.slane %v2201, 1
  %v2203 = vmax.f32 %v2201, %v2202
  %v2204 = vsel %vm1643, %v961, -inf
  %v2205 = vrot.slane %v2204, 4
  %v2206 = vmax.f32 %v2204, %v2205
  %v2207 = vrot.slane %v2206, 2
  %v2208 = vmax.f32 %v2206, %v2207
  %v2209 = vrot.slane %v2208, 1
  %v2210 = vmax.f32 %v2208, %v2209
  %v2211 = vsel %vm1643, %v969, -inf
  %v2212 = vrot.slane %v2211, 4
  %v2213 = vmax.f32 %v2211, %v2212
  %v2214 = vrot.slane %v2213, 2
  %v2215 = vmax.f32 %v2213, %v2214
  %v2216 = vrot.slane %v2215, 1
  %v2217 = vmax.f32 %v2215, %v2216
  %v2218 = vsel %vm1643, %v968, -inf
  %v2219 = vrot.slane %v2218, 4
  %v2220 = vmax.f32 %v2218, %v2219
  %v2221 = vrot.slane %v2220, 2
  %v2222 = vmax.f32 %v2220, %v2221
  %v2223 = vrot.slane %v2222, 1
  %v2224 = vmax.f32 %v2222, %v2223
  %v2225 = vsel %vm1643, %v970, -inf
  %v2226 = vrot.slane %v2225, 4
  %v2227 = vmax.f32 %v2225, %v2226
  %v2228 = vrot.slane %v2227, 2
  %v2229 = vmax.f32 %v2227, %v2228
  %v2230 = vrot.slane %v2229, 1
  %v2231 = vmax.f32 %v2229, %v2230
  %v2232 = vsel %vm1643, %v978, -inf
  %v2233 = vrot.slane %v2232, 4
  %v2234 = vmax.f32 %v2232, %v2233
  %v2235 = vrot.slane %v2234, 2
  %v2236 = vmax.f32 %v2234, %v2235
  %v2237 = vrot.slane %v2236, 1
  %v2238 = vmax.f32 %v2236, %v2237
  %v2239 = vsel %vm1643, %v986, -inf
  %v2240 = vrot.slane %v2239, 4
  %v2241 = vmax.f32 %v2239, %v2240
  %v2242 = vrot.slane %v2241, 2
  %v2243 = vmax.f32 %v2241, %v2242
  %v2244 = vrot.slane %v2243, 1
  %v2245 = vmax.f32 %v2243, %v2244
  %v2246 = vsel %vm1643, %v985, -inf
  %v2247 = vrot.slane %v2246, 4
  %v2248 = vmax.f32 %v2246, %v2247
  %v2249 = vrot.slane %v2248, 2
  %v2250 = vmax.f32 %v2248, %v2249
  %v2251 = vrot.slane %v2250, 1
  %v2252 = vmax.f32 %v2250, %v2251
  %v2253 = vsel %vm1643, %v987, -inf
  %v2254 = vrot.slane %v2253, 4
  %v2255 = vmax.f32 %v2253, %v2254
  %v2256 = vrot.slane %v2255, 2
  %v2257 = vmax.f32 %v2255, %v2256
  %v2258 = vrot.slane %v2257, 1
  %v2259 = vmax.f32 %v2257, %v2258
  %v2260 = vsel %vm1643, %v995, -inf
  %v2261 = vrot.slane %v2260, 4
  %v2262 = vmax.f32 %v2260, %v2261
  %v2263 = vrot.slane %v2262, 2
  %v2264 = vmax.f32 %v2262, %v2263
  %v2265 = vrot.slane %v2264, 1
  %v2266 = vmax.f32 %v2264, %v2265
  %v2267 = vsel %vm1643, %v1003, -inf
  %v2268 = vrot.slane %v2267, 4
  %v2269 = vmax.f32 %v2267, %v2268
  %v2270 = vrot.slane %v2269, 2
  %v2271 = vmax.f32 %v2269, %v2270
  %v2272 = vrot.slane %v2271, 1
  %v2273 = vmax.f32 %v2271, %v2272
  %v2274 = vsel %vm1643, %v1002, -inf
  %v2275 = vrot.slane %v2274, 4
  %v2276 = vmax.f32 %v2274, %v2275
  %v2277 = vrot.slane %v2276, 2
  %v2278 = vmax.f32 %v2276, %v2277
  %v2279 = vrot.slane %v2278, 1
  %v2280 = vmax.f32 %v2278, %v2279
  %v2281 = vsel %vm1643, %v1004, -inf
  %v2282 = vrot.slane %v2281, 4
  %v2283 = vmax.f32 %v2281, %v2282
  %v2284 = vrot.slane %v2283, 2
  %v2285 = vmax.f32 %v2283, %v2284
  %v2286 = vrot.slane %v2285, 1
  %v2287 = vmax.f32 %v2285, %v2286
  %v2288 = vsel %vm1643, %v1012, -inf
  %v2289 = vrot.slane %v2288, 4
  %v2290 = vmax.f32 %v2288, %v2289
  %v2291 = vrot.slane %v2290, 2
  %v2292 = vmax.f32 %v2290, %v2291
  %v2293 = vrot.slane %v2292, 1
  %v2294 = vmax.f32 %v2292, %v2293
  %v2295 = vsel %vm1643, %v1020, -inf
  %v2296 = vrot.slane %v2295, 4
  %v2297 = vmax.f32 %v2295, %v2296
  %v2298 = vrot.slane %v2297, 2
  %v2299 = vmax.f32 %v2297, %v2298
  %v2300 = vrot.slane %v2299, 1
  %v2301 = vmax.f32 %v2299, %v2300
  %v2302 = vsel %vm1643, %v1019, -inf
  %v2303 = vrot.slane %v2302, 4
  %v2304 = vmax.f32 %v2302, %v2303
  %v2305 = vrot.slane %v2304, 2
  %v2306 = vmax.f32 %v2304, %v2305
  %v2307 = vrot.slane %v2306, 1
  %v2308 = vmax.f32 %v2306, %v2307
  %v2309 = vsel %vm1643, %v1021, -inf
  %v2310 = vrot.slane %v2309, 4
  %v2311 = vmax.f32 %v2309, %v2310
  %v2312 = vrot.slane %v2311, 2
  %v2313 = vmax.f32 %v2311, %v2312
  %v2314 = vrot.slane %v2313, 1
  %v2315 = vmax.f32 %v2313, %v2314
  %v2316 = vsel %vm1643, %v1029, -inf
  %v2317 = vrot.slane %v2316, 4
  %v2318 = vmax.f32 %v2316, %v2317
  %v2319 = vrot.slane %v2318, 2
  %v2320 = vmax.f32 %v2318, %v2319
  %v2321 = vrot.slane %v2320, 1
  %v2322 = vmax.f32 %v2320, %v2321
  %v2323 = vsel %vm1643, %v1037, -inf
  %v2324 = vrot.slane %v2323, 4
  %v2325 = vmax.f32 %v2323, %v2324
  %v2326 = vrot.slane %v2325, 2
  %v2327 = vmax.f32 %v2325, %v2326
  %v2328 = vrot.slane %v2327, 1
  %v2329 = vmax.f32 %v2327, %v2328
  %v2330 = vsel %vm1643, %v1036, -inf
  %v2331 = vrot.slane %v2330, 4
  %v2332 = vmax.f32 %v2330, %v2331
  %v2333 = vrot.slane %v2332, 2
  %v2334 = vmax.f32 %v2332, %v2333
  %v2335 = vrot.slane %v2334, 1
  %v2336 = vmax.f32 %v2334, %v2335
  %v2337 = vsel %vm1643, %v1038, -inf
  %v2338 = vrot.slane %v2337, 4
  %v2339 = vmax.f32 %v2337, %v2338
  %v2340 = vrot.slane %v2339, 2
  %v2341 = vmax.f32 %v2339, %v2340
  %v2342 = vrot.slane %v2341, 1
  %v2343 = vmax.f32 %v2341, %v2342
  %v2344 = vsel %vm1643, %v1046, -inf
  %v2345 = vrot.slane %v2344, 4
  %v2346 = vmax.f32 %v2344, %v2345
  %v2347 = vrot.slane %v2346, 2
  %v2348 = vmax.f32 %v2346, %v2347
  %v2349 = vrot.slane %v2348, 1
  %v2350 = vmax.f32 %v2348, %v2349
  %v2351 = vsel %vm1643, %v1054, -inf
  %v2352 = vrot.slane %v2351, 4
  %v2353 = vmax.f32 %v2351, %v2352
  %v2354 = vrot.slane %v2353, 2
  %v2355 = vmax.f32 %v2353, %v2354
  %v2356 = vrot.slane %v2355, 1
  %v2357 = vmax.f32 %v2355, %v2356
  %v2358 = vsel %vm1643, %v1053, -inf
  %v2359 = vrot.slane %v2358, 4
  %v2360 = vmax.f32 %v2358, %v2359
  %v2361 = vrot.slane %v2360, 2
  %v2362 = vmax.f32 %v2360, %v2361
  %v2363 = vrot.slane %v2362, 1
  %v2364 = vmax.f32 %v2362, %v2363
  %v2365 = vsel %vm1643, %v1055, -inf
  %v2366 = vrot.slane %v2365, 4
  %v2367 = vmax.f32 %v2365, %v2366
  %v2368 = vrot.slane %v2367, 2
  %v2369 = vmax.f32 %v2367, %v2368
  %v2370 = vrot.slane %v2369, 1
  %v2371 = vmax.f32 %v2369, %v2370
  %v2372 = vsel %vm1643, %v1063, -inf
  %v2373 = vrot.slane %v2372, 4
  %v2374 = vmax.f32 %v2372, %v2373
  %v2375 = vrot.slane %v2374, 2
  %v2376 = vmax.f32 %v2374, %v2375
  %v2377 = vrot.slane %v2376, 1
  %v2378 = vmax.f32 %v2376, %v2377
  %v2379 = vsel %vm1643, %v1071, -inf
  %v2380 = vrot.slane %v2379, 4
  %v2381 = vmax.f32 %v2379, %v2380
  %v2382 = vrot.slane %v2381, 2
  %v2383 = vmax.f32 %v2381, %v2382
  %v2384 = vrot.slane %v2383, 1
  %v2385 = vmax.f32 %v2383, %v2384
  %v2386 = vsel %vm1643, %v1070, -inf
  %v2387 = vrot.slane %v2386, 4
  %v2388 = vmax.f32 %v2386, %v2387
  %v2389 = vrot.slane %v2388, 2
  %v2390 = vmax.f32 %v2388, %v2389
  %v2391 = vrot.slane %v2390, 1
  %v2392 = vmax.f32 %v2390, %v2391
  %v2393 = vsel %vm1643, %v1072, -inf
  %v2394 = vrot.slane %v2393, 4
  %v2395 = vmax.f32 %v2393, %v2394
  %v2396 = vrot.slane %v2395, 2
  %v2397 = vmax.f32 %v2395, %v2396
  %v2398 = vrot.slane %v2397, 1
  %v2399 = vmax.f32 %v2397, %v2398
  %v2400 = vsel %vm1643, %v1080, -inf
  %v2401 = vrot.slane %v2400, 4
  %v2402 = vmax.f32 %v2400, %v2401
  %v2403 = vrot.slane %v2402, 2
  %v2404 = vmax.f32 %v2402, %v2403
  %v2405 = vrot.slane %v2404, 1
  %v2406 = vmax.f32 %v2404, %v2405
  %v2407 = vsel %vm1643, %v1088, -inf
  %v2408 = vrot.slane %v2407, 4
  %v2409 = vmax.f32 %v2407, %v2408
  %v2410 = vrot.slane %v2409, 2
  %v2411 = vmax.f32 %v2409, %v2410
  %v2412 = vrot.slane %v2411, 1
  %v2413 = vmax.f32 %v2411, %v2412
  %v2414 = vsel %vm1643, %v1087, -inf
  %v2415 = vrot.slane %v2414, 4
  %v2416 = vmax.f32 %v2414, %v2415
  %v2417 = vrot.slane %v2416, 2
  %v2418 = vmax.f32 %v2416, %v2417
  %v2419 = vrot.slane %v2418, 1
  %v2420 = vmax.f32 %v2418, %v2419
  %v2421 = vsel %vm1643, %v1089, -inf
  %v2422 = vrot.slane %v2421, 4
  %v2423 = vmax.f32 %v2421, %v2422
  %v2424 = vrot.slane %v2423, 2
  %v2425 = vmax.f32 %v2423, %v2424
  %v2426 = vrot.slane %v2425, 1
  %v2427 = vmax.f32 %v2425, %v2426
  %v2428 = vsel %vm1643, %v1097, -inf
  %v2429 = vrot.slane %v2428, 4
  %v2430 = vmax.f32 %v2428, %v2429
  %v2431 = vrot.slane %v2430, 2
  %v2432 = vmax.f32 %v2430, %v2431
  %v2433 = vrot.slane %v2432, 1
  %v2434 = vmax.f32 %v2432, %v2433
  %v2435 = vsel %vm1643, %v1105, -inf
  %v2436 = vrot.slane %v2435, 4
  %v2437 = vmax.f32 %v2435, %v2436
  %v2438 = vrot.slane %v2437, 2
  %v2439 = vmax.f32 %v2437, %v2438
  %v2440 = vrot.slane %v2439, 1
  %v2441 = vmax.f32 %v2439, %v2440
  %v2442 = vsel %vm1643, %v1104, -inf
  %v2443 = vrot.slane %v2442, 4
  %v2444 = vmax.f32 %v2442, %v2443
  %v2445 = vrot.slane %v2444, 2
  %v2446 = vmax.f32 %v2444, %v2445
  %v2447 = vrot.slane %v2446, 1
  %v2448 = vmax.f32 %v2446, %v2447
  %v2449 = vsel %vm1643, %v1106, -inf
  %v2450 = vrot.slane %v2449, 4
  %v2451 = vmax.f32 %v2449, %v2450
  %v2452 = vrot.slane %v2451, 2
  %v2453 = vmax.f32 %v2451, %v2452
  %v2454 = vrot.slane %v2453, 1
  %v2455 = vmax.f32 %v2453, %v2454
  %v2456 = vsel %vm1643, %v1114, -inf
  %v2457 = vrot.slane %v2456, 4
  %v2458 = vmax.f32 %v2456, %v2457
  %v2459 = vrot.slane %v2458, 2
  %v2460 = vmax.f32 %v2458, %v2459
  %v2461 = vrot.slane %v2460, 1
  %v2462 = vmax.f32 %v2460, %v2461
  %v2463 = vsel %vm1643, %v1122, -inf
  %v2464 = vrot.slane %v2463, 4
  %v2465 = vmax.f32 %v2463, %v2464
  %v2466 = vrot.slane %v2465, 2
  %v2467 = vmax.f32 %v2465, %v2466
  %v2468 = vrot.slane %v2467, 1
  %v2469 = vmax.f32 %v2467, %v2468
  %v2470 = vsel %vm1643, %v1121, -inf
  %v2471 = vrot.slane %v2470, 4
  %v2472 = vmax.f32 %v2470, %v2471
  %v2473 = vrot.slane %v2472, 2
  %v2474 = vmax.f32 %v2472, %v2473
  %v2475 = vrot.slane %v2474, 1
  %v2476 = vmax.f32 %v2474, %v2475
  %v2477 = vsel %vm1643, %v1123, -inf
  %v2478 = vrot.slane %v2477, 4
  %v2479 = vmax.f32 %v2477, %v2478
  %v2480 = vrot.slane %v2479, 2
  %v2481 = vmax.f32 %v2479, %v2480
  %v2482 = vrot.slane %v2481, 1
  %v2483 = vmax.f32 %v2481, %v2482
  %v2484 = vsel %vm1643, %v1131, -inf
  %v2485 = vrot.slane %v2484, 4
  %v2486 = vmax.f32 %v2484, %v2485
  %v2487 = vrot.slane %v2486, 2
  %v2488 = vmax.f32 %v2486, %v2487
  %v2489 = vrot.slane %v2488, 1
  %v2490 = vmax.f32 %v2488, %v2489
  %v2491 = vsel %vm1643, %v1139, -inf
  %v2492 = vrot.slane %v2491, 4
  %v2493 = vmax.f32 %v2491, %v2492
  %v2494 = vrot.slane %v2493, 2
  %v2495 = vmax.f32 %v2493, %v2494
  %v2496 = vrot.slane %v2495, 1
  %v2497 = vmax.f32 %v2495, %v2496
  %v2498 = vsel %vm1643, %v1138, -inf
  %v2499 = vrot.slane %v2498, 4
  %v2500 = vmax.f32 %v2498, %v2499
  %v2501 = vrot.slane %v2500, 2
  %v2502 = vmax.f32 %v2500, %v2501
  %v2503 = vrot.slane %v2502, 1
  %v2504 = vmax.f32 %v2502, %v2503
  %v2505 = vsel %vm1643, %v1140, -inf
  %v2506 = vrot.slane %v2505, 4
  %v2507 = vmax.f32 %v2505, %v2506
  %v2508 = vrot.slane %v2507, 2
  %v2509 = vmax.f32 %v2507, %v2508
  %v2510 = vrot.slane %v2509, 1
  %v2511 = vmax.f32 %v2509, %v2510
  %v2512 = vsel %vm1643, %v1148, -inf
  %v2513 = vrot.slane %v2512, 4
  %v2514 = vmax.f32 %v2512, %v2513
  %v2515 = vrot.slane %v2514, 2
  %v2516 = vmax.f32 %v2514, %v2515
  %v2517 = vrot.slane %v2516, 1
  %v2518 = vmax.f32 %v2516, %v2517
  %v2519 = vsel %vm1643, %v1156, -inf
  %v2520 = vrot.slane %v2519, 4
  %v2521 = vmax.f32 %v2519, %v2520
  %v2522 = vrot.slane %v2521, 2
  %v2523 = vmax.f32 %v2521, %v2522
  %v2524 = vrot.slane %v2523, 1
  %v2525 = vmax.f32 %v2523, %v2524
  %v2526 = vsel %vm1643, %v1155, -inf
  %v2527 = vrot.slane %v2526, 4
  %v2528 = vmax.f32 %v2526, %v2527
  %v2529 = vrot.slane %v2528, 2
  %v2530 = vmax.f32 %v2528, %v2529
  %v2531 = vrot.slane %v2530, 1
  %v2532 = vmax.f32 %v2530, %v2531
  %v2533 = vsel %vm1643, %v1157, -inf
  %v2534 = vrot.slane %v2533, 4
  %v2535 = vmax.f32 %v2533, %v2534
  %v2536 = vrot.slane %v2535, 2
  %v2537 = vmax.f32 %v2535, %v2536
  %v2538 = vrot.slane %v2537, 1
  %v2539 = vmax.f32 %v2537, %v2538
  %v2540 = vsel %vm1643, %v1165, -inf
  %v2541 = vrot.slane %v2540, 4
  %v2542 = vmax.f32 %v2540, %v2541
  %v2543 = vrot.slane %v2542, 2
  %v2544 = vmax.f32 %v2542, %v2543
  %v2545 = vrot.slane %v2544, 1
  %v2546 = vmax.f32 %v2544, %v2545
  %v2547 = vsel %vm1643, %v1173, -inf
  %v2548 = vrot.slane %v2547, 4
  %v2549 = vmax.f32 %v2547, %v2548
  %v2550 = vrot.slane %v2549, 2
  %v2551 = vmax.f32 %v2549, %v2550
  %v2552 = vrot.slane %v2551, 1
  %v2553 = vmax.f32 %v2551, %v2552
  %v2554 = vsel %vm1643, %v1172, -inf
  %v2555 = vrot.slane %v2554, 4
  %v2556 = vmax.f32 %v2554, %v2555
  %v2557 = vrot.slane %v2556, 2
  %v2558 = vmax.f32 %v2556, %v2557
  %v2559 = vrot.slane %v2558, 1
  %v2560 = vmax.f32 %v2558, %v2559
  %v2561 = vsel %vm1643, %v1174, -inf
  %v2562 = vrot.slane %v2561, 4
  %v2563 = vmax.f32 %v2561, %v2562
  %v2564 = vrot.slane %v2563, 2
  %v2565 = vmax.f32 %v2563, %v2564
  %v2566 = vrot.slane %v2565, 1
  %v2567 = vmax.f32 %v2565, %v2566
  %v2568 = vsel %vm1643, %v1182, -inf
  %v2569 = vrot.slane %v2568, 4
  %v2570 = vmax.f32 %v2568, %v2569
  %v2571 = vrot.slane %v2570, 2
  %v2572 = vmax.f32 %v2570, %v2571
  %v2573 = vrot.slane %v2572, 1
  %v2574 = vmax.f32 %v2572, %v2573
  %v2575 = vsel %vm1643, %v1190, -inf
  %v2576 = vrot.slane %v2575, 4
  %v2577 = vmax.f32 %v2575, %v2576
  %v2578 = vrot.slane %v2577, 2
  %v2579 = vmax.f32 %v2577, %v2578
  %v2580 = vrot.slane %v2579, 1
  %v2581 = vmax.f32 %v2579, %v2580
  %v2582 = vsel %vm1643, %v1189, -inf
  %v2583 = vrot.slane %v2582, 4
  %v2584 = vmax.f32 %v2582, %v2583
  %v2585 = vrot.slane %v2584, 2
  %v2586 = vmax.f32 %v2584, %v2585
  %v2587 = vrot.slane %v2586, 1
  %v2588 = vmax.f32 %v2586, %v2587
  %v2589 = vsel %vm1643, %v1191, -inf
  %v2590 = vrot.slane %v2589, 4
  %v2591 = vmax.f32 %v2589, %v2590
  %v2592 = vrot.slane %v2591, 2
  %v2593 = vmax.f32 %v2591, %v2592
  %v2594 = vrot.slane %v2593, 1
  %v2595 = vmax.f32 %v2593, %v2594
  %v2596 = vsel %vm1643, %v1199, -inf
  %v2597 = vrot.slane %v2596, 4
  %v2598 = vmax.f32 %v2596, %v2597
  %v2599 = vrot.slane %v2598, 2
  %v2600 = vmax.f32 %v2598, %v2599
  %v2601 = vrot.slane %v2600, 1
  %v2602 = vmax.f32 %v2600, %v2601
  %v2603 = vsel %vm1643, %v1207, -inf
  %v2604 = vrot.slane %v2603, 4
  %v2605 = vmax.f32 %v2603, %v2604
  %v2606 = vrot.slane %v2605, 2
  %v2607 = vmax.f32 %v2605, %v2606
  %v2608 = vrot.slane %v2607, 1
  %v2609 = vmax.f32 %v2607, %v2608
  %v2610 = vsel %vm1643, %v1206, -inf
  %v2611 = vrot.slane %v2610, 4
  %v2612 = vmax.f32 %v2610, %v2611
  %v2613 = vrot.slane %v2612, 2
  %v2614 = vmax.f32 %v2612, %v2613
  %v2615 = vrot.slane %v2614, 1
  %v2616 = vmax.f32 %v2614, %v2615
  %v2617 = vsel %vm1643, %v1208, -inf
  %v2618 = vrot.slane %v2617, 4
  %v2619 = vmax.f32 %v2617, %v2618
  %v2620 = vrot.slane %v2619, 2
  %v2621 = vmax.f32 %v2619, %v2620
  %v2622 = vrot.slane %v2621, 1
  %v2623 = vmax.f32 %v2621, %v2622
  %v2624 = vsel %vm1643, %v1216, -inf
  %v2625 = vrot.slane %v2624, 4
  %v2626 = vmax.f32 %v2624, %v2625
  %v2627 = vrot.slane %v2626, 2
  %v2628 = vmax.f32 %v2626, %v2627
  %v2629 = vrot.slane %v2628, 1
  %v2630 = vmax.f32 %v2628, %v2629
  %v2631 = vsel %vm1643, %v1224, -inf
  %v2632 = vrot.slane %v2631, 4
  %v2633 = vmax.f32 %v2631, %v2632
  %v2634 = vrot.slane %v2633, 2
  %v2635 = vmax.f32 %v2633, %v2634
  %v2636 = vrot.slane %v2635, 1
  %v2637 = vmax.f32 %v2635, %v2636
  %v2638 = vsel %vm1643, %v1223, -inf
  %v2639 = vrot.slane %v2638, 4
  %v2640 = vmax.f32 %v2638, %v2639
  %v2641 = vrot.slane %v2640, 2
  %v2642 = vmax.f32 %v2640, %v2641
  %v2643 = vrot.slane %v2642, 1
  %v2644 = vmax.f32 %v2642, %v2643
  %v2645 = vsel %vm1643, %v1225, -inf
  %v2646 = vrot.slane %v2645, 4
  %v2647 = vmax.f32 %v2645, %v2646
  %v2648 = vrot.slane %v2647, 2
  %v2649 = vmax.f32 %v2647, %v2648
  %v2650 = vrot.slane %v2649, 1
  %v2651 = vmax.f32 %v2649, %v2650
  %v2652 = vsel %vm1643, %v1233, -inf
  %v2653 = vrot.slane %v2652, 4
  %v2654 = vmax.f32 %v2652, %v2653
  %v2655 = vrot.slane %v2654, 2
  %v2656 = vmax.f32 %v2654, %v2655
  %v2657 = vrot.slane %v2656, 1
  %v2658 = vmax.f32 %v2656, %v2657
  %v2659 = vsel %vm1643, %v1241, -inf
  %v2660 = vrot.slane %v2659, 4
  %v2661 = vmax.f32 %v2659, %v2660
  %v2662 = vrot.slane %v2661, 2
  %v2663 = vmax.f32 %v2661, %v2662
  %v2664 = vrot.slane %v2663, 1
  %v2665 = vmax.f32 %v2663, %v2664
  %v2666 = vsel %vm1643, %v1240, -inf
  %v2667 = vrot.slane %v2666, 4
  %v2668 = vmax.f32 %v2666, %v2667
  %v2669 = vrot.slane %v2668, 2
  %v2670 = vmax.f32 %v2668, %v2669
  %v2671 = vrot.slane %v2670, 1
  %v2672 = vmax.f32 %v2670, %v2671
  %v2673 = vsel %vm1643, %v1242, -inf
  %v2674 = vrot.slane %v2673, 4
  %v2675 = vmax.f32 %v2673, %v2674
  %v2676 = vrot.slane %v2675, 2
  %v2677 = vmax.f32 %v2675, %v2676
  %v2678 = vrot.slane %v2677, 1
  %v2679 = vmax.f32 %v2677, %v2678
  %v2680 = vsel %vm1643, %v1250, -inf
  %v2681 = vrot.slane %v2680, 4
  %v2682 = vmax.f32 %v2680, %v2681
  %v2683 = vrot.slane %v2682, 2
  %v2684 = vmax.f32 %v2682, %v2683
  %v2685 = vrot.slane %v2684, 1
  %v2686 = vmax.f32 %v2684, %v2685
  %v2687 = vsel %vm1643, %v1258, -inf
  %v2688 = vrot.slane %v2687, 4
  %v2689 = vmax.f32 %v2687, %v2688
  %v2690 = vrot.slane %v2689, 2
  %v2691 = vmax.f32 %v2689, %v2690
  %v2692 = vrot.slane %v2691, 1
  %v2693 = vmax.f32 %v2691, %v2692
  %v2694 = vsel %vm1643, %v1257, -inf
  %v2695 = vrot.slane %v2694, 4
  %v2696 = vmax.f32 %v2694, %v2695
  %v2697 = vrot.slane %v2696, 2
  %v2698 = vmax.f32 %v2696, %v2697
  %v2699 = vrot.slane %v2698, 1
  %v2700 = vmax.f32 %v2698, %v2699
  %v2701 = vsel %vm1643, %v1259, -inf
  %v2702 = vrot.slane %v2701, 4
  %v2703 = vmax.f32 %v2701, %v2702
  %v2704 = vrot.slane %v2703, 2
  %v2705 = vmax.f32 %v2703, %v2704
  %v2706 = vrot.slane %v2705, 1
  %v2707 = vmax.f32 %v2705, %v2706
  %v2708 = vsel %vm1643, %v1267, -inf
  %v2709 = vrot.slane %v2708, 4
  %v2710 = vmax.f32 %v2708, %v2709
  %v2711 = vrot.slane %v2710, 2
  %v2712 = vmax.f32 %v2710, %v2711
  %v2713 = vrot.slane %v2712, 1
  %v2714 = vmax.f32 %v2712, %v2713
  %v2715 = vsel %vm1643, %v1275, -inf
  %v2716 = vrot.slane %v2715, 4
  %v2717 = vmax.f32 %v2715, %v2716
  %v2718 = vrot.slane %v2717, 2
  %v2719 = vmax.f32 %v2717, %v2718
  %v2720 = vrot.slane %v2719, 1
  %v2721 = vmax.f32 %v2719, %v2720
  %v2722 = vsel %vm1643, %v1274, -inf
  %v2723 = vrot.slane %v2722, 4
  %v2724 = vmax.f32 %v2722, %v2723
  %v2725 = vrot.slane %v2724, 2
  %v2726 = vmax.f32 %v2724, %v2725
  %v2727 = vrot.slane %v2726, 1
  %v2728 = vmax.f32 %v2726, %v2727
  %v2729 = vsel %vm1643, %v1276, -inf
  %v2730 = vrot.slane %v2729, 4
  %v2731 = vmax.f32 %v2729, %v2730
  %v2732 = vrot.slane %v2731, 2
  %v2733 = vmax.f32 %v2731, %v2732
  %v2734 = vrot.slane %v2733, 1
  %v2735 = vmax.f32 %v2733, %v2734
  %v2736 = vsel %vm1643, %v1284, -inf
  %v2737 = vrot.slane %v2736, 4
  %v2738 = vmax.f32 %v2736, %v2737
  %v2739 = vrot.slane %v2738, 2
  %v2740 = vmax.f32 %v2738, %v2739
  %v2741 = vrot.slane %v2740, 1
  %v2742 = vmax.f32 %v2740, %v2741
  %v2743 = vsel %vm1643, %v1292, -inf
  %v2744 = vrot.slane %v2743, 4
  %v2745 = vmax.f32 %v2743, %v2744
  %v2746 = vrot.slane %v2745, 2
  %v2747 = vmax.f32 %v2745, %v2746
  %v2748 = vrot.slane %v2747, 1
  %v2749 = vmax.f32 %v2747, %v2748
  %v2750 = vsel %vm1643, %v1291, -inf
  %v2751 = vrot.slane %v2750, 4
  %v2752 = vmax.f32 %v2750, %v2751
  %v2753 = vrot.slane %v2752, 2
  %v2754 = vmax.f32 %v2752, %v2753
  %v2755 = vrot.slane %v2754, 1
  %v2756 = vmax.f32 %v2754, %v2755
  %v2757 = vsel %vm1643, %v1293, -inf
  %v2758 = vrot.slane %v2757, 4
  %v2759 = vmax.f32 %v2757, %v2758
  %v2760 = vrot.slane %v2759, 2
  %v2761 = vmax.f32 %v2759, %v2760
  %v2762 = vrot.slane %v2761, 1
  %v2763 = vmax.f32 %v2761, %v2762
  %v2764 = vsel %vm1643, %v1301, -inf
  %v2765 = vrot.slane %v2764, 4
  %v2766 = vmax.f32 %v2764, %v2765
  %v2767 = vrot.slane %v2766, 2
  %v2768 = vmax.f32 %v2766, %v2767
  %v2769 = vrot.slane %v2768, 1
  %v2770 = vmax.f32 %v2768, %v2769
  %v2771 = vsel %vm1643, %v1309, -inf
  %v2772 = vrot.slane %v2771, 4
  %v2773 = vmax.f32 %v2771, %v2772
  %v2774 = vrot.slane %v2773, 2
  %v2775 = vmax.f32 %v2773, %v2774
  %v2776 = vrot.slane %v2775, 1
  %v2777 = vmax.f32 %v2775, %v2776
  %v2778 = vsel %vm1643, %v1308, -inf
  %v2779 = vrot.slane %v2778, 4
  %v2780 = vmax.f32 %v2778, %v2779
  %v2781 = vrot.slane %v2780, 2
  %v2782 = vmax.f32 %v2780, %v2781
  %v2783 = vrot.slane %v2782, 1
  %v2784 = vmax.f32 %v2782, %v2783
  %v2785 = vsel %vm1643, %v1310, -inf
  %v2786 = vrot.slane %v2785, 4
  %v2787 = vmax.f32 %v2785, %v2786
  %v2788 = vrot.slane %v2787, 2
  %v2789 = vmax.f32 %v2787, %v2788
  %v2790 = vrot.slane %v2789, 1
  %v2791 = vmax.f32 %v2789, %v2790
  %v2792 = vsel %vm1643, %v1318, -inf
  %v2793 = vrot.slane %v2792, 4
  %v2794 = vmax.f32 %v2792, %v2793
  %v2795 = vrot.slane %v2794, 2
  %v2796 = vmax.f32 %v2794, %v2795
  %v2797 = vrot.slane %v2796, 1
  %v2798 = vmax.f32 %v2796, %v2797
  %v2799 = vsel %vm1643, %v1326, -inf
  %v2800 = vrot.slane %v2799, 4
  %v2801 = vmax.f32 %v2799, %v2800
  %v2802 = vrot.slane %v2801, 2
  %v2803 = vmax.f32 %v2801, %v2802
  %v2804 = vrot.slane %v2803, 1
  %v2805 = vmax.f32 %v2803, %v2804
  %v2806 = vsel %vm1643, %v1325, -inf
  %v2807 = vrot.slane %v2806, 4
  %v2808 = vmax.f32 %v2806, %v2807
  %v2809 = vrot.slane %v2808, 2
  %v2810 = vmax.f32 %v2808, %v2809
  %v2811 = vrot.slane %v2810, 1
  %v2812 = vmax.f32 %v2810, %v2811
  %v2813 = vsel %vm1643, %v1327, -inf
  %v2814 = vrot.slane %v2813, 4
  %v2815 = vmax.f32 %v2813, %v2814
  %v2816 = vrot.slane %v2815, 2
  %v2817 = vmax.f32 %v2815, %v2816
  %v2818 = vrot.slane %v2817, 1
  %v2819 = vmax.f32 %v2817, %v2818
  %v2820 = vsel %vm1643, %v1335, -inf
  %v2821 = vrot.slane %v2820, 4
  %v2822 = vmax.f32 %v2820, %v2821
  %v2823 = vrot.slane %v2822, 2
  %v2824 = vmax.f32 %v2822, %v2823
  %v2825 = vrot.slane %v2824, 1
  %v2826 = vmax.f32 %v2824, %v2825
  %v2827 = vsel %vm1643, %v1343, -inf
  %v2828 = vrot.slane %v2827, 4
  %v2829 = vmax.f32 %v2827, %v2828
  %v2830 = vrot.slane %v2829, 2
  %v2831 = vmax.f32 %v2829, %v2830
  %v2832 = vrot.slane %v2831, 1
  %v2833 = vmax.f32 %v2831, %v2832
  %v2834 = vsel %vm1643, %v1342, -inf
  %v2835 = vrot.slane %v2834, 4
  %v2836 = vmax.f32 %v2834, %v2835
  %v2837 = vrot.slane %v2836, 2
  %v2838 = vmax.f32 %v2836, %v2837
  %v2839 = vrot.slane %v2838, 1
  %v2840 = vmax.f32 %v2838, %v2839
  %v2841 = vsel %vm1643, %v1344, -inf
  %v2842 = vrot.slane %v2841, 4
  %v2843 = vmax.f32 %v2841, %v2842
  %v2844 = vrot.slane %v2843, 2
  %v2845 = vmax.f32 %v2843, %v2844
  %v2846 = vrot.slane %v2845, 1
  %v2847 = vmax.f32 %v2845, %v2846
  %v2848 = vsel %vm1643, %v1352, -inf
  %v2849 = vrot.slane %v2848, 4
  %v2850 = vmax.f32 %v2848, %v2849
  %v2851 = vrot.slane %v2850, 2
  %v2852 = vmax.f32 %v2850, %v2851
  %v2853 = vrot.slane %v2852, 1
  %v2854 = vmax.f32 %v2852, %v2853
  %v2855 = vsel %vm1643, %v1360, -inf
  %v2856 = vrot.slane %v2855, 4
  %v2857 = vmax.f32 %v2855, %v2856
  %v2858 = vrot.slane %v2857, 2
  %v2859 = vmax.f32 %v2857, %v2858
  %v2860 = vrot.slane %v2859, 1
  %v2861 = vmax.f32 %v2859, %v2860
  %v2862 = vsel %vm1643, %v1359, -inf
  %v2863 = vrot.slane %v2862, 4
  %v2864 = vmax.f32 %v2862, %v2863
  %v2865 = vrot.slane %v2864, 2
  %v2866 = vmax.f32 %v2864, %v2865
  %v2867 = vrot.slane %v2866, 1
  %v2868 = vmax.f32 %v2866, %v2867
  %v2869 = vsel %vm1643, %v1361, -inf
  %v2870 = vrot.slane %v2869, 4
  %v2871 = vmax.f32 %v2869, %v2870
  %v2872 = vrot.slane %v2871, 2
  %v2873 = vmax.f32 %v2871, %v2872
  %v2874 = vrot.slane %v2873, 1
  %v2875 = vmax.f32 %v2873, %v2874
  %v2876 = vsel %vm1643, %v1369, -inf
  %v2877 = vrot.slane %v2876, 4
  %v2878 = vmax.f32 %v2876, %v2877
  %v2879 = vrot.slane %v2878, 2
  %v2880 = vmax.f32 %v2878, %v2879
  %v2881 = vrot.slane %v2880, 1
  %v2882 = vmax.f32 %v2880, %v2881
  %v2883 = vsel %vm1643, %v1377, -inf
  %v2884 = vrot.slane %v2883, 4
  %v2885 = vmax.f32 %v2883, %v2884
  %v2886 = vrot.slane %v2885, 2
  %v2887 = vmax.f32 %v2885, %v2886
  %v2888 = vrot.slane %v2887, 1
  %v2889 = vmax.f32 %v2887, %v2888
  %v2890 = vsel %vm1643, %v1376, -inf
  %v2891 = vrot.slane %v2890, 4
  %v2892 = vmax.f32 %v2890, %v2891
  %v2893 = vrot.slane %v2892, 2
  %v2894 = vmax.f32 %v2892, %v2893
  %v2895 = vrot.slane %v2894, 1
  %v2896 = vmax.f32 %v2894, %v2895
  %v2897 = vsel %vm1643, %v1378, -inf
  %v2898 = vrot.slane %v2897, 4
  %v2899 = vmax.f32 %v2897, %v2898
  %v2900 = vrot.slane %v2899, 2
  %v2901 = vmax.f32 %v2899, %v2900
  %v2902 = vrot.slane %v2901, 1
  %v2903 = vmax.f32 %v2901, %v2902
  %v2904 = vsel %vm1643, %v1386, -inf
  %v2905 = vrot.slane %v2904, 4
  %v2906 = vmax.f32 %v2904, %v2905
  %v2907 = vrot.slane %v2906, 2
  %v2908 = vmax.f32 %v2906, %v2907
  %v2909 = vrot.slane %v2908, 1
  %v2910 = vmax.f32 %v2908, %v2909
  %v2911 = vsel %vm1643, %v1394, -inf
  %v2912 = vrot.slane %v2911, 4
  %v2913 = vmax.f32 %v2911, %v2912
  %v2914 = vrot.slane %v2913, 2
  %v2915 = vmax.f32 %v2913, %v2914
  %v2916 = vrot.slane %v2915, 1
  %v2917 = vmax.f32 %v2915, %v2916
  %v2918 = vsel %vm1643, %v1393, -inf
  %v2919 = vrot.slane %v2918, 4
  %v2920 = vmax.f32 %v2918, %v2919
  %v2921 = vrot.slane %v2920, 2
  %v2922 = vmax.f32 %v2920, %v2921
  %v2923 = vrot.slane %v2922, 1
  %v2924 = vmax.f32 %v2922, %v2923
  %v2925 = vsel %vm1643, %v1395, -inf
  %v2926 = vrot.slane %v2925, 4
  %v2927 = vmax.f32 %v2925, %v2926
  %v2928 = vrot.slane %v2927, 2
  %v2929 = vmax.f32 %v2927, %v2928
  %v2930 = vrot.slane %v2929, 1
  %v2931 = vmax.f32 %v2929, %v2930
  %v2932 = vsel %vm1643, %v1403, -inf
  %v2933 = vrot.slane %v2932, 4
  %v2934 = vmax.f32 %v2932, %v2933
  %v2935 = vrot.slane %v2934, 2
  %v2936 = vmax.f32 %v2934, %v2935
  %v2937 = vrot.slane %v2936, 1
  %v2938 = vmax.f32 %v2936, %v2937
  %v2939 = vsel %vm1643, %v1411, -inf
  %v2940 = vrot.slane %v2939, 4
  %v2941 = vmax.f32 %v2939, %v2940
  %v2942 = vrot.slane %v2941, 2
  %v2943 = vmax.f32 %v2941, %v2942
  %v2944 = vrot.slane %v2943, 1
  %v2945 = vmax.f32 %v2943, %v2944
  %v2946 = vsel %vm1643, %v1410, -inf
  %v2947 = vrot.slane %v2946, 4
  %v2948 = vmax.f32 %v2946, %v2947
  %v2949 = vrot.slane %v2948, 2
  %v2950 = vmax.f32 %v2948, %v2949
  %v2951 = vrot.slane %v2950, 1
  %v2952 = vmax.f32 %v2950, %v2951
  %v2953 = vsel %vm1643, %v1412, -inf
  %v2954 = vrot.slane %v2953, 4
  %v2955 = vmax.f32 %v2953, %v2954
  %v2956 = vrot.slane %v2955, 2
  %v2957 = vmax.f32 %v2955, %v2956
  %v2958 = vrot.slane %v2957, 1
  %v2959 = vmax.f32 %v2957, %v2958
  %v2960 = vsel %vm1643, %v1420, -inf
  %v2961 = vrot.slane %v2960, 4
  %v2962 = vmax.f32 %v2960, %v2961
  %v2963 = vrot.slane %v2962, 2
  %v2964 = vmax.f32 %v2962, %v2963
  %v2965 = vrot.slane %v2964, 1
  %v2966 = vmax.f32 %v2964, %v2965
  %v2967 = vsel %vm1643, %v1428, -inf
  %v2968 = vrot.slane %v2967, 4
  %v2969 = vmax.f32 %v2967, %v2968
  %v2970 = vrot.slane %v2969, 2
  %v2971 = vmax.f32 %v2969, %v2970
  %v2972 = vrot.slane %v2971, 1
  %v2973 = vmax.f32 %v2971, %v2972
  %v2974 = vsel %vm1643, %v1427, -inf
  %v2975 = vrot.slane %v2974, 4
  %v2976 = vmax.f32 %v2974, %v2975
  %v2977 = vrot.slane %v2976, 2
  %v2978 = vmax.f32 %v2976, %v2977
  %v2979 = vrot.slane %v2978, 1
  %v2980 = vmax.f32 %v2978, %v2979
  %v2981 = vsel %vm1643, %v1429, -inf
  %v2982 = vrot.slane %v2981, 4
  %v2983 = vmax.f32 %v2981, %v2982
  %v2984 = vrot.slane %v2983, 2
  %v2985 = vmax.f32 %v2983, %v2984
  %v2986 = vrot.slane %v2985, 1
  %v2987 = vmax.f32 %v2985, %v2986
  %v2988 = vsel %vm1643, %v1437, -inf
  %v2989 = vrot.slane %v2988, 4
  %v2990 = vmax.f32 %v2988, %v2989
  %v2991 = vrot.slane %v2990, 2
  %v2992 = vmax.f32 %v2990, %v2991
  %v2993 = vrot.slane %v2992, 1
  %v2994 = vmax.f32 %v2992, %v2993
  %v2995 = vsel %vm1643, %v1445, -inf
  %v2996 = vrot.slane %v2995, 4
  %v2997 = vmax.f32 %v2995, %v2996
  %v2998 = vrot.slane %v2997, 2
  %v2999 = vmax.f32 %v2997, %v2998
  %v3000 = vrot.slane %v2999, 1
  %v3001 = vmax.f32 %v2999, %v3000
  %v3002 = vsel %vm1643, %v1444, -inf
  %v3003 = vrot.slane %v3002, 4
  %v3004 = vmax.f32 %v3002, %v3003
  %v3005 = vrot.slane %v3004, 2
  %v3006 = vmax.f32 %v3004, %v3005
  %v3007 = vrot.slane %v3006, 1
  %v3008 = vmax.f32 %v3006, %v3007
  %v3009 = vsel %vm1643, %v1446, -inf
  %v3010 = vrot.slane %v3009, 4
  %v3011 = vmax.f32 %v3009, %v3010
  %v3012 = vrot.slane %v3011, 2
  %v3013 = vmax.f32 %v3011, %v3012
  %v3014 = vrot.slane %v3013, 1
  %v3015 = vmax.f32 %v3013, %v3014
  %vm3016 = vcmask 80896
  %v3017 = vsel %vm3016, %v1650, -inf
  %v3018 = vsel %vm3016, %v1699, -inf
  %v3019 = vmax.f32 %v3017, %v3018
  %v3020 = vsel %vm3016, %v1657, -inf
  %v3021 = vsel %vm3016, %v1706, -inf
  %v3022 = vmax.f32 %v3020, %v3021
  %v3023 = vsel %vm3016, %v1664, -inf
  %v3024 = vsel %vm3016, %v1713, -inf
  %v3025 = vmax.f32 %v3023, %v3024
  %v3026 = vsel %vm3016, %v1671, -inf
  %v3027 = vsel %vm3016, %v1720, -inf
  %v3028 = vmax.f32 %v3026, %v3027
  %v3029 = vsel %vm3016, %v1678, -inf
  %v3030 = vsel %vm3016, %v1727, -inf
  %v3031 = vmax.f32 %v3029, %v3030
  %v3032 = vsel %vm3016, %v1685, -inf
  %v3033 = vsel %vm3016, %v1734, -inf
  %v3034 = vmax.f32 %v3032, %v3033
  %v3035 = vsel %vm3016, %v1692, -inf
  %v3036 = vsel %vm3016, %v1741, -inf
  %v3037 = vmax.f32 %v3035, %v3036
  %v3038 = vsel %vm3016, %v1748, -inf
  %v3039 = vsel %vm3016, %v1797, -inf
  %v3040 = vmax.f32 %v3038, %v3039
  %v3041 = vsel %vm3016, %v1755, -inf
  %v3042 = vsel %vm3016, %v1804, -inf
  %v3043 = vmax.f32 %v3041, %v3042
  %v3044 = vsel %vm3016, %v1762, -inf
  %v3045 = vsel %vm3016, %v1811, -inf
  %v3046 = vmax.f32 %v3044, %v3045
  %v3047 = vsel %vm3016, %v1769, -inf
  %v3048 = vsel %vm3016, %v1818, -inf
  %v3049 = vmax.f32 %v3047, %v3048
  %v3050 = vsel %vm3016, %v1776, -inf
  %v3051 = vsel %vm3016, %v1825, -inf
  %v3052 = vmax.f32 %v3050, %v3051
  %v3053 = vsel %vm3016, %v1783, -inf
  %v3054 = vsel %vm3016, %v1832, -inf
  %v3055 = vmax.f32 %v3053, %v3054
  %v3056 = vsel %vm3016, %v1790, -inf
  %v3057 = vsel %vm3016, %v1839, -inf
  %v3058 = vmax.f32 %v3056, %v3057
  %v3059 = vsel %vm3016, %v1846, -inf
  %v3060 = vsel %vm3016, %v1895, -inf
  %v3061 = vmax.f32 %v3059, %v3060
  %v3062 = vsel %vm3016, %v1853, -inf
  %v3063 = vsel %vm3016, %v1902, -inf
  %v3064 = vmax.f32 %v3062, %v3063
  %v3065 = vsel %vm3016, %v1860, -inf
  %v3066 = vsel %vm3016, %v1909, -inf
  %v3067 = vmax.f32 %v3065, %v3066
  %v3068 = vsel %vm3016, %v1867, -inf
  %v3069 = vsel %vm3016, %v1916, -inf
  %v3070 = vmax.f32 %v3068, %v3069
  %v3071 = vsel %vm3016, %v1874, -inf
  %v3072 = vsel %vm3016, %v1923, -inf
  %v3073 = vmax.f32 %v3071, %v3072
  %v3074 = vsel %vm3016, %v1881, -inf
  %v3075 = vsel %vm3016, %v1930, -inf
  %v3076 = vmax.f32 %v3074, %v3075
  %v3077 = vsel %vm3016, %v1888, -inf
  %v3078 = vsel %vm3016, %v1937, -inf
  %v3079 = vmax.f32 %v3077, %v3078
  %v3080 = vsel %vm3016, %v1944, -inf
  %v3081 = vsel %vm3016, %v1993, -inf
  %v3082 = vmax.f32 %v3080, %v3081
  %v3083 = vsel %vm3016, %v1951, -inf
  %v3084 = vsel %vm3016, %v2000, -inf
  %v3085 = vmax.f32 %v3083, %v3084
  %v3086 = vsel %vm3016, %v1958, -inf
  %v3087 = vsel %vm3016, %v2007, -inf
  %v3088 = vmax.f32 %v3086, %v3087
  %v3089 = vsel %vm3016, %v1965, -inf
  %v3090 = vsel %vm3016, %v2014, -inf
  %v3091 = vmax.f32 %v3089, %v3090
  %v3092 = vsel %vm3016, %v1972, -inf
  %v3093 = vsel %vm3016, %v2021, -inf
  %v3094 = vmax.f32 %v3092, %v3093
  %v3095 = vsel %vm3016, %v1979, -inf
  %v3096 = vsel %vm3016, %v2028, -inf
  %v3097 = vmax.f32 %v3095, %v3096
  %v3098 = vsel %vm3016, %v1986, -inf
  %v3099 = vsel %vm3016, %v2035, -inf
  %v3100 = vmax.f32 %v3098, %v3099
  %v3101 = vsel %vm3016, %v2042, -inf
  %v3102 = vsel %vm3016, %v2091, -inf
  %v3103 = vmax.f32 %v3101, %v3102
  %v3104 = vsel %vm3016, %v2049, -inf
  %v3105 = vsel %vm3016, %v2098, -inf
  %v3106 = vmax.f32 %v3104, %v3105
  %v3107 = vsel %vm3016, %v2056, -inf
  %v3108 = vsel %vm3016, %v2105, -inf
  %v3109 = vmax.f32 %v3107, %v3108
  %v3110 = vsel %vm3016, %v2063, -inf
  %v3111 = vsel %vm3016, %v2112, -inf
  %v3112 = vmax.f32 %v3110, %v3111
  %v3113 = vsel %vm3016, %v2070, -inf
  %v3114 = vsel %vm3016, %v2119, -inf
  %v3115 = vmax.f32 %v3113, %v3114
  %v3116 = vsel %vm3016, %v2077, -inf
  %v3117 = vsel %vm3016, %v2126, -inf
  %v3118 = vmax.f32 %v3116, %v3117
  %v3119 = vsel %vm3016, %v2084, -inf
  %v3120 = vsel %vm3016, %v2133, -inf
  %v3121 = vmax.f32 %v3119, %v3120
  %v3122 = vsel %vm3016, %v2140, -inf
  %v3123 = vsel %vm3016, %v2189, -inf
  %v3124 = vmax.f32 %v3122, %v3123
  %v3125 = vsel %vm3016, %v2147, -inf
  %v3126 = vsel %vm3016, %v2196, -inf
  %v3127 = vmax.f32 %v3125, %v3126
  %v3128 = vsel %vm3016, %v2154, -inf
  %v3129 = vsel %vm3016, %v2203, -inf
  %v3130 = vmax.f32 %v3128, %v3129
  %v3131 = vsel %vm3016, %v2161, -inf
  %v3132 = vsel %vm3016, %v2210, -inf
  %v3133 = vmax.f32 %v3131, %v3132
  %v3134 = vsel %vm3016, %v2168, -inf
  %v3135 = vsel %vm3016, %v2217, -inf
  %v3136 = vmax.f32 %v3134, %v3135
  %v3137 = vsel %vm3016, %v2175, -inf
  %v3138 = vsel %vm3016, %v2224, -inf
  %v3139 = vmax.f32 %v3137, %v3138
  %v3140 = vsel %vm3016, %v2182, -inf
  %v3141 = vsel %vm3016, %v2231, -inf
  %v3142 = vmax.f32 %v3140, %v3141
  %v3143 = vsel %vm3016, %v2238, -inf
  %v3144 = vsel %vm3016, %v2287, -inf
  %v3145 = vmax.f32 %v3143, %v3144
  %v3146 = vsel %vm3016, %v2245, -inf
  %v3147 = vsel %vm3016, %v2294, -inf
  %v3148 = vmax.f32 %v3146, %v3147
  %v3149 = vsel %vm3016, %v2252, -inf
  %v3150 = vsel %vm3016, %v2301, -inf
  %v3151 = vmax.f32 %v3149, %v3150
  %v3152 = vsel %vm3016, %v2259, -inf
  %v3153 = vsel %vm3016, %v2308, -inf
  %v3154 = vmax.f32 %v3152, %v3153
  %v3155 = vsel %vm3016, %v2266, -inf
  %v3156 = vsel %vm3016, %v2315, -inf
  %v3157 = vmax.f32 %v3155, %v3156
  %v3158 = vsel %vm3016, %v2273, -inf
  %v3159 = vsel %vm3016, %v2322, -inf
  %v3160 = vmax.f32 %v3158, %v3159
  %v3161 = vsel %vm3016, %v2280, -inf
  %v3162 = vsel %vm3016, %v2329, -inf
  %v3163 = vmax.f32 %v3161, %v3162
  %v3164 = vsel %vm3016, %v2336, -inf
  %v3165 = vsel %vm3016, %v2385, -inf
  %v3166 = vmax.f32 %v3164, %v3165
  %v3167 = vsel %vm3016, %v2343, -inf
  %v3168 = vsel %vm3016, %v2392, -inf
  %v3169 = vmax.f32 %v3167, %v3168
  %v3170 = vsel %vm3016, %v2350, -inf
  %v3171 = vsel %vm3016, %v2399, -inf
  %v3172 = vmax.f32 %v3170, %v3171
  %v3173 = vsel %vm3016, %v2357, -inf
  %v3174 = vsel %vm3016, %v2406, -inf
  %v3175 = vmax.f32 %v3173, %v3174
  %v3176 = vsel %vm3016, %v2364, -inf
  %v3177 = vsel %vm3016, %v2413, -inf
  %v3178 = vmax.f32 %v3176, %v3177
  %v3179 = vsel %vm3016, %v2371, -inf
  %v3180 = vsel %vm3016, %v2420, -inf
  %v3181 = vmax.f32 %v3179, %v3180
  %v3182 = vsel %vm3016, %v2378, -inf
  %v3183 = vsel %vm3016, %v2427, -inf
  %v3184 = vmax.f32 %v3182, %v3183
  %v3185 = vsel %vm3016, %v2434, -inf
  %v3186 = vsel %vm3016, %v2483, -inf
  %v3187 = vmax.f32 %v3185, %v3186
  %v3188 = vsel %vm3016, %v2441, -inf
  %v3189 = vsel %vm3016, %v2490, -inf
  %v3190 = vmax.f32 %v3188, %v3189
  %v3191 = vsel %vm3016, %v2448, -inf
  %v3192 = vsel %vm3016, %v2497, -inf
  %v3193 = vmax.f32 %v3191, %v3192
  %v3194 = vsel %vm3016, %v2455, -inf
  %v3195 = vsel %vm3016, %v2504, -inf
  %v3196 = vmax.f32 %v3194, %v3195
  %v3197 = vsel %vm3016, %v2462, -inf
  %v3198 = vsel %vm3016, %v2511, -inf
  %v3199 = vmax.f32 %v3197, %v3198
  %v3200 = vsel %vm3016, %v2469, -inf
  %v3201 = vsel %vm3016, %v2518, -inf
  %v3202 = vmax.f32 %v3200, %v3201
  %v3203 = vsel %vm3016, %v2476, -inf
  %v3204 = vsel %vm3016, %v2525, -inf
  %v3205 = vmax.f32 %v3203, %v3204
  %v3206 = vsel %vm3016, %v2532, -inf
  %v3207 = vsel %vm3016, %v2581, -inf
  %v3208 = vmax.f32 %v3206, %v3207
  %v3209 = vsel %vm3016, %v2539, -inf
  %v3210 = vsel %vm3016, %v2588, -inf
  %v3211 = vmax.f32 %v3209, %v3210
  %v3212 = vsel %vm3016, %v2546, -inf
  %v3213 = vsel %vm3016, %v2595, -inf
  %v3214 = vmax.f32 %v3212, %v3213
  %v3215 = vsel %vm3016, %v2553, -inf
  %v3216 = vsel %vm3016, %v2602, -inf
  %v3217 = vmax.f32 %v3215, %v3216
  %v3218 = vsel %vm3016, %v2560, -inf
  %v3219 = vsel %vm3016, %v2609, -inf
  %v3220 = vmax.f32 %v3218, %v3219
  %v3221 = vsel %vm3016, %v2567, -inf
  %v3222 = vsel %vm3016, %v2616, -inf
  %v3223 = vmax.f32 %v3221, %v3222
  %v3224 = vsel %vm3016, %v2574, -inf
  %v3225 = vsel %vm3016, %v2623, -inf
  %v3226 = vmax.f32 %v3224, %v3225
  %v3227 = vsel %vm3016, %v2630, -inf
  %v3228 = vsel %vm3016, %v2679, -inf
  %v3229 = vmax.f32 %v3227, %v3228
  %v3230 = vsel %vm3016, %v2637, -inf
  %v3231 = vsel %vm3016, %v2686, -inf
  %v3232 = vmax.f32 %v3230, %v3231
  %v3233 = vsel %vm3016, %v2644, -inf
  %v3234 = vsel %vm3016, %v2693, -inf
  %v3235 = vmax.f32 %v3233, %v3234
  %v3236 = vsel %vm3016, %v2651, -inf
  %v3237 = vsel %vm3016, %v2700, -inf
  %v3238 = vmax.f32 %v3236, %v3237
  %v3239 = vsel %vm3016, %v2658, -inf
  %v3240 = vsel %vm3016, %v2707, -inf
  %v3241 = vmax.f32 %v3239, %v3240
  %v3242 = vsel %vm3016, %v2665, -inf
  %v3243 = vsel %vm3016, %v2714, -inf
  %v3244 = vmax.f32 %v3242, %v3243
  %v3245 = vsel %vm3016, %v2672, -inf
  %v3246 = vsel %vm3016, %v2721, -inf
  %v3247 = vmax.f32 %v3245, %v3246
  %v3248 = vsel %vm3016, %v2728, -inf
  %v3249 = vsel %vm3016, %v2777, -inf
  %v3250 = vmax.f32 %v3248, %v3249
  %v3251 = vsel %vm3016, %v2735, -inf
  %v3252 = vsel %vm3016, %v2784, -inf
  %v3253 = vmax.f32 %v3251, %v3252
  %v3254 = vsel %vm3016, %v2742, -inf
  %v3255 = vsel %vm3016, %v2791, -inf
  %v3256 = vmax.f32 %v3254, %v3255
  %v3257 = vsel %vm3016, %v2749, -inf
  %v3258 = vsel %vm3016, %v2798, -inf
  %v3259 = vmax.f32 %v3257, %v3258
  %v3260 = vsel %vm3016, %v2756, -inf
  %v3261 = vsel %vm3016, %v2805, -inf
  %v3262 = vmax.f32 %v3260, %v3261
  %v3263 = vsel %vm3016, %v2763, -inf
  %v3264 = vsel %vm3016, %v2812, -inf
  %v3265 = vmax.f32 %v3263, %v3264
  %v3266 = vsel %vm3016, %v2770, -inf
  %v3267 = vsel %vm3016, %v2819, -inf
  %v3268 = vmax.f32 %v3266, %v3267
  %v3269 = vsel %vm3016, %v2826, -inf
  %v3270 = vsel %vm3016, %v2875, -inf
  %v3271 = vmax.f32 %v3269, %v3270
  %v3272 = vsel %vm3016, %v2833, -inf
  %v3273 = vsel %vm3016, %v2882, -inf
  %v3274 = vmax.f32 %v3272, %v3273
  %v3275 = vsel %vm3016, %v2840, -inf
  %v3276 = vsel %vm3016, %v2889, -inf
  %v3277 = vmax.f32 %v3275, %v3276
  %v3278 = vsel %vm3016, %v2847, -inf
  %v3279 = vsel %vm3016, %v2896, -inf
  %v3280 = vmax.f32 %v3278, %v3279
  %v3281 = vsel %vm3016, %v2854, -inf
  %v3282 = vsel %vm3016, %v2903, -inf
  %v3283 = vmax.f32 %v3281, %v3282
  %v3284 = vsel %vm3016, %v2861, -inf
  %v3285 = vsel %vm3016, %v2910, -inf
  %v3286 = vmax.f32 %v3284, %v3285
  %v3287 = vsel %vm3016, %v2868, -inf
  %v3288 = vsel %vm3016, %v2917, -inf
  %v3289 = vmax.f32 %v3287, %v3288
  %v3290 = vsel %vm3016, %v2924, -inf
  %v3291 = vsel %vm3016, %v2973, -inf
  %v3292 = vmax.f32 %v3290, %v3291
  %v3293 = vsel %vm3016, %v2931, -inf
  %v3294 = vsel %vm3016, %v2980, -inf
  %v3295 = vmax.f32 %v3293, %v3294
  %v3296 = vsel %vm3016, %v2938, -inf
  %v3297 = vsel %vm3016, %v2987, -inf
  %v3298 = vmax.f32 %v3296, %v3297
  %v3299 = vsel %vm3016, %v2945, -inf
  %v3300 = vsel %vm3016, %v2994, -inf
  %v3301 = vmax.f32 %v3299, %v3300
  %v3302 = vsel %vm3016, %v2952, -inf
  %v3303 = vsel %vm3016, %v3001, -inf
  %v3304 = vmax.f32 %v3302, %v3303
  %v3305 = vsel %vm3016, %v2959, -inf
  %v3306 = vsel %vm3016, %v3008, -inf
  %v3307 = vmax.f32 %v3305, %v3306
  %v3308 = vsel %vm3016, %v2966, -inf
  %v3309 = vsel %vm3016, %v3015, -inf
  %v3310 = vmax.f32 %v3308, %v3309
  %v3311 = vmax.f32 %v3019, 0.0
  %v3312 = vmax.f32 %v3022, 0.0
  %v3313 = vmax.f32 %v3025, 0.0
  %v3314 = vmax.f32 %v3028, 0.0
  %v3315 = vmax.f32 %v3031, 0.0
  %v3316 = vmax.f32 %v3034, 0.0
  %v3317 = vmax.f32 %v3037, 0.0
  %v3318 = vmax.f32 %v3040, 0.0
  %v3319 = vmax.f32 %v3043, 0.0
  %v3320 = vmax.f32 %v3046, 0.0
  %v3321 = vmax.f32 %v3049, 0.0
  %v3322 = vmax.f32 %v3052, 0.0
  %v3323 = vmax.f32 %v3055, 0.0
  %v3324 = vmax.f32 %v3058, 0.0
  %v3325 = vmax.f32 %v3061, 0.0
  %v3326 = vmax.f32 %v3064, 0.0
  %v3327 = vmax.f32 %v3067, 0.0
  %v3328 = vmax.f32 %v3070, 0.0
  %v3329 = vmax.f32 %v3073, 0.0
  %v3330 = vmax.f32 %v3076, 0.0
  %v3331 = vmax.f32 %v3079, 0.0
  %v3332 = vmax.f32 %v3082, 0.0
  %v3333 = vmax.f32 %v3085, 0.0
  %v3334 = vmax.f32 %v3088, 0.0
  %v3335 = vmax.f32 %v3091, 0.0
  %v3336 = vmax.f32 %v3094, 0.0
  %v3337 = vmax.f32 %v3097, 0.0
  %v3338 = vmax.f32 %v3100, 0.0
  %v3339 = vmax.f32 %v3103, 0.0
  %v3340 = vmax.f32 %v3106, 0.0
  %v3341 = vmax.f32 %v3109, 0.0
  %v3342 = vmax.f32 %v3112, 0.0
  %v3343 = vmax.f32 %v3115, 0.0
  %v3344 = vmax.f32 %v3118, 0.0
  %v3345 = vmax.f32 %v3121, 0.0
  %v3346 = vmax.f32 %v3124, 0.0
  %v3347 = vmax.f32 %v3127, 0.0
  %v3348 = vmax.f32 %v3130, 0.0
  %v3349 = vmax.f32 %v3133, 0.0
  %v3350 = vmax.f32 %v3136, 0.0
  %v3351 = vmax.f32 %v3139, 0.0
  %v3352 = vmax.f32 %v3142, 0.0
  %v3353 = vmax.f32 %v3145, 0.0
  %v3354 = vmax.f32 %v3148, 0.0
  %v3355 = vmax.f32 %v3151, 0.0
  %v3356 = vmax.f32 %v3154, 0.0
  %v3357 = vmax.f32 %v3157, 0.0
  %v3358 = vmax.f32 %v3160, 0.0
  %v3359 = vmax.f32 %v3163, 0.0
  %v3360 = vmax.f32 %v3166, 0.0
  %v3361 = vmax.f32 %v3169, 0.0
  %v3362 = vmax.f32 %v3172, 0.0
  %v3363 = vmax.f32 %v3175, 0.0
  %v3364 = vmax.f32 %v3178, 0.0
  %v3365 = vmax.f32 %v3181, 0.0
  %v3366 = vmax.f32 %v3184, 0.0
  %v3367 = vmax.f32 %v3187, 0.0
  %v3368 = vmax.f32 %v3190, 0.0
  %v3369 = vmax.f32 %v3193, 0.0
  %v3370 = vmax.f32 %v3196, 0.0
  %v3371 = vmax.f32 %v3199, 0.0
  %v3372 = vmax.f32 %v3202, 0.0
  %v3373 = vmax.f32 %v3205, 0.0
  %v3374 = vmax.f32 %v3208, 0.0
  %v3375 = vmax.f32 %v3211, 0.0
  %v3376 = vmax.f32 %v3214, 0.0
  %v3377 = vmax.f32 %v3217, 0.0
  %v3378 = vmax.f32 %v3220, 0.0
  %v3379 = vmax.f32 %v3223, 0.0
  %v3380 = vmax.f32 %v3226, 0.0
  %v3381 = vmax.f32 %v3229, 0.0
  %v3382 = vmax.f32 %v3232, 0.0
  %v3383 = vmax.f32 %v3235, 0.0
  %v3384 = vmax.f32 %v3238, 0.0
  %v3385 = vmax.f32 %v3241, 0.0
  %v3386 = vmax.f32 %v3244, 0.0
  %v3387 = vmax.f32 %v3247, 0.0
  %v3388 = vmax.f32 %v3250, 0.0
  %v3389 = vmax.f32 %v3253, 0.0
  %v3390 = vmax.f32 %v3256, 0.0
  %v3391 = vmax.f32 %v3259, 0.0
  %v3392 = vmax.f32 %v3262, 0.0
  %v3393 = vmax.f32 %v3265, 0.0
  %v3394 = vmax.f32 %v3268, 0.0
  %v3395 = vmax.f32 %v3271, 0.0
  %v3396 = vmax.f32 %v3274, 0.0
  %v3397 = vmax.f32 %v3277, 0.0
  %v3398 = vmax.f32 %v3280, 0.0
  %v3399 = vmax.f32 %v3283, 0.0
  %v3400 = vmax.f32 %v3286, 0.0
  %v3401 = vmax.f32 %v3289, 0.0
  %v3402 = vmax.f32 %v3292, 0.0
  %v3403 = vmax.f32 %v3295, 0.0
  %v3404 = vmax.f32 %v3298, 0.0
  %v3405 = vmax.f32 %v3301, 0.0
  %v3406 = vmax.f32 %v3304, 0.0
  %v3407 = vmax.f32 %v3307, 0.0
  %v3408 = vmax.f32 %v3310, 0.0
  %vm3411 = vcmask 1041409
  %v3412 = vsel %vm3411, %v3360, %v3311
  %v3416 = vsel %vm3411, %v3361, %v3312
  %3417 = vrot.lane.b32.xlu0 %v3416, 10
  %v3418 = vpop.permute.xlu0 %3417
  %v3422 = vsel %vm3411, %v3362, %v3313
  %3423 = vrot.lane.b32.xlu0 %v3422, 20
  %v3424 = vpop.permute.xlu0 %3423
  %v3428 = vsel %vm3411, %v3363, %v3314
  %3429 = vrot.lane.b32.xlu0 %v3428, 30
  %v3430 = vpop.permute.xlu0 %3429
  %v3434 = vsel %vm3411, %v3364, %v3315
  %3435 = vrot.lane.b32.xlu0 %v3434, 40
  %v3436 = vpop.permute.xlu0 %3435
  %v3440 = vsel %vm3411, %v3367, %v3318
  %3441 = vrot.lane.b32.xlu0 %v3440, 50
  %v3442 = vpop.permute.xlu0 %3441
  %v3446 = vsel %vm3411, %v3368, %v3319
  %3447 = vrot.lane.b32.xlu0 %v3446, 60
  %v3448 = vpop.permute.xlu0 %3447
  %v3452 = vsel %vm3411, %v3369, %v3320
  %3453 = vrot.lane.b32.xlu0 %v3452, 70
  %v3454 = vpop.permute.xlu0 %3453
  %v3458 = vsel %vm3411, %v3370, %v3321
  %3459 = vrot.lane.b32.xlu0 %v3458, 80
  %v3460 = vpop.permute.xlu0 %3459
  %v3464 = vsel %vm3411, %v3371, %v3322
  %3465 = vrot.lane.b32.xlu0 %v3464, 90
  %v3466 = vpop.permute.xlu0 %3465
  %v3470 = vsel %vm3411, %v3374, %v3325
  %3471 = vrot.lane.b32.xlu0 %v3470, 100
  %v3472 = vpop.permute.xlu0 %3471
  %v3476 = vsel %vm3411, %v3375, %v3326
  %3477 = vrot.lane.b32.xlu0 %v3476, 110
  %v3478 = vpop.permute.xlu0 %3477
  %v3482 = vsel %vm3411, %v3376, %v3327
  %3483 = vrot.lane.b32.xlu0 %v3482, 120
  %v3484 = vpop.permute.xlu0 %3483
  %v3488 = vsel %vm3411, %v3377, %v3328
  %3489 = vrot.lane.b32.xlu0 %v3488, 2
  %v3490 = vpop.permute.xlu0 %3489
  %v3494 = vsel %vm3411, %v3378, %v3329
  %3495 = vrot.lane.b32.xlu0 %v3494, 12
  %v3496 = vpop.permute.xlu0 %3495
  %v3500 = vsel %vm3411, %v3381, %v3332
  %3501 = vrot.lane.b32.xlu0 %v3500, 22
  %v3502 = vpop.permute.xlu0 %3501
  %v3504 = vsel %vm3016, %v3412, %v3418
  %vm3505 = vcmask 162816
  %v3506 = vsel %vm3505, %v3504, %v3424
  %vm3507 = vcmask 244736
  %v3508 = vsel %vm3507, %v3506, %v3430
  %vm3509 = vcmask 326656
  %v3510 = vsel %vm3509, %v3508, %v3436
  %vm3511 = vcmask 408576
  %v3512 = vsel %vm3511, %v3510, %v3442
  %vm3513 = vcmask 490496
  %v3514 = vsel %vm3513, %v3512, %v3448
  %vm3515 = vcmask 572416
  %v3516 = vsel %vm3515, %v3514, %v3454
  %vm3517 = vcmask 654336
  %v3518 = vsel %vm3517, %v3516, %v3460
  %vm3519 = vcmask 736256
  %v3520 = vsel %vm3519, %v3518, %v3466
  %v3521 = vsel %vm103, %v3520, %v3472
  %vm3522 = vcmask 900096
  %v3523 = vsel %vm3522, %v3521, %v3478
  %vm3524 = vcmask 982016
  %v3525 = vsel %vm3524, %v3523, %v3484
  %vm3526 = vcmask 15360
  %v3527 = vsel %vm3526, %v3484, %v3490
  %vm3528 = vcmask 97280
  %v3529 = vsel %vm3528, %v3527, %v3496
  %vm3530 = vcmask 179200
  %v3531 = vsel %vm3530, %v3529, %v3502
  %v3534 = vsel %vm3411, %v3382, %v3333
  %v3538 = vsel %vm3411, %v3383, %v3334
  %3539 = vrot.lane.b32.xlu0 %v3538, 10
  %v3540 = vpop.permute.xlu0 %3539
  %v3544 = vsel %vm3411, %v3384, %v3335
  %3545 = vrot.lane.b32.xlu0 %v3544, 20
  %v3546 = vpop.permute.xlu0 %3545
  %v3550 = vsel %vm3411, %v3385, %v3336
  %3551 = vrot.lane.b32.xlu0 %v3550, 30
  %v3552 = vpop.permute.xlu0 %3551
  %v3556 = vsel %vm3411, %v3388, %v3339
  %3557 = vrot.lane.b32.xlu0 %v3556, 40
  %v3558 = vpop.permute.xlu0 %3557
  %v3562 = vsel %vm3411, %v3389, %v3340
  %3563 = vrot.lane.b32.xlu0 %v3562, 50
  %v3564 = vpop.permute.xlu0 %3563
  %v3568 = vsel %vm3411, %v3390, %v3341
  %3569 = vrot.lane.b32.xlu0 %v3568, 60
  %v3570 = vpop.permute.xlu0 %3569
  %v3574 = vsel %vm3411, %v3391, %v3342
  %3575 = vrot.lane.b32.xlu0 %v3574, 70
  %v3576 = vpop.permute.xlu0 %3575
  %v3580 = vsel %vm3411, %v3392, %v3343
  %3581 = vrot.lane.b32.xlu0 %v3580, 80
  %v3582 = vpop.permute.xlu0 %3581
  %v3584 = vsel %vm3016, %v3534, %v3540
  %v3585 = vsel %vm3505, %v3584, %v3546
  %v3586 = vsel %vm3507, %v3585, %v3552
  %v3587 = vsel %vm3509, %v3586, %v3558
  %v3588 = vsel %vm3511, %v3587, %v3564
  %v3589 = vsel %vm3513, %v3588, %v3570
  %v3590 = vsel %vm3515, %v3589, %v3576
  %v3591 = vsel %vm3517, %v3590, %v3582
  %3593 = vrot.lane.b32.xlu0 %v3591, 32
  %v3594 = vpop.permute.xlu0 %3593
  %vm3596 = vcmask 261120
  %v3597 = vsel %vm3596, %v3531, %v3594
  %v3598 = vld [vmem:[%s3] sm:$0xff]
  %v3599 = vld [vmem:[%s3 + $0x8] sm:$0xff]
  %v3600 = vld [vmem:[%s3 + $0x10] sm:$0xff]
  %v3601 = vld [vmem:[%s3 + $0x18] sm:$0xff]
  %v3602 = vld [vmem:[%s3 + $0x20] sm:$0xff]
  %v3603 = vld [vmem:[%s3 + $0x28] sm:$0xff]
  %v3604 = vld [vmem:[%s3 + $0x30] sm:$0xff]
  %v3605 = vld [vmem:[%s3 + $0x38] sm:$0xff]
  %v3606 = vld [vmem:[%s3 + $0x40] sm:$0xff]
  %v3607 = vld [vmem:[%s3 + $0x48] sm:$0xff]
  %v3608 = vld [vmem:[%s3 + $0x50] sm:$0xff]
  %v3609 = vld [vmem:[%s3 + $0x58] sm:$0xff]
  %v3610 = vld [vmem:[%s3 + $0x60] sm:$0xff]
  %v3611 = vld [vmem:[%s3 + $0x68] sm:$0xff]
  %v3612 = vld [vmem:[%s3 + $0x70] sm:$0xff]
  %v3613 = vld [vmem:[%s3 + $0x78] sm:$0xff]
  %v3614 = vld [vmem:[%s3 + $0x80] sm:$0xff]
  %v3615 = vld [vmem:[%s3 + $0x88] sm:$0xff]
  %v3616 = vld [vmem:[%s3 + $0x90] sm:$0xff]
  %v3617 = vld [vmem:[%s3 + $0x98] sm:$0xff]
  %v3618 = vld [vmem:[%s3 + $0xa0] sm:$0xff]
  %v3619 = vld [vmem:[%s3 + $0xa8] sm:$0xff]
  %v3620 = vld [vmem:[%s3 + $0xb0] sm:$0xff]
  %v3621 = vld [vmem:[%s3 + $0xb8] sm:$0xff]
  %v3622 = vld [vmem:[%s3 + $0xc0] sm:$0xff]
  %v3623 = vld [vmem:[%s3 + $0xc8] sm:$0xff]
  %v3624 = vld [vmem:[%s3 + $0xd0] sm:$0xff]
  %v3625 = vld [vmem:[%s3 + $0xd8] sm:$0xff]
  %v3626 = vld [vmem:[%s3 + $0xe0] sm:$0xff]
  %v3627 = vld [vmem:[%s3 + $0xe8] sm:$0xff]
  %v3628 = vld [vmem:[%s3 + $0xf0] sm:$0xff]
  %v3629 = vld [vmem:[%s3 + $0xf8] sm:$0x3]
  %vm3630 = vcmask 998400
  %v3632 = vsel %vm3630, %v3597, 0
  %vm3634 = vcmask 1041408
  %v3636 = vsel %vm3634, %v3629, 0
  %3638 = vmatprep.subr.mxu0 0.0
  %3639 = vmatpush1.msra.mxu0 %v3598
  %3640 = vmatprep.subr.mxu0 0.0
  %3641 = vmatpush1.msra.mxu0 %v3599
  %3642 = vmatprep.subr.mxu0 0.0
  %3643 = vmatpush1.msra.mxu0 %v3600
  %3644 = vmatprep.subr.mxu0 0.0
  %3645 = vmatpush1.msra.mxu0 %v3601
  %3646 = vmatprep.subr.mxu0 0.0
  %3647 = vmatpush1.msra.mxu0 %v3602
  %3648 = vmatprep.subr.mxu0 0.0
  %3649 = vmatpush1.msra.mxu0 %v3603
  %3650 = vmatprep.subr.mxu0 0.0
  %3651 = vmatpush1.msra.mxu0 %v3604
  %3652 = vmatprep.subr.mxu0 0.0
  %3653 = vmatpush1.msra.mxu0 %v3605
  %3654 = vmatprep.subr.mxu0 0.0
  %3655 = vmatpush1.msra.mxu0 %v3606
  %3656 = vmatprep.subr.mxu0 0.0
  %3657 = vmatpush1.msra.mxu0 %v3607
  %3658 = vmatprep.subr.mxu0 0.0
  %3659 = vmatpush1.msra.mxu0 %v3608
  %3660 = vmatprep.subr.mxu0 0.0
  %3661 = vmatpush1.msra.mxu0 %v3609
  %3662 = vmatprep.subr.mxu0 0.0
  %3663 = vmatpush1.msra.mxu0 %v3610
  %3664 = vmatprep.subr.mxu0 0.0
  %3665 = vmatpush1.msra.mxu0 %v3611
  %3666 = vmatprep.subr.mxu0 0.0
  %3667 = vmatpush1.msra.mxu0 %v3612
  %3668 = vmatprep.subr.mxu0 0.0
  %3669 = vmatpush1.msra.mxu0 %v3613
  %3670 = vmatprep.subr.mxu0 0.0
  %3671 = vmatpush1.msra.mxu0 %v3614
  %3672 = vmatprep.subr.mxu0 0.0
  %3673 = vmatpush1.msra.mxu0 %v3615
  %3674 = vmatprep.subr.mxu0 0.0
  %3675 = vmatpush1.msra.mxu0 %v3616
  %3676 = vmatprep.subr.mxu0 0.0
  %3677 = vmatpush1.msra.mxu0 %v3617
  %3678 = vmatprep.subr.mxu0 0.0
  %3679 = vmatpush1.msra.mxu0 %v3618
  %3680 = vmatprep.subr.mxu0 0.0
  %3681 = vmatpush1.msra.mxu0 %v3619
  %3682 = vmatprep.subr.mxu0 0.0
  %3683 = vmatpush1.msra.mxu0 %v3620
  %3684 = vmatprep.subr.mxu0 0.0
  %3685 = vmatpush1.msra.mxu0 %v3621
  %3686 = vmatprep.subr.mxu0 0.0
  %3687 = vmatpush1.msra.mxu0 %v3622
  %3688 = vmatprep.subr.mxu0 0.0
  %3689 = vmatpush1.msra.mxu0 %v3623
  %3690 = vmatprep.subr.mxu0 0.0
  %3691 = vmatpush1.msra.mxu0 %v3624
  %3692 = vmatprep.subr.mxu0 0.0
  %3693 = vmatpush1.msra.mxu0 %v3625
  %3694 = vmatprep.subr.mxu0 0.0
  %3695 = vmatpush1.msra.mxu0 %v3626
  %3696 = vmatprep.subr.mxu0 0.0
  %3697 = vmatpush1.msra.mxu0 %v3627
  %3698 = vmatprep.subr.mxu0 0.0
  %3699 = vmatpush1.msra.mxu0 %v3628
  %3700 = vmatprep.subr.mxu0 0.0
  %3701 = vmatpush1.msra.mxu0 %v3636
  %3702 = vmatprep.mubr.f32.mxu0 %v3632
  %3703 = vmatmul.mubr.f32.gmra.mrb[0].mxu0 %v3525
  %v3704 = vpop.f32.mrb[0].mxu0
  %v3705 = vadd.f32 0.0, %v3704
  %v3706 = vpop.f32.mrb[0].mxu0
  %3707 = vdwg.mxu0
  %3709 = vrot.lane.b32.xlu0 %v3428, 10
  %v3710 = vpop.permute.xlu0 %3709
  %3712 = vrot.lane.b32.xlu0 %v3434, 20
  %v3713 = vpop.permute.xlu0 %3712
  %v3717 = vsel %vm3411, %v3365, %v3316
  %3718 = vrot.lane.b32.xlu0 %v3717, 30
  %v3719 = vpop.permute.xlu0 %3718
  %v3723 = vsel %vm3411, %v3366, %v3317
  %3724 = vrot.lane.b32.xlu0 %v3723, 40
  %v3725 = vpop.permute.xlu0 %3724
  %3727 = vrot.lane.b32.xlu0 %v3452, 50
  %v3728 = vpop.permute.xlu0 %3727
  %3730 = vrot.lane.b32.xlu0 %v3458, 60
  %v3731 = vpop.permute.xlu0 %3730
  %3733 = vrot.lane.b32.xlu0 %v3464, 70
  %v3734 = vpop.permute.xlu0 %3733
  %v3738 = vsel %vm3411, %v3372, %v3323
  %3739 = vrot.lane.b32.xlu0 %v3738, 80
  %v3740 = vpop.permute.xlu0 %3739
  %v3744 = vsel %vm3411, %v3373, %v3324
  %3745 = vrot.lane.b32.xlu0 %v3744, 90
  %v3746 = vpop.permute.xlu0 %3745
  %3748 = vrot.lane.b32.xlu0 %v3482, 100
  %v3749 = vpop.permute.xlu0 %3748
  %3751 = vrot.lane.b32.xlu0 %v3488, 110
  %v3752 = vpop.permute.xlu0 %3751
  %3754 = vrot.lane.b32.xlu0 %v3494, 120
  %v3755 = vpop.permute.xlu0 %3754
  %v3759 = vsel %vm3411, %v3379, %v3330
  %3760 = vrot.lane.b32.xlu0 %v3759, 2
  %v3761 = vpop.permute.xlu0 %3760
  %v3765 = vsel %vm3411, %v3380, %v3331
  %3766 = vrot.lane.b32.xlu0 %v3765, 12
  %v3767 = vpop.permute.xlu0 %3766
  %3769 = vrot.lane.b32.xlu0 %v3538, 22
  %v3770 = vpop.permute.xlu0 %3769
  %v3772 = vsel %vm3016, %v3422, %v3710
  %v3773 = vsel %vm3505, %v3772, %v3713
  %v3774 = vsel %vm3507, %v3773, %v3719
  %v3775 = vsel %vm3509, %v3774, %v3725
  %v3776 = vsel %vm3511, %v3775, %v3728
  %v3777 = vsel %vm3513, %v3776, %v3731
  %v3778 = vsel %vm3515, %v3777, %v3734
  %v3779 = vsel %vm3517, %v3778, %v3740
  %v3780 = vsel %vm3519, %v3779, %v3746
  %v3781 = vsel %vm103, %v3780, %v3749
  %v3782 = vsel %vm3522, %v3781, %v3752
  %v3783 = vsel %vm3524, %v3782, %v3755
  %v3784 = vsel %vm3526, %v3755, %v3761
  %v3785 = vsel %vm3528, %v3784, %v3767
  %v3786 = vsel %vm3530, %v3785, %v3770
  %3788 = vrot.lane.b32.xlu0 %v3550, 10
  %v3789 = vpop.permute.xlu0 %3788
  %v3793 = vsel %vm3411, %v3386, %v3337
  %3794 = vrot.lane.b32.xlu0 %v3793, 20
  %v3795 = vpop.permute.xlu0 %3794
  %v3799 = vsel %vm3411, %v3387, %v3338
  %3800 = vrot.lane.b32.xlu0 %v3799, 30
  %v3801 = vpop.permute.xlu0 %3800
  %3803 = vrot.lane.b32.xlu0 %v3568, 40
  %v3804 = vpop.permute.xlu0 %3803
  %3806 = vrot.lane.b32.xlu0 %v3574, 50
  %v3807 = vpop.permute.xlu0 %3806
  %3809 = vrot.lane.b32.xlu0 %v3580, 60
  %v3810 = vpop.permute.xlu0 %3809
  %v3814 = vsel %vm3411, %v3393, %v3344
  %3815 = vrot.lane.b32.xlu0 %v3814, 70
  %v3816 = vpop.permute.xlu0 %3815
  %v3820 = vsel %vm3411, %v3394, %v3345
  %3821 = vrot.lane.b32.xlu0 %v3820, 80
  %v3822 = vpop.permute.xlu0 %3821
  %v3824 = vsel %vm3016, %v3544, %v3789
  %v3825 = vsel %vm3505, %v3824, %v3795
  %v3826 = vsel %vm3507, %v3825, %v3801
  %v3827 = vsel %vm3509, %v3826, %v3804
  %v3828 = vsel %vm3511, %v3827, %v3807
  %v3829 = vsel %vm3513, %v3828, %v3810
  %v3830 = vsel %vm3515, %v3829, %v3816
  %v3831 = vsel %vm3517, %v3830, %v3822
  %3833 = vrot.lane.b32.xlu0 %v3831, 32
  %v3834 = vpop.permute.xlu0 %3833
  %v3836 = vsel %vm3596, %v3786, %v3834
  %v3838 = vsel %vm3630, %v3836, 0
  %3840 = vmatprep.subr.mxu0 0.0
  %3841 = vmatpush1.msra.mxu0 %v3598
  %3842 = vmatprep.subr.mxu0 0.0
  %3843 = vmatpush1.msra.mxu0 %v3599
  %3844 = vmatprep.subr.mxu0 0.0
  %3845 = vmatpush1.msra.mxu0 %v3600
  %3846 = vmatprep.subr.mxu0 0.0
  %3847 = vmatpush1.msra.mxu0 %v3601
  %3848 = vmatprep.subr.mxu0 0.0
  %3849 = vmatpush1.msra.mxu0 %v3602
  %3850 = vmatprep.subr.mxu0 0.0
  %3851 = vmatpush1.msra.mxu0 %v3603
  %3852 = vmatprep.subr.mxu0 0.0
  %3853 = vmatpush1.msra.mxu0 %v3604
  %3854 = vmatprep.subr.mxu0 0.0
  %3855 = vmatpush1.msra.mxu0 %v3605
  %3856 = vmatprep.subr.mxu0 0.0
  %3857 = vmatpush1.msra.mxu0 %v3606
  %3858 = vmatprep.subr.mxu0 0.0
  %3859 = vmatpush1.msra.mxu0 %v3607
  %3860 = vmatprep.subr.mxu0 0.0
  %3861 = vmatpush1.msra.mxu0 %v3608
  %3862 = vmatprep.subr.mxu0 0.0
  %3863 = vmatpush1.msra.mxu0 %v3609
  %3864 = vmatprep.subr.mxu0 0.0
  %3865 = vmatpush1.msra.mxu0 %v3610
  %3866 = vmatprep.subr.mxu0 0.0
  %3867 = vmatpush1.msra.mxu0 %v3611
  %3868 = vmatprep.subr.mxu0 0.0
  %3869 = vmatpush1.msra.mxu0 %v3612
  %3870 = vmatprep.subr.mxu0 0.0
  %3871 = vmatpush1.msra.mxu0 %v3613
  %3872 = vmatprep.subr.mxu0 0.0
  %3873 = vmatpush1.msra.mxu0 %v3614
  %3874 = vmatprep.subr.mxu0 0.0
  %3875 = vmatpush1.msra.mxu0 %v3615
  %3876 = vmatprep.subr.mxu0 0.0
  %3877 = vmatpush1.msra.mxu0 %v3616
  %3878 = vmatprep.subr.mxu0 0.0
  %3879 = vmatpush1.msra.mxu0 %v3617
  %3880 = vmatprep.subr.mxu0 0.0
  %3881 = vmatpush1.msra.mxu0 %v3618
  %3882 = vmatprep.subr.mxu0 0.0
  %3883 = vmatpush1.msra.mxu0 %v3619
  %3884 = vmatprep.subr.mxu0 0.0
  %3885 = vmatpush1.msra.mxu0 %v3620
  %3886 = vmatprep.subr.mxu0 0.0
  %3887 = vmatpush1.msra.mxu0 %v3621
  %3888 = vmatprep.subr.mxu0 0.0
  %3889 = vmatpush1.msra.mxu0 %v3622
  %3890 = vmatprep.subr.mxu0 0.0
  %3891 = vmatpush1.msra.mxu0 %v3623
  %3892 = vmatprep.subr.mxu0 0.0
  %3893 = vmatpush1.msra.mxu0 %v3624
  %3894 = vmatprep.subr.mxu0 0.0
  %3895 = vmatpush1.msra.mxu0 %v3625
  %3896 = vmatprep.subr.mxu0 0.0
  %3897 = vmatpush1.msra.mxu0 %v3626
  %3898 = vmatprep.subr.mxu0 0.0
  %3899 = vmatpush1.msra.mxu0 %v3627
  %3900 = vmatprep.subr.mxu0 0.0
  %3901 = vmatpush1.msra.mxu0 %v3628
  %3902 = vmatprep.subr.mxu0 0.0
  %3903 = vmatpush1.msra.mxu0 %v3636
  %3904 = vmatprep.mubr.f32.mxu0 %v3838
  %3905 = vmatmul.mubr.f32.gmra.mrb[0].mxu0 %v3783
  %v3906 = vpop.f32.mrb[0].mxu0
  %v3907 = vadd.f32 0.0, %v3906
  %v3908 = vpop.f32.mrb[0].mxu0
  %3909 = vdwg.mxu0
  %v3910 = vmax.f32 %v3705, %v3907
  %3912 = vrot.lane.b32.xlu0 %v3476, 10
  %v3913 = vpop.permute.xlu0 %3912
  %3915 = vrot.lane.b32.xlu0 %v3482, 20
  %v3916 = vpop.permute.xlu0 %3915
  %3918 = vrot.lane.b32.xlu0 %v3488, 30
  %v3919 = vpop.permute.xlu0 %3918
  %3921 = vrot.lane.b32.xlu0 %v3494, 40
  %v3922 = vpop.permute.xlu0 %3921
  %3924 = vrot.lane.b32.xlu0 %v3500, 50
  %v3925 = vpop.permute.xlu0 %3924
  %3927 = vrot.lane.b32.xlu0 %v3534, 60
  %v3928 = vpop.permute.xlu0 %3927
  %3930 = vrot.lane.b32.xlu0 %v3538, 70
  %v3931 = vpop.permute.xlu0 %3930
  %3933 = vrot.lane.b32.xlu0 %v3544, 80
  %v3934 = vpop.permute.xlu0 %3933
  %3936 = vrot.lane.b32.xlu0 %v3550, 90
  %v3937 = vpop.permute.xlu0 %3936
  %3939 = vrot.lane.b32.xlu0 %v3556, 100
  %v3940 = vpop.permute.xlu0 %3939
  %3942 = vrot.lane.b32.xlu0 %v3562, 110
  %v3943 = vpop.permute.xlu0 %3942
  %3945 = vrot.lane.b32.xlu0 %v3568, 120
  %v3946 = vpop.permute.xlu0 %3945
  %3948 = vrot.lane.b32.xlu0 %v3574, 2
  %v3949 = vpop.permute.xlu0 %3948
  %3951 = vrot.lane.b32.xlu0 %v3580, 12
  %v3952 = vpop.permute.xlu0 %3951
  %v3956 = vsel %vm3411, %v3395, %v3346
  %3957 = vrot.lane.b32.xlu0 %v3956, 22
  %v3958 = vpop.permute.xlu0 %3957
  %v3960 = vsel %vm3016, %v3470, %v3913
  %v3961 = vsel %vm3505, %v3960, %v3916
  %v3962 = vsel %vm3507, %v3961, %v3919
  %v3963 = vsel %vm3509, %v3962, %v3922
  %v3964 = vsel %vm3511, %v3963, %v3925
  %v3965 = vsel %vm3513, %v3964, %v3928
  %v3966 = vsel %vm3515, %v3965, %v3931
  %v3967 = vsel %vm3517, %v3966, %v3934
  %v3968 = vsel %vm3519, %v3967, %v3937
  %v3969 = vsel %vm103, %v3968, %v3940
  %v3970 = vsel %vm3522, %v3969, %v3943
  %v3971 = vsel %vm3524, %v3970, %v3946
  %v3972 = vsel %vm3526, %v3946, %v3949
  %v3973 = vsel %vm3528, %v3972, %v3952
  %v3974 = vsel %vm3530, %v3973, %v3958
  %v3977 = vsel %vm3411, %v3396, %v3347
  %v3981 = vsel %vm3411, %v3397, %v3348
  %3982 = vrot.lane.b32.xlu0 %v3981, 10
  %v3983 = vpop.permute.xlu0 %3982
  %v3987 = vsel %vm3411, %v3398, %v3349
  %3988 = vrot.lane.b32.xlu0 %v3987, 20
  %v3989 = vpop.permute.xlu0 %3988
  %v3993 = vsel %vm3411, %v3399, %v3350
  %3994 = vrot.lane.b32.xlu0 %v3993, 30
  %v3995 = vpop.permute.xlu0 %3994
  %v3999 = vsel %vm3411, %v3402, %v3353
  %4000 = vrot.lane.b32.xlu0 %v3999, 40
  %v4001 = vpop.permute.xlu0 %4000
  %v4005 = vsel %vm3411, %v3403, %v3354
  %4006 = vrot.lane.b32.xlu0 %v4005, 50
  %v4007 = vpop.permute.xlu0 %4006
  %v4011 = vsel %vm3411, %v3404, %v3355
  %4012 = vrot.lane.b32.xlu0 %v4011, 60
  %v4013 = vpop.permute.xlu0 %4012
  %v4017 = vsel %vm3411, %v3405, %v3356
  %4018 = vrot.lane.b32.xlu0 %v4017, 70
  %v4019 = vpop.permute.xlu0 %4018
  %v4023 = vsel %vm3411, %v3406, %v3357
  %4024 = vrot.lane.b32.xlu0 %v4023, 80
  %v4025 = vpop.permute.xlu0 %4024
  %v4027 = vsel %vm3016, %v3977, %v3983
  %v4028 = vsel %vm3505, %v4027, %v3989
  %v4029 = vsel %vm3507, %v4028, %v3995
  %v4030 = vsel %vm3509, %v4029, %v4001
  %v4031 = vsel %vm3511, %v4030, %v4007
  %v4032 = vsel %vm3513, %v4031, %v4013
  %v4033 = vsel %vm3515, %v4032, %v4019
  %v4034 = vsel %vm3517, %v4033, %v4025
  %4036 = vrot.lane.b32.xlu0 %v4034, 32
  %v4037 = vpop.permute.xlu0 %4036
  %v4039 = vsel %vm3596, %v3974, %v4037
  %v4041 = vsel %vm3630, %v4039, 0
  %4043 = vmatprep.subr.mxu0 0.0
  %4044 = vmatpush1.msra.mxu0 %v3598
  %4045 = vmatprep.subr.mxu0 0.0
  %4046 = vmatpush1.msra.mxu0 %v3599
  %4047 = vmatprep.subr.mxu0 0.0
  %4048 = vmatpush1.msra.mxu0 %v3600
  %4049 = vmatprep.subr.mxu0 0.0
  %4050 = vmatpush1.msra.mxu0 %v3601
  %4051 = vmatprep.subr.mxu0 0.0
  %4052 = vmatpush1.msra.mxu0 %v3602
  %4053 = vmatprep.subr.mxu0 0.0
  %4054 = vmatpush1.msra.mxu0 %v3603
  %4055 = vmatprep.subr.mxu0 0.0
  %4056 = vmatpush1.msra.mxu0 %v3604
  %4057 = vmatprep.subr.mxu0 0.0
  %4058 = vmatpush1.msra.mxu0 %v3605
  %4059 = vmatprep.subr.mxu0 0.0
  %4060 = vmatpush1.msra.mxu0 %v3606
  %4061 = vmatprep.subr.mxu0 0.0
  %4062 = vmatpush1.msra.mxu0 %v3607
  %4063 = vmatprep.subr.mxu0 0.0
  %4064 = vmatpush1.msra.mxu0 %v3608
  %4065 = vmatprep.subr.mxu0 0.0
  %4066 = vmatpush1.msra.mxu0 %v3609
  %4067 = vmatprep.subr.mxu0 0.0
  %4068 = vmatpush1.msra.mxu0 %v3610
  %4069 = vmatprep.subr.mxu0 0.0
  %4070 = vmatpush1.msra.mxu0 %v3611
  %4071 = vmatprep.subr.mxu0 0.0
  %4072 = vmatpush1.msra.mxu0 %v3612
  %4073 = vmatprep.subr.mxu0 0.0
  %4074 = vmatpush1.msra.mxu0 %v3613
  %4075 = vmatprep.subr.mxu0 0.0
  %4076 = vmatpush1.msra.mxu0 %v3614
  %4077 = vmatprep.subr.mxu0 0.0
  %4078 = vmatpush1.msra.mxu0 %v3615
  %4079 = vmatprep.subr.mxu0 0.0
  %4080 = vmatpush1.msra.mxu0 %v3616
  %4081 = vmatprep.subr.mxu0 0.0
  %4082 = vmatpush1.msra.mxu0 %v3617
  %4083 = vmatprep.subr.mxu0 0.0
  %4084 = vmatpush1.msra.mxu0 %v3618
  %4085 = vmatprep.subr.mxu0 0.0
  %4086 = vmatpush1.msra.mxu0 %v3619
  %4087 = vmatprep.subr.mxu0 0.0
  %4088 = vmatpush1.msra.mxu0 %v3620
  %4089 = vmatprep.subr.mxu0 0.0
  %4090 = vmatpush1.msra.mxu0 %v3621
  %4091 = vmatprep.subr.mxu0 0.0
  %4092 = vmatpush1.msra.mxu0 %v3622
  %4093 = vmatprep.subr.mxu0 0.0
  %4094 = vmatpush1.msra.mxu0 %v3623
  %4095 = vmatprep.subr.mxu0 0.0
  %4096 = vmatpush1.msra.mxu0 %v3624
  %4097 = vmatprep.subr.mxu0 0.0
  %4098 = vmatpush1.msra.mxu0 %v3625
  %4099 = vmatprep.subr.mxu0 0.0
  %4100 = vmatpush1.msra.mxu0 %v3626
  %4101 = vmatprep.subr.mxu0 0.0
  %4102 = vmatpush1.msra.mxu0 %v3627
  %4103 = vmatprep.subr.mxu0 0.0
  %4104 = vmatpush1.msra.mxu0 %v3628
  %4105 = vmatprep.subr.mxu0 0.0
  %4106 = vmatpush1.msra.mxu0 %v3636
  %4107 = vmatprep.mubr.f32.mxu0 %v4041
  %4108 = vmatmul.mubr.f32.gmra.mrb[0].mxu0 %v3971
  %v4109 = vpop.f32.mrb[0].mxu0
  %v4110 = vadd.f32 0.0, %v4109
  %v4111 = vpop.f32.mrb[0].mxu0
  %4112 = vdwg.mxu0
  %v4113 = vmax.f32 %v3910, %v4110
  %4115 = vrot.lane.b32.xlu0 %v3488, 10
  %v4116 = vpop.permute.xlu0 %4115
  %4118 = vrot.lane.b32.xlu0 %v3494, 20
  %v4119 = vpop.permute.xlu0 %4118
  %4121 = vrot.lane.b32.xlu0 %v3759, 30
  %v4122 = vpop.permute.xlu0 %4121
  %4124 = vrot.lane.b32.xlu0 %v3765, 40
  %v4125 = vpop.permute.xlu0 %4124
  %4127 = vrot.lane.b32.xlu0 %v3538, 50
  %v4128 = vpop.permute.xlu0 %4127
  %4130 = vrot.lane.b32.xlu0 %v3544, 60
  %v4131 = vpop.permute.xlu0 %4130
  %4133 = vrot.lane.b32.xlu0 %v3550, 70
  %v4134 = vpop.permute.xlu0 %4133
  %4136 = vrot.lane.b32.xlu0 %v3793, 80
  %v4137 = vpop.permute.xlu0 %4136
  %4139 = vrot.lane.b32.xlu0 %v3799, 90
  %v4140 = vpop.permute.xlu0 %4139
  %4142 = vrot.lane.b32.xlu0 %v3568, 100
  %v4143 = vpop.permute.xlu0 %4142
  %4145 = vrot.lane.b32.xlu0 %v3574, 110
  %v4146 = vpop.permute.xlu0 %4145
  %4148 = vrot.lane.b32.xlu0 %v3580, 120
  %v4149 = vpop.permute.xlu0 %4148
  %4151 = vrot.lane.b32.xlu0 %v3814, 2
  %v4152 = vpop.permute.xlu0 %4151
  %4154 = vrot.lane.b32.xlu0 %v3820, 12
  %v4155 = vpop.permute.xlu0 %4154
  %4157 = vrot.lane.b32.xlu0 %v3981, 22
  %v4158 = vpop.permute.xlu0 %4157
  %v4160 = vsel %vm3016, %v3482, %v4116
  %v4161 = vsel %vm3505, %v4160, %v4119
  %v4162 = vsel %vm3507, %v4161, %v4122
  %v4163 = vsel %vm3509, %v4162, %v4125
  %v4164 = vsel %vm3511, %v4163, %v4128
  %v4165 = vsel %vm3513, %v4164, %v4131
  %v4166 = vsel %vm3515, %v4165, %v4134
  %v4167 = vsel %vm3517, %v4166, %v4137
  %v4168 = vsel %vm3519, %v4167, %v4140
  %v4169 = vsel %vm103, %v4168, %v4143
  %v4170 = vsel %vm3522, %v4169, %v4146
  %v4171 = vsel %vm3524, %v4170, %v4149
  %v4172 = vsel %vm3526, %v4149, %v4152
  %v4173 = vsel %vm3528, %v4172, %v4155
  %v4174 = vsel %vm3530, %v4173, %v4158
  %4176 = vrot.lane.b32.xlu0 %v3993, 10
  %v4177 = vpop.permute.xlu0 %4176
  %v4181 = vsel %vm3411, %v3400, %v3351
  %4182 = vrot.lane.b32.xlu0 %v4181, 20
  %v4183 = vpop.permute.xlu0 %4182
  %v4187 = vsel %vm3411, %v3401, %v3352
  %4188 = vrot.lane.b32.xlu0 %v4187, 30
  %v4189 = vpop.permute.xlu0 %4188
  %4191 = vrot.lane.b32.xlu0 %v4011, 40
  %v4192 = vpop.permute.xlu0 %4191
  %4194 = vrot.lane.b32.xlu0 %v4017, 50
  %v4195 = vpop.permute.xlu0 %4194
  %4197 = vrot.lane.b32.xlu0 %v4023, 60
  %v4198 = vpop.permute.xlu0 %4197
  %v4202 = vsel %vm3411, %v3407, %v3358
  %4203 = vrot.lane.b32.xlu0 %v4202, 70
  %v4204 = vpop.permute.xlu0 %4203
  %v4208 = vsel %vm3411, %v3408, %v3359
  %4209 = vrot.lane.b32.xlu0 %v4208, 80
  %v4210 = vpop.permute.xlu0 %4209
  %v4212 = vsel %vm3016, %v3987, %v4177
  %v4213 = vsel %vm3505, %v4212, %v4183
  %v4214 = vsel %vm3507, %v4213, %v4189
  %v4215 = vsel %vm3509, %v4214, %v4192
  %v4216 = vsel %vm3511, %v4215, %v4195
  %v4217 = vsel %vm3513, %v4216, %v4198
  %v4218 = vsel %vm3515, %v4217, %v4204
  %v4219 = vsel %vm3517, %v4218, %v4210
  %4221 = vrot.lane.b32.xlu0 %v4219, 32
  %v4222 = vpop.permute.xlu0 %4221
  %v4224 = vsel %vm3596, %v4174, %v4222
  %v4226 = vsel %vm3630, %v4224, 0
  %4228 = vmatprep.subr.mxu0 0.0
  %4229 = vmatpush1.msra.mxu0 %v3598
  %4230 = vmatprep.subr.mxu0 0.0
  %4231 = vmatpush1.msra.mxu0 %v3599
  %4232 = vmatprep.subr.mxu0 0.0
  %4233 = vmatpush1.msra.mxu0 %v3600
  %4234 = vmatprep.subr.mxu0 0.0
  %4235 = vmatpush1.msra.mxu0 %v3601
  %4236 = vmatprep.subr.mxu0 0.0
  %4237 = vmatpush1.msra.mxu0 %v3602
  %4238 = vmatprep.subr.mxu0 0.0
  %4239 = vmatpush1.msra.mxu0 %v3603
  %4240 = vmatprep.subr.mxu0 0.0
  %4241 = vmatpush1.msra.mxu0 %v3604
  %4242 = vmatprep.subr.mxu0 0.0
  %4243 = vmatpush1.msra.mxu0 %v3605
  %4244 = vmatprep.subr.mxu0 0.0
  %4245 = vmatpush1.msra.mxu0 %v3606
  %4246 = vmatprep.subr.mxu0 0.0
  %4247 = vmatpush1.msra.mxu0 %v3607
  %4248 = vmatprep.subr.mxu0 0.0
  %4249 = vmatpush1.msra.mxu0 %v3608
  %4250 = vmatprep.subr.mxu0 0.0
  %4251 = vmatpush1.msra.mxu0 %v3609
  %4252 = vmatprep.subr.mxu0 0.0
  %4253 = vmatpush1.msra.mxu0 %v3610
  %4254 = vmatprep.subr.mxu0 0.0
  %4255 = vmatpush1.msra.mxu0 %v3611
  %4256 = vmatprep.subr.mxu0 0.0
  %4257 = vmatpush1.msra.mxu0 %v3612
  %4258 = vmatprep.subr.mxu0 0.0
  %4259 = vmatpush1.msra.mxu0 %v3613
  %4260 = vmatprep.subr.mxu0 0.0
  %4261 = vmatpush1.msra.mxu0 %v3614
  %4262 = vmatprep.subr.mxu0 0.0
  %4263 = vmatpush1.msra.mxu0 %v3615
  %4264 = vmatprep.subr.mxu0 0.0
  %4265 = vmatpush1.msra.mxu0 %v3616
  %4266 = vmatprep.subr.mxu0 0.0
  %4267 = vmatpush1.msra.mxu0 %v3617
  %4268 = vmatprep.subr.mxu0 0.0
  %4269 = vmatpush1.msra.mxu0 %v3618
  %4270 = vmatprep.subr.mxu0 0.0
  %4271 = vmatpush1.msra.mxu0 %v3619
  %4272 = vmatprep.subr.mxu0 0.0
  %4273 = vmatpush1.msra.mxu0 %v3620
  %4274 = vmatprep.subr.mxu0 0.0
  %4275 = vmatpush1.msra.mxu0 %v3621
  %4276 = vmatprep.subr.mxu0 0.0
  %4277 = vmatpush1.msra.mxu0 %v3622
  %4278 = vmatprep.subr.mxu0 0.0
  %4279 = vmatpush1.msra.mxu0 %v3623
  %4280 = vmatprep.subr.mxu0 0.0
  %4281 = vmatpush1.msra.mxu0 %v3624
  %4282 = vmatprep.subr.mxu0 0.0
  %4283 = vmatpush1.msra.mxu0 %v3625
  %4284 = vmatprep.subr.mxu0 0.0
  %4285 = vmatpush1.msra.mxu0 %v3626
  %4286 = vmatprep.subr.mxu0 0.0
  %4287 = vmatpush1.msra.mxu0 %v3627
  %4288 = vmatprep.subr.mxu0 0.0
  %4289 = vmatpush1.msra.mxu0 %v3628
  %4290 = vmatprep.subr.mxu0 0.0
  %4291 = vmatpush1.msra.mxu0 %v3636
  %4292 = vmatprep.mubr.f32.mxu0 %v4226
  %4293 = vmatmul.mubr.f32.gmra.mrb[0].mxu0 %v4171
  %v4294 = vpop.f32.mrb[0].mxu0
  %v4295 = vadd.f32 0.0, %v4294
  %v4296 = vpop.f32.mrb[0].mxu0
  %4297 = vdwg.mxu0
  %v4298 = vmax.f32 %v4113, %v4295
  %v4299 = vld [vmem:[%s4] sm:$0x1]
  %v4301 = vlaneseq
  %v4302 = vshrl.u32 %v4301, 7
  %v4303 = vsub.s32 0, %v4302
  %v4304 = vrot.slane %v4299, %v4303
  %v4306 = vadd.f32 %v4298, %v4304
  %v4307 = vmax.f32 %v4306, 0.0
  %v4308 = vld [vmem:[%s5] sm:$0xff]
  %v4309 = vld [vmem:[%s5 + $0x8] sm:$0xff]
  %v4310 = vld [vmem:[%s5 + $0x10] sm:$0xf]
  %v4311 = vld [vmem:[%s6] sm:$0x1]
  %v4313 = vlaneseq
  %v4314 = vshrl.u32 %v4313, 7
  %v4315 = vsub.s32 0, %v4314
  %v4316 = vrot.slane %v4311, %v4315
  %v4319 = vsel %vm3505, %v4307, 0
  %v4322 = vsel %vm251, %v4310, 0
  %4324 = vmatprep.subr.mxu0 0.0
  %4325 = vmatpush1.msra.mxu0 %v4308
  %4326 = vmatprep.subr.mxu0 0.0
  %4327 = vmatpush1.msra.mxu0 %v4309
  %4328 = vmatprep.subr.mxu0 0.0
  %4329 = vmatpush1.msra.mxu0 %v4322
  %4330 = vmatprep.subr.mxu0 0.0
  %4331 = vmatpush1.msra.mxu0 0.0
  %4332 = vmatprep.subr.mxu0 0.0
  %4333 = vmatpush1.msra.mxu0 0.0
  %4334 = vmatprep.subr.mxu0 0.0
  %4335 = vmatpush1.msra.mxu0 0.0
  %4336 = vmatprep.subr.mxu0 0.0
  %4337 = vmatpush1.msra.mxu0 0.0
  %4338 = vmatprep.subr.mxu0 0.0
  %4339 = vmatpush1.msra.mxu0 0.0
  %4340 = vmatprep.subr.mxu0 0.0
  %4341 = vmatpush1.msra.mxu0 0.0
  %4342 = vmatprep.subr.mxu0 0.0
  %4343 = vmatpush1.msra.mxu0 0.0
  %4344 = vmatprep.subr.mxu0 0.0
  %4345 = vmatpush1.msra.mxu0 0.0
  %4346 = vmatprep.subr.mxu0 0.0
  %4347 = vmatpush1.msra.mxu0 0.0
  %4348 = vmatprep.subr.mxu0 0.0
  %4349 = vmatpush1.msra.mxu0 0.0
  %4350 = vmatprep.subr.mxu0 0.0
  %4351 = vmatpush1.msra.mxu0 0.0
  %4352 = vmatprep.subr.mxu0 0.0
  %4353 = vmatpush1.msra.mxu0 0.0
  %4354 = vmatprep.subr.mxu0 0.0
  %4355 = vmatpush1.msra.mxu0 0.0
  %4356 = vmatprep.subr.mxu0 0.0
  %4357 = vmatpush1.msra.mxu0 0.0
  %4358 = vmatprep.subr.mxu0 0.0
  %4359 = vmatpush1.msra.mxu0 0.0
  %4360 = vmatprep.subr.mxu0 0.0
  %4361 = vmatpush1.msra.mxu0 0.0
  %4362 = vmatprep.subr.mxu0 0.0
  %4363 = vmatpush1.msra.mxu0 0.0
  %4364 = vmatprep.subr.mxu0 0.0
  %4365 = vmatpush1.msra.mxu0 0.0
  %4366 = vmatprep.subr.mxu0 0.0
  %4367 = vmatpush1.msra.mxu0 0.0
  %4368 = vmatprep.subr.mxu0 0.0
  %4369 = vmatpush1.msra.mxu0 0.0
  %4370 = vmatprep.subr.mxu0 0.0
  %4371 = vmatpush1.msra.mxu0 0.0
  %4372 = vmatprep.subr.mxu0 0.0
  %4373 = vmatpush1.msra.mxu0 0.0
  %4374 = vmatprep.subr.mxu0 0.0
  %4375 = vmatpush1.msra.mxu0 0.0
  %4376 = vmatprep.subr.mxu0 0.0
  %4377 = vmatpush1.msra.mxu0 0.0
  %4378 = vmatprep.subr.mxu0 0.0
  %4379 = vmatpush1.msra.mxu0 0.0
  %4380 = vmatprep.subr.mxu0 0.0
  %4381 = vmatpush1.msra.mxu0 0.0
  %4382 = vmatprep.subr.mxu0 0.0
  %4383 = vmatpush1.msra.mxu0 0.0
  %4384 = vmatprep.subr.mxu0 0.0
  %4385 = vmatpush1.msra.mxu0 0.0
  %4386 = vmatprep.subr.mxu0 0.0
  %4387 = vmatpush1.msra.mxu0 0.0
  %4388 = vmatprep.mubr.f32.mxu0 0.0
  %4389 = vmatmul.mubr.f32.gmra.mrb[0].mxu0 %v4319
  %v4390 = vpop.f32.mrb[0].mxu0
  %v4391 = vadd.f32 %v4316, %v4390
  %v4392 = vpop.f32.mrb[0].mxu0
  %4393 = vdwg.mxu0
  %v4394 = vmax.f32 %v4391, 0.0
  %v4395 = vld [vmem:[%s7] sm:$0x1]
  %v4397 = vlaneseq
  %v4398 = vshrl.u32 %v4397, 7
  %v4399 = vsub.s32 0, %v4398
  %v4400 = vrot.slane %v4395, %v4399
  %v4402 = vmul.f32 %v4394, %v4400
  %vm4403 = vcmask 402432
  %v4404 = vsel %vm4403, %v4402, 0.0
  %4405 = vadd.xlane.f32.xlu0 %v4404
  %v4406 = vpop.xlane.xlu0 %4405
  %v4407 = vld [vmem:[#allocation2] sm:$0x1]
  %v4409 = vlaneseq
  %v4410 = vshrl.u32 %v4409, 7
  %v4411 = vsub.s32 0, %v4410
  %v4412 = vrot.slane %v4407, %v4411
  %v4414 = vadd.f32 %v4406, %v4412
  %v4415 = vsub.f32 0.0, %v4414
  %v4416 = vmul.f32 %v4415, 1.442695
  %v4417 = vpow.pop %v4416
  %v4418 = vadd.f32 %v4417, 1.0
  %v4419 = vrcp.pop %v4418
  %v4420 = vmul.f32 1.0, %v4419
  %vm4421 = vcmask 1024
  %4422 = vst.msk [vmem:[%s9] sm:$0x3] %vm4421, %v4420
  // Predicated region
  $region38: #{pg2_forward.1} parent=0 // pred_check
    _
  $region39: #{pg2_forward.1} parent=0 // pred_check_branch
    %4424 = sbr.rel (0) target = $region41
  $region40: #{pg2_forward.1} parent=0 // pred_region
    _
  $region41: #{pg2_forward.1} parent=0 // pred_fallthru
    _
  // Predicated region
  $region42: #{pg2_forward.1} parent=0 // pred_check
    _
  $region43: #{pg2_forward.1} parent=0 // pred_check_branch
    %4426 = sbr.rel (0) target = $region45
  $region44: #{pg2_forward.1} parent=0 // pred_region
    _
  $region45: #{pg2_forward.1} parent=0 // pred_fallthru
    _

</llo_original>
